<compile_context>
chip_gen: v7x
topology: tpu7x:2x2x1
jax: 0.10.0
libtpu: 0.0.40
codegen_flags: <defaults>
</compile_context>

<pallas_src>
import functools
import numpy as np
import jax
import jax.numpy as jnp
from jax import lax
from jax.experimental import pallas as pl
from jax.experimental.pallas import tpu as pltpu

PRELU_ALPHA = 0.25      # nn.PReLU default single-parameter init
BN_EPS = 1e-5
KSIZE, STRIDE = 10, 2   # ESNet enhanced block: K=10, S=2


def _prelu(x, a):
    return jnp.where(x >= 0, x, a * x)


# ---------------------------------------------------------------------------
# Fused forward kernel
# ---------------------------------------------------------------------------
def esnet_kernel(x_ref, wsp_ref, sps_ref, spb_ref,
                 wenh_ref, ens_ref, enb_ref,
                 wih_ref, bih_ref, whhf_ref, whhb_ref,
                 w1_ref, b1_ref, w2_ref, b2_ref, w3_ref, b3_ref,
                 out_ref,
                 gxf_ref, gxb_ref, hfs_ref, hbs_ref,
                 *, alpha):
    f32 = jnp.float32
    S, B, T2, C = x_ref.shape            # x packed as [time-parity, batch, T//S, chan]
    K, F0, F1 = wenh_ref.shape
    H = whhf_ref.shape[-1]
    Tp = hfs_ref.shape[0]
    G = F1 // Tp                         # feature-block width of the raw .view() scramble

    # ---- spatial block: Conv2d(1, F0, (C,1)) + folded BN + PReLU ------------
    x2d = x_ref[...].reshape(S * B * T2, C)
    y1 = jnp.dot(x2d, wsp_ref[...], preferred_element_type=f32)
    y1 = _prelu(y1 * sps_ref[...] + spb_ref[...], alpha)
    y1 = y1.reshape(S, B, T2, F0)        # y1[p, b, u, :] == spatial out at time t = S*u + p

    # ---- enhanced block: Conv2d(F0, F1, (1,K), stride S) + BN + PReLU -------
    # conv == sum_k  y1[..., t'*S + k, :] @ W_k ; with k = S*q + p the time
    # index S*(t'+q) + p is a *contiguous* slice of the parity-split y1.
    acc = jnp.zeros((B * Tp, F1), f32)
    for k in range(K):                   # K = 10, static
        p_, q_ = k % S, k // S
        slab = y1[p_, :, q_:q_ + Tp, :].reshape(B * Tp, F0)
        acc = acc + jnp.dot(slab, wenh_ref[k], preferred_element_type=f32)
    y2 = _prelu(acc * ens_ref[...] + enb_ref[...], alpha)       # rows ordered (b, t')

    # ---- PyTorch LSTM wrapper: x.view(Tp, B, F1) of the contiguous (B, F1, Tp)
    # conv output -- a RAW reinterpretation that scrambles batch/feature/time.
    # Reproduced exactly (deliberate!), with F1 = G*Tp:
    #   lstm_in[t2*B + b2, g*Tp + t'] = y2[b, t', l*G + g],  b = j//Tp, l = j%Tp
    y2T = jnp.transpose(y2, (1, 0))      # (F1, B*Tp), columns ordered (b, t')
    dest = []
    for b in range(B):
        blk = y2T[:, b * Tp:(b + 1) * Tp].reshape(Tp, G, Tp)    # [l, g, t']
        dest.append(jnp.concatenate([blk[:, g, :] for g in range(G)], axis=1))
    lstm_in = jnp.concatenate(dest, axis=0)                     # (Tp*B, F1)

    # ---- BiLSTM: hoist input projections out of the recurrence --------------
    # one matmul covers both directions and all timesteps (gate order i,f,g,o)
    gx = jnp.dot(lstm_in, wih_ref[...], preferred_element_type=f32) + bih_ref[...]
    for g in range(4):
        gxf_ref[g] = gx[:, g * H:(g + 1) * H].reshape(Tp, B, H)
        gxb_ref[g] = gx[:, 4 * H + g * H:4 * H + (g + 1) * H].reshape(Tp, B, H)

    def step(t, carry):
        hf, cf, hb, cb = carry
        rt = Tp - 1 - t
        # gate-major (4, H, H) recurrent weights: gate extraction is a leading
        # index, never an intra-vreg lane slice, on the serial path.
        pf = [gxf_ref[g, t] + jnp.dot(hf, whhf_ref[g], preferred_element_type=f32)
              for g in range(4)]
        pb = [gxb_ref[g, rt] + jnp.dot(hb, whhb_ref[g], preferred_element_type=f32)
              for g in range(4)]
        # batch the transcendentals of both directions into few EUP issues
        sig = jax.nn.sigmoid(jnp.concatenate(
            [pf[0], pf[1], pf[3], pb[0], pb[1], pb[3]], axis=0))
        tg = jnp.tanh(jnp.concatenate([pf[2], pb[2]], axis=0))
        i_f, f_f, o_f = sig[0:B], sig[B:2 * B], sig[2 * B:3 * B]
        i_b, f_b, o_b = sig[3 * B:4 * B], sig[4 * B:5 * B], sig[5 * B:6 * B]
        cf_n = f_f * cf + i_f * tg[0:B]
        cb_n = f_b * cb + i_b * tg[B:2 * B]
        tc = jnp.tanh(jnp.concatenate([cf_n, cb_n], axis=0))
        hf_n = o_f * tc[0:B]
        hb_n = o_b * tc[B:2 * B]
        hfs_ref[t] = hf_n
        hbs_ref[rt] = hb_n
        return hf_n, cf_n, hb_n, cb_n

    # TODO(synk): on v7x the two directions could run on separate TensorCores
    # via core_map; here they are interleaved in one loop for single-core ILP.
    z = jnp.zeros((B, H), f32)
    _ = lax.fori_loop(0, Tp, step, (z, z, z, z), unroll=True)

    # ---- dense head: raw r_out.view(B, 2*Tp*F1) + Linear/PReLU x2 + Linear ---
    # feat row b = r_out rows m in [b*Tp, (b+1)*Tp) (m = t*B + b2), each row
    # being [h_fwd | h_bwd]; rebuilt with a raw leading reshape + lane concat.
    hf_g = hfs_ref[...].reshape(B, Tp, H)
    hb_g = hbs_ref[...].reshape(B, Tp, H)
    pieces = []
    for u in range(Tp):
        pieces.append(hf_g[:, u, :])
        pieces.append(hb_g[:, u, :])
    feat = jnp.concatenate(pieces, axis=1)                      # (B, 2*Tp*H), lane-dense
    h1 = _prelu(jnp.dot(feat, w1_ref[...], preferred_element_type=f32) + b1_ref[...],
                alpha)
    h2 = _prelu(jnp.dot(h1, w2_ref[...], preferred_element_type=f32) + b2_ref[...],
                alpha)
    # Dropout is identity at inference
    out_ref[...] = jnp.dot(h2, w3_ref[...], preferred_element_type=f32) + b3_ref[...]


# ---------------------------------------------------------------------------
# Wrapper: layout plumbing (input + parameter packing) + single pallas_call
# ---------------------------------------------------------------------------
@jax.jit
def esnet_forward(p, x):
    B, _, C, T = x.shape
    F0 = p["w_sp"].shape[0]
    F1, _, K = p["w_en"].shape
    S = STRIDE
    H = F1
    Tp = (T - K) // S + 1
    T2 = T // S
    nc = p["w3_t"].shape[1]
    # shape restrictions of this fused implementation (hold for the demo sizes)
    assert T % S == 0, "T must be a multiple of the conv stride"
    assert F1 % Tp == 0, "F1 must be a multiple of Tp for the raw .view() rebuild"

    # input layout plumbing: NCHW -> (time-parity, batch, T//S, chan) so the
    # stride-S conv becomes contiguous in-kernel slices (no HBM intermediates).
    x0 = jnp.transpose(x[:, 0], (0, 2, 1))                          # (B, T, C)
    x_packed = jnp.transpose(x0.reshape(B, T2, S, C), (2, 0, 1, 3))  # (S, B, T2, C)

    # parameter packing (pure layout work; could be cached offline)
    wsp_t = p["w_sp"].T                                             # (C, F0)
    sps, spb = p["sp_scale"].reshape(1, F0), p["sp_shift"].reshape(1, F0)
    wenh = jnp.transpose(p["w_en"], (2, 1, 0))                      # (K, F0, F1)
    ens, enb = p["enh_scale"].reshape(1, F1), p["enh_shift"].reshape(1, F1)
    wih = jnp.concatenate([p["wif_t"], p["wib_t"]], axis=1)         # (F1, 8H)
    bih = jnp.concatenate([p["bf"], p["bb"]], axis=1)               # (1, 8H)
    whhf = jnp.stack([p["whf_t"][:, g * H:(g + 1) * H] for g in range(4)], axis=0)
    whhb = jnp.stack([p["whb_t"][:, g * H:(g + 1) * H] for g in range(4)], axis=0)

    vmem = lambda: pl.BlockSpec(memory_space=pltpu.MemorySpace.VMEM)
    return pl.pallas_call(
        functools.partial(esnet_kernel, alpha=PRELU_ALPHA),
        out_shape=jax.ShapeDtypeStruct((B, nc), jnp.float32),
        in_specs=[vmem() for _ in range(17)],
        out_specs=vmem(),
        scratch_shapes=[
            pltpu.VMEM((4, Tp, B, H), jnp.float32),   # forward gate inputs (hoisted)
            pltpu.VMEM((4, Tp, B, H), jnp.float32),   # backward gate inputs (hoisted)
            pltpu.VMEM((Tp, B, H), jnp.float32),      # forward hidden states
            pltpu.VMEM((Tp, B, H), jnp.float32),      # backward hidden states
        ],
    )(x_packed, wsp_t, sps, spb, wenh, ens, enb,
      wih, bih, whhf, whhb,
      p["w1_t"], p["b1"], p["w2_t"], p["b2"], p["w3_t"], p["b3"])


# ---------------------------------------------------------------------------
# Parameter init (deterministic, synthetic -- mirrors module __init__ shapes)
# ---------------------------------------------------------------------------
def init_params(key, C, T, num_classes):
    F0, F1 = 2 * C, 4 * C
    H = F1
    Tp = (T - KSIZE) // STRIDE + 1
    fc_unit = F1 * Tp * 2
    D1 = fc_unit // 10
    D2 = D1 // 5

    keys = iter(jax.random.split(key, 40))
    normal = lambda shape, s: s * jax.random.normal(next(keys), shape, jnp.float32)
    uniform = lambda shape, lo, hi: jax.random.uniform(next(keys), shape, jnp.float32,
                                                       minval=lo, maxval=hi)
    p = {}

    # spatial: Conv2dWithConstraint(1, F0, (C,1), max_norm=1) + BN (folded) + PReLU
    w_sp = normal((F0, C), 0.3)
    n = jnp.sqrt(jnp.sum(w_sp * w_sp, axis=1, keepdims=True))
    w_sp = w_sp * jnp.where(n > 1.0, 1.0 / (n + 1e-7), 1.0)   # max_norm renorm (dim=0)
    b_sp = normal((F0,), 0.1)
    gamma, beta = uniform((F0,), 0.5, 1.5), normal((F0,), 0.1)
    mean, var = normal((F0,), 0.1), uniform((F0,), 0.5, 1.5)
    scale = gamma / jnp.sqrt(var + BN_EPS)
    p["w_sp"] = w_sp
    p["sp_scale"] = scale
    p["sp_shift"] = scale * (b_sp - mean) + beta

    # enhanced: Conv2d(F0, F1, (1,K), stride (1,S)) + BN (folded) + PReLU
    w_en = normal((F1, F0, KSIZE), 0.1)
    b_en = normal((F1,), 0.1)
    gamma, beta = uniform((F1,), 0.5, 1.5), normal((F1,), 0.1)
    mean, var = normal((F1,), 0.1), uniform((F1,), 0.5, 1.5)
    scale = gamma / jnp.sqrt(var + BN_EPS)
    p["w_en"] = w_en
    p["enh_scale"] = scale
    p["enh_shift"] = scale * (b_en - mean) + beta

    # bidirectional LSTM(input=F1, hidden=F1), PyTorch gate order (i, f, g, o)
    bound = 1.0 / np.sqrt(H)
    def lstm_dir():
        w_ih = uniform((4 * H, F1), -bound, bound)
        w_hh = uniform((4 * H, H), -bound, bound)
        b_ih = uniform((4 * H,), -bound, bound)
        b_hh = uniform((4 * H,), -bound, bound)
        return w_ih.T, w_hh.T, (b_ih + b_hh).reshape(1, 4 * H)
    p["wif_t"], p["whf_t"], p["bf"] = lstm_dir()
    p["wib_t"], p["whb_t"], p["bb"] = lstm_dir()

    # dense head
    def linear(fan_in, fan_out):
        b = 1.0 / np.sqrt(fan_in)
        return uniform((fan_in, fan_out), -b, b), uniform((1, fan_out), -b, b)
    p["w1_t"], p["b1"] = linear(fc_unit, D1)
    p["w2_t"], p["b2"] = linear(D1, D2)
    p["w3_t"], p["b3"] = linear(D2, num_classes)
    return p


# ---------------------------------------------------------------------------
# Pure-JAX reference (same math, no Pallas) for correctness check
# ---------------------------------------------------------------------------
def esnet_forward_ref(p, x):
    B, _, C, T = x.shape
    F1, F0, K = p["w_en"].shape
    H = F1
    S = STRIDE
    Tp = (T - K) // S + 1

    x0 = x[:, 0]                                                 # (B, C, T)
    y1 = jnp.einsum('fc,bct->bft', p["w_sp"], x0)
    y1 = _prelu(y1 * p["sp_scale"][None, :, None] + p["sp_shift"][None, :, None],
                PRELU_ALPHA)

    idx = jnp.arange(Tp)[:, None] * S + jnp.arange(K)[None, :]
    pat = y1[:, :, idx]                                          # (B, F0, Tp, K)
    y2 = jnp.einsum('bctk,fck->bft', pat, p["w_en"])             # (B, F1, Tp)
    y2 = _prelu(y2 * p["enh_scale"][None, :, None] + p["enh_shift"][None, :, None],
                PRELU_ALPHA)

    # PyTorch LSTM wrapper: raw .view of the contiguous (B, F1, Tp) tensor
    xl = jnp.reshape(y2, (Tp, B, F1))

    def run_dir(wi_t, wh_t, b, reverse):
        h = jnp.zeros((B, H), jnp.float32)
        c = jnp.zeros((B, H), jnp.float32)
        outs = [None] * Tp
        order = range(Tp - 1, -1, -1) if reverse else range(Tp)
        for t in order:
            g = xl[t] @ wi_t + h @ wh_t + b
            i = jax.nn.sigmoid(g[:, :H]); f = jax.nn.sigmoid(g[:, H:2 * H])
            gg = jnp.tanh(g[:, 2 * H:3 * H]); o = jax.nn.sigmoid(g[:, 3 * H:])
            c = f * c + i * gg
            h = o * jnp.tanh(c)
            outs[t] = h
        return jnp.stack(outs, 0)

    hf = run_dir(p["wif_t"], p["whf_t"], p["bf"], False)
    hb = run_dir(p["wib_t"], p["whb_t"], p["bb"], True)
    r_out = jnp.concatenate([hf, hb], axis=-1)                   # (Tp, B, 2H)

    feat = jnp.reshape(r_out, (B, 2 * Tp * F1))                  # raw .view + Flatten
    h1 = _prelu(feat @ p["w1_t"] + p["b1"], PRELU_ALPHA)
    h2 = _prelu(h1 @ p["w2_t"] + p["b2"], PRELU_ALPHA)
    return h2 @ p["w3_t"] + p["b3"]


if __name__ == "__main__":
    # ESNet(num_channels=8, T=16, num_classes=3); input is NCHW (B, 1, nChan, T)
    B, C, T, NUM_CLASSES = 2, 8, 16, 3
    key = jax.random.PRNGKey(0)
    pkey, xkey = jax.random.split(key)
    params = init_params(pkey, C, T, NUM_CLASSES)
    x = jax.random.normal(xkey, (B, 1, C, T), jnp.float32)

    out = jax.block_until_ready(esnet_forward(params, x))
    ref = esnet_forward_ref(params, x)

    assert out.shape == (B, NUM_CLASSES), out.shape
    assert bool(jnp.all(jnp.isfinite(out)))
    np.testing.assert_allclose(np.asarray(out), np.asarray(ref), rtol=1e-2, atol=1e-3)
    print("KERNEL_OK")
</pallas_src>

<mosaic_0001>
module attributes {stable_mosaic.version = 11 : i64} {
  func.func @esnet_kernel(%arg0: memref<2x2x8x8xf32, #tpu.memory_space<vmem>>, %arg1: memref<8x16xf32, #tpu.memory_space<vmem>>, %arg2: memref<1x16xf32, #tpu.memory_space<vmem>>, %arg3: memref<1x16xf32, #tpu.memory_space<vmem>>, %arg4: memref<10x16x32xf32, #tpu.memory_space<vmem>>, %arg5: memref<1x32xf32, #tpu.memory_space<vmem>>, %arg6: memref<1x32xf32, #tpu.memory_space<vmem>>, %arg7: memref<32x256xf32, #tpu.memory_space<vmem>>, %arg8: memref<1x256xf32, #tpu.memory_space<vmem>>, %arg9: memref<4x32x32xf32, #tpu.memory_space<vmem>>, %arg10: memref<4x32x32xf32, #tpu.memory_space<vmem>>, %arg11: memref<256x25xf32, #tpu.memory_space<vmem>>, %arg12: memref<1x25xf32, #tpu.memory_space<vmem>>, %arg13: memref<25x5xf32, #tpu.memory_space<vmem>>, %arg14: memref<1x5xf32, #tpu.memory_space<vmem>>, %arg15: memref<5x3xf32, #tpu.memory_space<vmem>>, %arg16: memref<1x3xf32, #tpu.memory_space<vmem>>, %arg17: memref<2x3xf32, #tpu.memory_space<vmem>>, %arg18: memref<4x4x2x32xf32, #tpu.memory_space<vmem>>, %arg19: memref<4x4x2x32xf32, #tpu.memory_space<vmem>>, %arg20: memref<4x2x32xf32, #tpu.memory_space<vmem>>, %arg21: memref<4x2x32xf32, #tpu.memory_space<vmem>>) attributes {dimension_semantics = [], scalar_prefetch = 0 : i64, scratch_operands = 4 : i64, tpu.core_type = #tpu.core_type<tc>} {
    %c0 = arith.constant 0 : index
    %c0_0 = arith.constant 0 : index
    %c0_1 = arith.constant 0 : index
    %c0_2 = arith.constant 0 : index
    %0 = vector.load %arg0[%c0, %c0_0, %c0_1, %c0_2] : memref<2x2x8x8xf32, #tpu.memory_space<vmem>>, vector<2x2x8x8xf32>
    %1 = vector.shape_cast %0 : vector<2x2x8x8xf32> to vector<32x8xf32>
    %c0_3 = arith.constant 0 : index
    %c0_4 = arith.constant 0 : index
    %2 = vector.load %arg1[%c0_3, %c0_4] : memref<8x16xf32, #tpu.memory_space<vmem>>, vector<8x16xf32>
    %cst = arith.constant dense<0.000000e+00> : vector<32x16xf32>
    %3 = tpu.matmul %1, %2, %cst {dimension_numbers = #tpu.dot_dimension_numbers<[1], [0], [0], [1], [0, 0, 1, 1], [], []>} : vector<32x8xf32>, vector<8x16xf32>, vector<32x16xf32> -> vector<32x16xf32>
    %c0_5 = arith.constant 0 : index
    %c0_6 = arith.constant 0 : index
    %4 = vector.load %arg2[%c0_5, %c0_6] : memref<1x16xf32, #tpu.memory_space<vmem>>, vector<1x16xf32>
    %5 = vector.broadcast %4 : vector<1x16xf32> to vector<32x16xf32>
    %6 = arith.mulf %3, %5 : vector<32x16xf32>
    %c0_7 = arith.constant 0 : index
    %c0_8 = arith.constant 0 : index
    %7 = vector.load %arg3[%c0_7, %c0_8] : memref<1x16xf32, #tpu.memory_space<vmem>>, vector<1x16xf32>
    %8 = vector.broadcast %7 : vector<1x16xf32> to vector<32x16xf32>
    %9 = arith.addf %6, %8 : vector<32x16xf32>
    %cst_9 = arith.constant 0.000000e+00 : f32
    %10 = vector.broadcast %cst_9 : f32 to vector<32x16xf32>
    %11 = arith.cmpf oge, %9, %10 : vector<32x16xf32>
    %cst_10 = arith.constant 2.500000e-01 : f32
    %12 = vector.broadcast %cst_10 : f32 to vector<32x16xf32>
    %13 = arith.mulf %12, %9 : vector<32x16xf32>
    %14 = arith.select %11, %9, %13 : vector<32x16xi1>, vector<32x16xf32>
    %15 = vector.shape_cast %14 : vector<32x16xf32> to vector<2x2x8x16xf32>
    %cst_11 = arith.constant 0.000000e+00 : f32
    %16 = vector.broadcast %cst_11 : f32 to vector<8x32xf32>
    %17 = vector.extract_strided_slice %15 {offsets = [0, 0, 0, 0], sizes = [1, 2, 4, 16], strides = [1, 1, 1, 1]} : vector<2x2x8x16xf32> to vector<1x2x4x16xf32>
    %18 = vector.shape_cast %17 : vector<1x2x4x16xf32> to vector<2x4x16xf32>
    %19 = vector.shape_cast %18 : vector<2x4x16xf32> to vector<8x16xf32>
    %c0_12 = arith.constant 0 : index
    %c0_13 = arith.constant 0 : index
    %c0_14 = arith.constant 0 : index
    %20 = vector.load %arg4[%c0_12, %c0_13, %c0_14] : memref<10x16x32xf32, #tpu.memory_space<vmem>>, vector<1x16x32xf32>
    %21 = vector.shape_cast %20 : vector<1x16x32xf32> to vector<16x32xf32>
    %cst_15 = arith.constant dense<0.000000e+00> : vector<8x32xf32>
    %22 = tpu.matmul %19, %21, %cst_15 {dimension_numbers = #tpu.dot_dimension_numbers<[1], [0], [0], [1], [0, 0, 1, 1], [], []>} : vector<8x16xf32>, vector<16x32xf32>, vector<8x32xf32> -> vector<8x32xf32>
    %23 = arith.addf %16, %22 : vector<8x32xf32>
    %24 = vector.extract_strided_slice %15 {offsets = [1, 0, 0, 0], sizes = [1, 2, 4, 16], strides = [1, 1, 1, 1]} : vector<2x2x8x16xf32> to vector<1x2x4x16xf32>
    %25 = vector.shape_cast %24 : vector<1x2x4x16xf32> to vector<2x4x16xf32>
    %26 = vector.shape_cast %25 : vector<2x4x16xf32> to vector<8x16xf32>
    %c1 = arith.constant 1 : index
    %c0_16 = arith.constant 0 : index
    %c0_17 = arith.constant 0 : index
    %27 = vector.load %arg4[%c1, %c0_16, %c0_17] : memref<10x16x32xf32, #tpu.memory_space<vmem>>, vector<1x16x32xf32>
    %28 = vector.shape_cast %27 : vector<1x16x32xf32> to vector<16x32xf32>
    %cst_18 = arith.constant dense<0.000000e+00> : vector<8x32xf32>
    %29 = tpu.matmul %26, %28, %cst_18 {dimension_numbers = #tpu.dot_dimension_numbers<[1], [0], [0], [1], [0, 0, 1, 1], [], []>} : vector<8x16xf32>, vector<16x32xf32>, vector<8x32xf32> -> vector<8x32xf32>
    %30 = arith.addf %23, %29 : vector<8x32xf32>
    %31 = vector.extract_strided_slice %15 {offsets = [0, 0, 1, 0], sizes = [1, 2, 4, 16], strides = [1, 1, 1, 1]} : vector<2x2x8x16xf32> to vector<1x2x4x16xf32>
    %32 = vector.shape_cast %31 : vector<1x2x4x16xf32> to vector<2x4x16xf32>
    %33 = vector.shape_cast %32 : vector<2x4x16xf32> to vector<8x16xf32>
    %c2 = arith.constant 2 : index
    %c0_19 = arith.constant 0 : index
    %c0_20 = arith.constant 0 : index
    %34 = vector.load %arg4[%c2, %c0_19, %c0_20] : memref<10x16x32xf32, #tpu.memory_space<vmem>>, vector<1x16x32xf32>
    %35 = vector.shape_cast %34 : vector<1x16x32xf32> to vector<16x32xf32>
    %cst_21 = arith.constant dense<0.000000e+00> : vector<8x32xf32>
    %36 = tpu.matmul %33, %35, %cst_21 {dimension_numbers = #tpu.dot_dimension_numbers<[1], [0], [0], [1], [0, 0, 1, 1], [], []>} : vector<8x16xf32>, vector<16x32xf32>, vector<8x32xf32> -> vector<8x32xf32>
    %37 = arith.addf %30, %36 : vector<8x32xf32>
    %38 = vector.extract_strided_slice %15 {offsets = [1, 0, 1, 0], sizes = [1, 2, 4, 16], strides = [1, 1, 1, 1]} : vector<2x2x8x16xf32> to vector<1x2x4x16xf32>
    %39 = vector.shape_cast %38 : vector<1x2x4x16xf32> to vector<2x4x16xf32>
    %40 = vector.shape_cast %39 : vector<2x4x16xf32> to vector<8x16xf32>
    %c3 = arith.constant 3 : index
    %c0_22 = arith.constant 0 : index
    %c0_23 = arith.constant 0 : index
    %41 = vector.load %arg4[%c3, %c0_22, %c0_23] : memref<10x16x32xf32, #tpu.memory_space<vmem>>, vector<1x16x32xf32>
    %42 = vector.shape_cast %41 : vector<1x16x32xf32> to vector<16x32xf32>
    %cst_24 = arith.constant dense<0.000000e+00> : vector<8x32xf32>
    %43 = tpu.matmul %40, %42, %cst_24 {dimension_numbers = #tpu.dot_dimension_numbers<[1], [0], [0], [1], [0, 0, 1, 1], [], []>} : vector<8x16xf32>, vector<16x32xf32>, vector<8x32xf32> -> vector<8x32xf32>
    %44 = arith.addf %37, %43 : vector<8x32xf32>
    %45 = vector.extract_strided_slice %15 {offsets = [0, 0, 2, 0], sizes = [1, 2, 4, 16], strides = [1, 1, 1, 1]} : vector<2x2x8x16xf32> to vector<1x2x4x16xf32>
    %46 = vector.shape_cast %45 : vector<1x2x4x16xf32> to vector<2x4x16xf32>
    %47 = vector.shape_cast %46 : vector<2x4x16xf32> to vector<8x16xf32>
    %c4 = arith.constant 4 : index
    %c0_25 = arith.constant 0 : index
    %c0_26 = arith.constant 0 : index
    %48 = vector.load %arg4[%c4, %c0_25, %c0_26] : memref<10x16x32xf32, #tpu.memory_space<vmem>>, vector<1x16x32xf32>
    %49 = vector.shape_cast %48 : vector<1x16x32xf32> to vector<16x32xf32>
    %cst_27 = arith.constant dense<0.000000e+00> : vector<8x32xf32>
    %50 = tpu.matmul %47, %49, %cst_27 {dimension_numbers = #tpu.dot_dimension_numbers<[1], [0], [0], [1], [0, 0, 1, 1], [], []>} : vector<8x16xf32>, vector<16x32xf32>, vector<8x32xf32> -> vector<8x32xf32>
    %51 = arith.addf %44, %50 : vector<8x32xf32>
    %52 = vector.extract_strided_slice %15 {offsets = [1, 0, 2, 0], sizes = [1, 2, 4, 16], strides = [1, 1, 1, 1]} : vector<2x2x8x16xf32> to vector<1x2x4x16xf32>
    %53 = vector.shape_cast %52 : vector<1x2x4x16xf32> to vector<2x4x16xf32>
    %54 = vector.shape_cast %53 : vector<2x4x16xf32> to vector<8x16xf32>
    %c5 = arith.constant 5 : index
    %c0_28 = arith.constant 0 : index
    %c0_29 = arith.constant 0 : index
    %55 = vector.load %arg4[%c5, %c0_28, %c0_29] : memref<10x16x32xf32, #tpu.memory_space<vmem>>, vector<1x16x32xf32>
    %56 = vector.shape_cast %55 : vector<1x16x32xf32> to vector<16x32xf32>
    %cst_30 = arith.constant dense<0.000000e+00> : vector<8x32xf32>
    %57 = tpu.matmul %54, %56, %cst_30 {dimension_numbers = #tpu.dot_dimension_numbers<[1], [0], [0], [1], [0, 0, 1, 1], [], []>} : vector<8x16xf32>, vector<16x32xf32>, vector<8x32xf32> -> vector<8x32xf32>
    %58 = arith.addf %51, %57 : vector<8x32xf32>
    %59 = vector.extract_strided_slice %15 {offsets = [0, 0, 3, 0], sizes = [1, 2, 4, 16], strides = [1, 1, 1, 1]} : vector<2x2x8x16xf32> to vector<1x2x4x16xf32>
    %60 = vector.shape_cast %59 : vector<1x2x4x16xf32> to vector<2x4x16xf32>
    %61 = vector.shape_cast %60 : vector<2x4x16xf32> to vector<8x16xf32>
    %c6 = arith.constant 6 : index
    %c0_31 = arith.constant 0 : index
    %c0_32 = arith.constant 0 : index
    %62 = vector.load %arg4[%c6, %c0_31, %c0_32] : memref<10x16x32xf32, #tpu.memory_space<vmem>>, vector<1x16x32xf32>
    %63 = vector.shape_cast %62 : vector<1x16x32xf32> to vector<16x32xf32>
    %cst_33 = arith.constant dense<0.000000e+00> : vector<8x32xf32>
    %64 = tpu.matmul %61, %63, %cst_33 {dimension_numbers = #tpu.dot_dimension_numbers<[1], [0], [0], [1], [0, 0, 1, 1], [], []>} : vector<8x16xf32>, vector<16x32xf32>, vector<8x32xf32> -> vector<8x32xf32>
    %65 = arith.addf %58, %64 : vector<8x32xf32>
    %66 = vector.extract_strided_slice %15 {offsets = [1, 0, 3, 0], sizes = [1, 2, 4, 16], strides = [1, 1, 1, 1]} : vector<2x2x8x16xf32> to vector<1x2x4x16xf32>
    %67 = vector.shape_cast %66 : vector<1x2x4x16xf32> to vector<2x4x16xf32>
    %68 = vector.shape_cast %67 : vector<2x4x16xf32> to vector<8x16xf32>
    %c7 = arith.constant 7 : index
    %c0_34 = arith.constant 0 : index
    %c0_35 = arith.constant 0 : index
    %69 = vector.load %arg4[%c7, %c0_34, %c0_35] : memref<10x16x32xf32, #tpu.memory_space<vmem>>, vector<1x16x32xf32>
    %70 = vector.shape_cast %69 : vector<1x16x32xf32> to vector<16x32xf32>
    %cst_36 = arith.constant dense<0.000000e+00> : vector<8x32xf32>
    %71 = tpu.matmul %68, %70, %cst_36 {dimension_numbers = #tpu.dot_dimension_numbers<[1], [0], [0], [1], [0, 0, 1, 1], [], []>} : vector<8x16xf32>, vector<16x32xf32>, vector<8x32xf32> -> vector<8x32xf32>
    %72 = arith.addf %65, %71 : vector<8x32xf32>
    %73 = vector.extract_strided_slice %15 {offsets = [0, 0, 4, 0], sizes = [1, 2, 4, 16], strides = [1, 1, 1, 1]} : vector<2x2x8x16xf32> to vector<1x2x4x16xf32>
    %74 = vector.shape_cast %73 : vector<1x2x4x16xf32> to vector<2x4x16xf32>
    %75 = vector.shape_cast %74 : vector<2x4x16xf32> to vector<8x16xf32>
    %c8 = arith.constant 8 : index
    %c0_37 = arith.constant 0 : index
    %c0_38 = arith.constant 0 : index
    %76 = vector.load %arg4[%c8, %c0_37, %c0_38] : memref<10x16x32xf32, #tpu.memory_space<vmem>>, vector<1x16x32xf32>
    %77 = vector.shape_cast %76 : vector<1x16x32xf32> to vector<16x32xf32>
    %cst_39 = arith.constant dense<0.000000e+00> : vector<8x32xf32>
    %78 = tpu.matmul %75, %77, %cst_39 {dimension_numbers = #tpu.dot_dimension_numbers<[1], [0], [0], [1], [0, 0, 1, 1], [], []>} : vector<8x16xf32>, vector<16x32xf32>, vector<8x32xf32> -> vector<8x32xf32>
    %79 = arith.addf %72, %78 : vector<8x32xf32>
    %80 = vector.extract_strided_slice %15 {offsets = [1, 0, 4, 0], sizes = [1, 2, 4, 16], strides = [1, 1, 1, 1]} : vector<2x2x8x16xf32> to vector<1x2x4x16xf32>
    %81 = vector.shape_cast %80 : vector<1x2x4x16xf32> to vector<2x4x16xf32>
    %82 = vector.shape_cast %81 : vector<2x4x16xf32> to vector<8x16xf32>
    %c9 = arith.constant 9 : index
    %c0_40 = arith.constant 0 : index
    %c0_41 = arith.constant 0 : index
    %83 = vector.load %arg4[%c9, %c0_40, %c0_41] : memref<10x16x32xf32, #tpu.memory_space<vmem>>, vector<1x16x32xf32>
    %84 = vector.shape_cast %83 : vector<1x16x32xf32> to vector<16x32xf32>
    %cst_42 = arith.constant dense<0.000000e+00> : vector<8x32xf32>
    %85 = tpu.matmul %82, %84, %cst_42 {dimension_numbers = #tpu.dot_dimension_numbers<[1], [0], [0], [1], [0, 0, 1, 1], [], []>} : vector<8x16xf32>, vector<16x32xf32>, vector<8x32xf32> -> vector<8x32xf32>
    %86 = arith.addf %79, %85 : vector<8x32xf32>
    %c0_43 = arith.constant 0 : index
    %c0_44 = arith.constant 0 : index
    %87 = vector.load %arg5[%c0_43, %c0_44] : memref<1x32xf32, #tpu.memory_space<vmem>>, vector<1x32xf32>
    %88 = vector.broadcast %87 : vector<1x32xf32> to vector<8x32xf32>
    %89 = arith.mulf %86, %88 : vector<8x32xf32>
    %c0_45 = arith.constant 0 : index
    %c0_46 = arith.constant 0 : index
    %90 = vector.load %arg6[%c0_45, %c0_46] : memref<1x32xf32, #tpu.memory_space<vmem>>, vector<1x32xf32>
    %91 = vector.broadcast %90 : vector<1x32xf32> to vector<8x32xf32>
    %92 = arith.addf %89, %91 : vector<8x32xf32>
    %cst_47 = arith.constant 0.000000e+00 : f32
    %93 = vector.broadcast %cst_47 : f32 to vector<8x32xf32>
    %94 = arith.cmpf oge, %92, %93 : vector<8x32xf32>
    %cst_48 = arith.constant 2.500000e-01 : f32
    %95 = vector.broadcast %cst_48 : f32 to vector<8x32xf32>
    %96 = arith.mulf %95, %92 : vector<8x32xf32>
    %97 = arith.select %94, %92, %96 : vector<8x32xi1>, vector<8x32xf32>
    %98 = tpu.transpose %97, [1, 0] : vector<8x32xf32> -> vector<32x8xf32>
    %99 = vector.extract_strided_slice %98 {offsets = [0, 0], sizes = [32, 4], strides = [1, 1]} : vector<32x8xf32> to vector<32x4xf32>
    %100 = vector.shape_cast %99 : vector<32x4xf32> to vector<4x8x4xf32>
    %101 = vector.extract_strided_slice %100 {offsets = [0, 0, 0], sizes = [4, 1, 4], strides = [1, 1, 1]} : vector<4x8x4xf32> to vector<4x1x4xf32>
    %102 = vector.shape_cast %101 : vector<4x1x4xf32> to vector<4x4xf32>
    %103 = vector.extract_strided_slice %100 {offsets = [0, 1, 0], sizes = [4, 1, 4], strides = [1, 1, 1]} : vector<4x8x4xf32> to vector<4x1x4xf32>
    %104 = vector.shape_cast %103 : vector<4x1x4xf32> to vector<4x4xf32>
    %105 = vector.extract_strided_slice %100 {offsets = [0, 2, 0], sizes = [4, 1, 4], strides = [1, 1, 1]} : vector<4x8x4xf32> to vector<4x1x4xf32>
    %106 = vector.shape_cast %105 : vector<4x1x4xf32> to vector<4x4xf32>
    %107 = vector.extract_strided_slice %100 {offsets = [0, 3, 0], sizes = [4, 1, 4], strides = [1, 1, 1]} : vector<4x8x4xf32> to vector<4x1x4xf32>
    %108 = vector.shape_cast %107 : vector<4x1x4xf32> to vector<4x4xf32>
    %109 = vector.extract_strided_slice %100 {offsets = [0, 4, 0], sizes = [4, 1, 4], strides = [1, 1, 1]} : vector<4x8x4xf32> to vector<4x1x4xf32>
    %110 = vector.shape_cast %109 : vector<4x1x4xf32> to vector<4x4xf32>
    %111 = vector.extract_strided_slice %100 {offsets = [0, 5, 0], sizes = [4, 1, 4], strides = [1, 1, 1]} : vector<4x8x4xf32> to vector<4x1x4xf32>
    %112 = vector.shape_cast %111 : vector<4x1x4xf32> to vector<4x4xf32>
    %113 = vector.extract_strided_slice %100 {offsets = [0, 6, 0], sizes = [4, 1, 4], strides = [1, 1, 1]} : vector<4x8x4xf32> to vector<4x1x4xf32>
    %114 = vector.shape_cast %113 : vector<4x1x4xf32> to vector<4x4xf32>
    %115 = vector.extract_strided_slice %100 {offsets = [0, 7, 0], sizes = [4, 1, 4], strides = [1, 1, 1]} : vector<4x8x4xf32> to vector<4x1x4xf32>
    %116 = vector.shape_cast %115 : vector<4x1x4xf32> to vector<4x4xf32>
    %117 = tpu.concatenate %102, %104, %106, %108, %110, %112, %114, %116 in 1 : vector<4x4xf32>, vector<4x4xf32>, vector<4x4xf32>, vector<4x4xf32>, vector<4x4xf32>, vector<4x4xf32>, vector<4x4xf32>, vector<4x4xf32> -> vector<4x32xf32>
    %118 = vector.extract_strided_slice %98 {offsets = [0, 4], sizes = [32, 4], strides = [1, 1]} : vector<32x8xf32> to vector<32x4xf32>
    %119 = vector.shape_cast %118 : vector<32x4xf32> to vector<4x8x4xf32>
    %120 = vector.extract_strided_slice %119 {offsets = [0, 0, 0], sizes = [4, 1, 4], strides = [1, 1, 1]} : vector<4x8x4xf32> to vector<4x1x4xf32>
    %121 = vector.shape_cast %120 : vector<4x1x4xf32> to vector<4x4xf32>
    %122 = vector.extract_strided_slice %119 {offsets = [0, 1, 0], sizes = [4, 1, 4], strides = [1, 1, 1]} : vector<4x8x4xf32> to vector<4x1x4xf32>
    %123 = vector.shape_cast %122 : vector<4x1x4xf32> to vector<4x4xf32>
    %124 = vector.extract_strided_slice %119 {offsets = [0, 2, 0], sizes = [4, 1, 4], strides = [1, 1, 1]} : vector<4x8x4xf32> to vector<4x1x4xf32>
    %125 = vector.shape_cast %124 : vector<4x1x4xf32> to vector<4x4xf32>
    %126 = vector.extract_strided_slice %119 {offsets = [0, 3, 0], sizes = [4, 1, 4], strides = [1, 1, 1]} : vector<4x8x4xf32> to vector<4x1x4xf32>
    %127 = vector.shape_cast %126 : vector<4x1x4xf32> to vector<4x4xf32>
    %128 = vector.extract_strided_slice %119 {offsets = [0, 4, 0], sizes = [4, 1, 4], strides = [1, 1, 1]} : vector<4x8x4xf32> to vector<4x1x4xf32>
    %129 = vector.shape_cast %128 : vector<4x1x4xf32> to vector<4x4xf32>
    %130 = vector.extract_strided_slice %119 {offsets = [0, 5, 0], sizes = [4, 1, 4], strides = [1, 1, 1]} : vector<4x8x4xf32> to vector<4x1x4xf32>
    %131 = vector.shape_cast %130 : vector<4x1x4xf32> to vector<4x4xf32>
    %132 = vector.extract_strided_slice %119 {offsets = [0, 6, 0], sizes = [4, 1, 4], strides = [1, 1, 1]} : vector<4x8x4xf32> to vector<4x1x4xf32>
    %133 = vector.shape_cast %132 : vector<4x1x4xf32> to vector<4x4xf32>
    %134 = vector.extract_strided_slice %119 {offsets = [0, 7, 0], sizes = [4, 1, 4], strides = [1, 1, 1]} : vector<4x8x4xf32> to vector<4x1x4xf32>
    %135 = vector.shape_cast %134 : vector<4x1x4xf32> to vector<4x4xf32>
    %136 = tpu.concatenate %121, %123, %125, %127, %129, %131, %133, %135 in 1 : vector<4x4xf32>, vector<4x4xf32>, vector<4x4xf32>, vector<4x4xf32>, vector<4x4xf32>, vector<4x4xf32>, vector<4x4xf32>, vector<4x4xf32> -> vector<4x32xf32>
    %137 = tpu.concatenate %117, %136 in 0 : vector<4x32xf32>, vector<4x32xf32> -> vector<8x32xf32>
    %c0_49 = arith.constant 0 : index
    %c0_50 = arith.constant 0 : index
    %138 = vector.load %arg7[%c0_49, %c0_50] : memref<32x256xf32, #tpu.memory_space<vmem>>, vector<32x256xf32>
    %cst_51 = arith.constant dense<0.000000e+00> : vector<8x256xf32>
    %139 = tpu.matmul %137, %138, %cst_51 {dimension_numbers = #tpu.dot_dimension_numbers<[1], [0], [0], [1], [0, 0, 1, 1], [], []>} : vector<8x32xf32>, vector<32x256xf32>, vector<8x256xf32> -> vector<8x256xf32>
    %c0_52 = arith.constant 0 : index
    %c0_53 = arith.constant 0 : index
    %140 = vector.load %arg8[%c0_52, %c0_53] : memref<1x256xf32, #tpu.memory_space<vmem>>, vector<1x256xf32>
    %141 = vector.broadcast %140 : vector<1x256xf32> to vector<8x256xf32>
    %142 = arith.addf %139, %141 : vector<8x256xf32>
    %143 = vector.extract_strided_slice %142 {offsets = [0, 0], sizes = [8, 32], strides = [1, 1]} : vector<8x256xf32> to vector<8x32xf32>
    %144 = vector.shape_cast %143 : vector<8x32xf32> to vector<4x2x32xf32>
    %c0_54 = arith.constant 0 : index
    %c0_55 = arith.constant 0 : index
    %c0_56 = arith.constant 0 : index
    %c0_57 = arith.constant 0 : index
    %145 = vector.load %arg18[%c0_54, %c0_55, %c0_56, %c0_57] : memref<4x4x2x32xf32, #tpu.memory_space<vmem>>, vector<1x4x2x32xf32>
    %146 = vector.shape_cast %145 : vector<1x4x2x32xf32> to vector<4x2x32xf32>
    %147 = vector.shape_cast %144 : vector<4x2x32xf32> to vector<1x4x2x32xf32>
    tpu.vector_store %arg18[%c0_54, %c0_55, %c0_56, %c0_57], %147 {strides = array<i32>} : memref<4x4x2x32xf32, #tpu.memory_space<vmem>>, vector<1x4x2x32xf32>,
    %148 = vector.extract_strided_slice %142 {offsets = [0, 128], sizes = [8, 32], strides = [1, 1]} : vector<8x256xf32> to vector<8x32xf32>
    %149 = vector.shape_cast %148 : vector<8x32xf32> to vector<4x2x32xf32>
    %c0_58 = arith.constant 0 : index
    %c0_59 = arith.constant 0 : index
    %c0_60 = arith.constant 0 : index
    %c0_61 = arith.constant 0 : index
    %150 = vector.load %arg19[%c0_58, %c0_59, %c0_60, %c0_61] : memref<4x4x2x32xf32, #tpu.memory_space<vmem>>, vector<1x4x2x32xf32>
    %151 = vector.shape_cast %150 : vector<1x4x2x32xf32> to vector<4x2x32xf32>
    %152 = vector.shape_cast %149 : vector<4x2x32xf32> to vector<1x4x2x32xf32>
    tpu.vector_store %arg19[%c0_58, %c0_59, %c0_60, %c0_61], %152 {strides = array<i32>} : memref<4x4x2x32xf32, #tpu.memory_space<vmem>>, vector<1x4x2x32xf32>,
    %153 = vector.extract_strided_slice %142 {offsets = [0, 32], sizes = [8, 32], strides = [1, 1]} : vector<8x256xf32> to vector<8x32xf32>
    %154 = vector.shape_cast %153 : vector<8x32xf32> to vector<4x2x32xf32>
    %c1_62 = arith.constant 1 : index
    %c0_63 = arith.constant 0 : index
    %c0_64 = arith.constant 0 : index
    %c0_65 = arith.constant 0 : index
    %155 = vector.load %arg18[%c1_62, %c0_63, %c0_64, %c0_65] : memref<4x4x2x32xf32, #tpu.memory_space<vmem>>, vector<1x4x2x32xf32>
    %156 = vector.shape_cast %155 : vector<1x4x2x32xf32> to vector<4x2x32xf32>
    %157 = vector.shape_cast %154 : vector<4x2x32xf32> to vector<1x4x2x32xf32>
    tpu.vector_store %arg18[%c1_62, %c0_63, %c0_64, %c0_65], %157 {strides = array<i32>} : memref<4x4x2x32xf32, #tpu.memory_space<vmem>>, vector<1x4x2x32xf32>,
    %158 = vector.extract_strided_slice %142 {offsets = [0, 160], sizes = [8, 32], strides = [1, 1]} : vector<8x256xf32> to vector<8x32xf32>
    %159 = vector.shape_cast %158 : vector<8x32xf32> to vector<4x2x32xf32>
    %c1_66 = arith.constant 1 : index
    %c0_67 = arith.constant 0 : index
    %c0_68 = arith.constant 0 : index
    %c0_69 = arith.constant 0 : index
    %160 = vector.load %arg19[%c1_66, %c0_67, %c0_68, %c0_69] : memref<4x4x2x32xf32, #tpu.memory_space<vmem>>, vector<1x4x2x32xf32>
    %161 = vector.shape_cast %160 : vector<1x4x2x32xf32> to vector<4x2x32xf32>
    %162 = vector.shape_cast %159 : vector<4x2x32xf32> to vector<1x4x2x32xf32>
    tpu.vector_store %arg19[%c1_66, %c0_67, %c0_68, %c0_69], %162 {strides = array<i32>} : memref<4x4x2x32xf32, #tpu.memory_space<vmem>>, vector<1x4x2x32xf32>,
    %163 = vector.extract_strided_slice %142 {offsets = [0, 64], sizes = [8, 32], strides = [1, 1]} : vector<8x256xf32> to vector<8x32xf32>
    %164 = vector.shape_cast %163 : vector<8x32xf32> to vector<4x2x32xf32>
    %c2_70 = arith.constant 2 : index
    %c0_71 = arith.constant 0 : index
    %c0_72 = arith.constant 0 : index
    %c0_73 = arith.constant 0 : index
    %165 = vector.load %arg18[%c2_70, %c0_71, %c0_72, %c0_73] : memref<4x4x2x32xf32, #tpu.memory_space<vmem>>, vector<1x4x2x32xf32>
    %166 = vector.shape_cast %165 : vector<1x4x2x32xf32> to vector<4x2x32xf32>
    %167 = vector.shape_cast %164 : vector<4x2x32xf32> to vector<1x4x2x32xf32>
    tpu.vector_store %arg18[%c2_70, %c0_71, %c0_72, %c0_73], %167 {strides = array<i32>} : memref<4x4x2x32xf32, #tpu.memory_space<vmem>>, vector<1x4x2x32xf32>,
    %168 = vector.extract_strided_slice %142 {offsets = [0, 192], sizes = [8, 32], strides = [1, 1]} : vector<8x256xf32> to vector<8x32xf32>
    %169 = vector.shape_cast %168 : vector<8x32xf32> to vector<4x2x32xf32>
    %c2_74 = arith.constant 2 : index
    %c0_75 = arith.constant 0 : index
    %c0_76 = arith.constant 0 : index
    %c0_77 = arith.constant 0 : index
    %170 = vector.load %arg19[%c2_74, %c0_75, %c0_76, %c0_77] : memref<4x4x2x32xf32, #tpu.memory_space<vmem>>, vector<1x4x2x32xf32>
    %171 = vector.shape_cast %170 : vector<1x4x2x32xf32> to vector<4x2x32xf32>
    %172 = vector.shape_cast %169 : vector<4x2x32xf32> to vector<1x4x2x32xf32>
    tpu.vector_store %arg19[%c2_74, %c0_75, %c0_76, %c0_77], %172 {strides = array<i32>} : memref<4x4x2x32xf32, #tpu.memory_space<vmem>>, vector<1x4x2x32xf32>,
    %173 = vector.extract_strided_slice %142 {offsets = [0, 96], sizes = [8, 32], strides = [1, 1]} : vector<8x256xf32> to vector<8x32xf32>
    %174 = vector.shape_cast %173 : vector<8x32xf32> to vector<4x2x32xf32>
    %c3_78 = arith.constant 3 : index
    %c0_79 = arith.constant 0 : index
    %c0_80 = arith.constant 0 : index
    %c0_81 = arith.constant 0 : index
    %175 = vector.load %arg18[%c3_78, %c0_79, %c0_80, %c0_81] : memref<4x4x2x32xf32, #tpu.memory_space<vmem>>, vector<1x4x2x32xf32>
    %176 = vector.shape_cast %175 : vector<1x4x2x32xf32> to vector<4x2x32xf32>
    %177 = vector.shape_cast %174 : vector<4x2x32xf32> to vector<1x4x2x32xf32>
    tpu.vector_store %arg18[%c3_78, %c0_79, %c0_80, %c0_81], %177 {strides = array<i32>} : memref<4x4x2x32xf32, #tpu.memory_space<vmem>>, vector<1x4x2x32xf32>,
    %178 = vector.extract_strided_slice %142 {offsets = [0, 224], sizes = [8, 32], strides = [1, 1]} : vector<8x256xf32> to vector<8x32xf32>
    %179 = vector.shape_cast %178 : vector<8x32xf32> to vector<4x2x32xf32>
    %c3_82 = arith.constant 3 : index
    %c0_83 = arith.constant 0 : index
    %c0_84 = arith.constant 0 : index
    %c0_85 = arith.constant 0 : index
    %180 = vector.load %arg19[%c3_82, %c0_83, %c0_84, %c0_85] : memref<4x4x2x32xf32, #tpu.memory_space<vmem>>, vector<1x4x2x32xf32>
    %181 = vector.shape_cast %180 : vector<1x4x2x32xf32> to vector<4x2x32xf32>
    %182 = vector.shape_cast %179 : vector<4x2x32xf32> to vector<1x4x2x32xf32>
    tpu.vector_store %arg19[%c3_82, %c0_83, %c0_84, %c0_85], %182 {strides = array<i32>} : memref<4x4x2x32xf32, #tpu.memory_space<vmem>>, vector<1x4x2x32xf32>,
    %cst_86 = arith.constant 0.000000e+00 : f32
    %183 = vector.broadcast %cst_86 : f32 to vector<2x32xf32>
    %c0_i32 = arith.constant 0 : i32
    %c3_i32 = arith.constant 3 : i32
    %184 = arith.subi %c3_i32, %c0_i32 : i32
    %c0_87 = arith.constant 0 : index
    %185 = arith.index_cast %c0_i32 : i32 to index
    %c0_88 = arith.constant 0 : index
    %c0_89 = arith.constant 0 : index
    %186 = vector.load %arg18[%c0_87, %185, %c0_88, %c0_89] : memref<4x4x2x32xf32, #tpu.memory_space<vmem>>, vector<1x1x2x32xf32>
    %187 = vector.shape_cast %186 : vector<1x1x2x32xf32> to vector<2x32xf32>
    %c0_90 = arith.constant 0 : index
    %c0_91 = arith.constant 0 : index
    %c0_92 = arith.constant 0 : index
    %188 = vector.load %arg9[%c0_90, %c0_91, %c0_92] : memref<4x32x32xf32, #tpu.memory_space<vmem>>, vector<1x32x32xf32>
    %189 = vector.shape_cast %188 : vector<1x32x32xf32> to vector<32x32xf32>
    %cst_93 = arith.constant dense<0.000000e+00> : vector<2x32xf32>
    %190 = tpu.matmul %183, %189, %cst_93 {dimension_numbers = #tpu.dot_dimension_numbers<[1], [0], [0], [1], [0, 0, 1, 1], [], []>} : vector<2x32xf32>, vector<32x32xf32>, vector<2x32xf32> -> vector<2x32xf32>
    %191 = arith.addf %187, %190 : vector<2x32xf32>
    %c1_94 = arith.constant 1 : index
    %192 = arith.index_cast %c0_i32 : i32 to index
    %c0_95 = arith.constant 0 : index
    %c0_96 = arith.constant 0 : index
    %193 = vector.load %arg18[%c1_94, %192, %c0_95, %c0_96] : memref<4x4x2x32xf32, #tpu.memory_space<vmem>>, vector<1x1x2x32xf32>
    %194 = vector.shape_cast %193 : vector<1x1x2x32xf32> to vector<2x32xf32>
    %c1_97 = arith.constant 1 : index
    %c0_98 = arith.constant 0 : index
    %c0_99 = arith.constant 0 : index
    %195 = vector.load %arg9[%c1_97, %c0_98, %c0_99] : memref<4x32x32xf32, #tpu.memory_space<vmem>>, vector<1x32x32xf32>
    %196 = vector.shape_cast %195 : vector<1x32x32xf32> to vector<32x32xf32>
    %cst_100 = arith.constant dense<0.000000e+00> : vector<2x32xf32>
    %197 = tpu.matmul %183, %196, %cst_100 {dimension_numbers = #tpu.dot_dimension_numbers<[1], [0], [0], [1], [0, 0, 1, 1], [], []>} : vector<2x32xf32>, vector<32x32xf32>, vector<2x32xf32> -> vector<2x32xf32>
    %198 = arith.addf %194, %197 : vector<2x32xf32>
    %c2_101 = arith.constant 2 : index
    %199 = arith.index_cast %c0_i32 : i32 to index
    %c0_102 = arith.constant 0 : index
    %c0_103 = arith.constant 0 : index
    %200 = vector.load %arg18[%c2_101, %199, %c0_102, %c0_103] : memref<4x4x2x32xf32, #tpu.memory_space<vmem>>, vector<1x1x2x32xf32>
    %201 = vector.shape_cast %200 : vector<1x1x2x32xf32> to vector<2x32xf32>
    %c2_104 = arith.constant 2 : index
    %c0_105 = arith.constant 0 : index
    %c0_106 = arith.constant 0 : index
    %202 = vector.load %arg9[%c2_104, %c0_105, %c0_106] : memref<4x32x32xf32, #tpu.memory_space<vmem>>, vector<1x32x32xf32>
    %203 = vector.shape_cast %202 : vector<1x32x32xf32> to vector<32x32xf32>
    %cst_107 = arith.constant dense<0.000000e+00> : vector<2x32xf32>
    %204 = tpu.matmul %183, %203, %cst_107 {dimension_numbers = #tpu.dot_dimension_numbers<[1], [0], [0], [1], [0, 0, 1, 1], [], []>} : vector<2x32xf32>, vector<32x32xf32>, vector<2x32xf32> -> vector<2x32xf32>
    %205 = arith.addf %201, %204 : vector<2x32xf32>
    %c3_108 = arith.constant 3 : index
    %206 = arith.index_cast %c0_i32 : i32 to index
    %c0_109 = arith.constant 0 : index
    %c0_110 = arith.constant 0 : index
    %207 = vector.load %arg18[%c3_108, %206, %c0_109, %c0_110] : memref<4x4x2x32xf32, #tpu.memory_space<vmem>>, vector<1x1x2x32xf32>
    %208 = vector.shape_cast %207 : vector<1x1x2x32xf32> to vector<2x32xf32>
    %c3_111 = arith.constant 3 : index
    %c0_112 = arith.constant 0 : index
    %c0_113 = arith.constant 0 : index
    %209 = vector.load %arg9[%c3_111, %c0_112, %c0_113] : memref<4x32x32xf32, #tpu.memory_space<vmem>>, vector<1x32x32xf32>
    %210 = vector.shape_cast %209 : vector<1x32x32xf32> to vector<32x32xf32>
    %cst_114 = arith.constant dense<0.000000e+00> : vector<2x32xf32>
    %211 = tpu.matmul %183, %210, %cst_114 {dimension_numbers = #tpu.dot_dimension_numbers<[1], [0], [0], [1], [0, 0, 1, 1], [], []>} : vector<2x32xf32>, vector<32x32xf32>, vector<2x32xf32> -> vector<2x32xf32>
    %212 = arith.addf %208, %211 : vector<2x32xf32>
    %c0_115 = arith.constant 0 : index
    %213 = arith.index_cast %184 : i32 to index
    %c0_116 = arith.constant 0 : index
    %c0_117 = arith.constant 0 : index
    %214 = vector.load %arg19[%c0_115, %213, %c0_116, %c0_117] : memref<4x4x2x32xf32, #tpu.memory_space<vmem>>, vector<1x1x2x32xf32>
    %215 = vector.shape_cast %214 : vector<1x1x2x32xf32> to vector<2x32xf32>
    %c0_118 = arith.constant 0 : index
    %c0_119 = arith.constant 0 : index
    %c0_120 = arith.constant 0 : index
    %216 = vector.load %arg10[%c0_118, %c0_119, %c0_120] : memref<4x32x32xf32, #tpu.memory_space<vmem>>, vector<1x32x32xf32>
    %217 = vector.shape_cast %216 : vector<1x32x32xf32> to vector<32x32xf32>
    %cst_121 = arith.constant dense<0.000000e+00> : vector<2x32xf32>
    %218 = tpu.matmul %183, %217, %cst_121 {dimension_numbers = #tpu.dot_dimension_numbers<[1], [0], [0], [1], [0, 0, 1, 1], [], []>} : vector<2x32xf32>, vector<32x32xf32>, vector<2x32xf32> -> vector<2x32xf32>
    %219 = arith.addf %215, %218 : vector<2x32xf32>
    %c1_122 = arith.constant 1 : index
    %220 = arith.index_cast %184 : i32 to index
    %c0_123 = arith.constant 0 : index
    %c0_124 = arith.constant 0 : index
    %221 = vector.load %arg19[%c1_122, %220, %c0_123, %c0_124] : memref<4x4x2x32xf32, #tpu.memory_space<vmem>>, vector<1x1x2x32xf32>
    %222 = vector.shape_cast %221 : vector<1x1x2x32xf32> to vector<2x32xf32>
    %c1_125 = arith.constant 1 : index
    %c0_126 = arith.constant 0 : index
    %c0_127 = arith.constant 0 : index
    %223 = vector.load %arg10[%c1_125, %c0_126, %c0_127] : memref<4x32x32xf32, #tpu.memory_space<vmem>>, vector<1x32x32xf32>
    %224 = vector.shape_cast %223 : vector<1x32x32xf32> to vector<32x32xf32>
    %cst_128 = arith.constant dense<0.000000e+00> : vector<2x32xf32>
    %225 = tpu.matmul %183, %224, %cst_128 {dimension_numbers = #tpu.dot_dimension_numbers<[1], [0], [0], [1], [0, 0, 1, 1], [], []>} : vector<2x32xf32>, vector<32x32xf32>, vector<2x32xf32> -> vector<2x32xf32>
    %226 = arith.addf %222, %225 : vector<2x32xf32>
    %c2_129 = arith.constant 2 : index
    %227 = arith.index_cast %184 : i32 to index
    %c0_130 = arith.constant 0 : index
    %c0_131 = arith.constant 0 : index
    %228 = vector.load %arg19[%c2_129, %227, %c0_130, %c0_131] : memref<4x4x2x32xf32, #tpu.memory_space<vmem>>, vector<1x1x2x32xf32>
    %229 = vector.shape_cast %228 : vector<1x1x2x32xf32> to vector<2x32xf32>
    %c2_132 = arith.constant 2 : index
    %c0_133 = arith.constant 0 : index
    %c0_134 = arith.constant 0 : index
    %230 = vector.load %arg10[%c2_132, %c0_133, %c0_134] : memref<4x32x32xf32, #tpu.memory_space<vmem>>, vector<1x32x32xf32>
    %231 = vector.shape_cast %230 : vector<1x32x32xf32> to vector<32x32xf32>
    %cst_135 = arith.constant dense<0.000000e+00> : vector<2x32xf32>
    %232 = tpu.matmul %183, %231, %cst_135 {dimension_numbers = #tpu.dot_dimension_numbers<[1], [0], [0], [1], [0, 0, 1, 1], [], []>} : vector<2x32xf32>, vector<32x32xf32>, vector<2x32xf32> -> vector<2x32xf32>
    %233 = arith.addf %229, %232 : vector<2x32xf32>
    %c3_136 = arith.constant 3 : index
    %234 = arith.index_cast %184 : i32 to index
    %c0_137 = arith.constant 0 : index
    %c0_138 = arith.constant 0 : index
    %235 = vector.load %arg19[%c3_136, %234, %c0_137, %c0_138] : memref<4x4x2x32xf32, #tpu.memory_space<vmem>>, vector<1x1x2x32xf32>
    %236 = vector.shape_cast %235 : vector<1x1x2x32xf32> to vector<2x32xf32>
    %c3_139 = arith.constant 3 : index
    %c0_140 = arith.constant 0 : index
    %c0_141 = arith.constant 0 : index
    %237 = vector.load %arg10[%c3_139, %c0_140, %c0_141] : memref<4x32x32xf32, #tpu.memory_space<vmem>>, vector<1x32x32xf32>
    %238 = vector.shape_cast %237 : vector<1x32x32xf32> to vector<32x32xf32>
    %cst_142 = arith.constant dense<0.000000e+00> : vector<2x32xf32>
    %239 = tpu.matmul %183, %238, %cst_142 {dimension_numbers = #tpu.dot_dimension_numbers<[1], [0], [0], [1], [0, 0, 1, 1], [], []>} : vector<2x32xf32>, vector<32x32xf32>, vector<2x32xf32> -> vector<2x32xf32>
    %240 = arith.addf %236, %239 : vector<2x32xf32>
    %241 = tpu.concatenate %191, %198, %212, %219, %226, %240 in 0 : vector<2x32xf32>, vector<2x32xf32>, vector<2x32xf32>, vector<2x32xf32>, vector<2x32xf32>, vector<2x32xf32> -> vector<12x32xf32>
    %242 = arith.negf %241 : vector<12x32xf32>
    %243 = math.exp %242 : vector<12x32xf32>
    %cst_143 = arith.constant 1.000000e+00 : f32
    %244 = vector.broadcast %cst_143 : f32 to vector<12x32xf32>
    %245 = arith.addf %244, %243 : vector<12x32xf32>
    %246 = arith.divf %244, %245 : vector<12x32xf32>
    %247 = tpu.concatenate %205, %233 in 0 : vector<2x32xf32>, vector<2x32xf32> -> vector<4x32xf32>
    %248 = math.tanh %247 : vector<4x32xf32>
    %249 = vector.extract_strided_slice %246 {offsets = [0, 0], sizes = [2, 32], strides = [1, 1]} : vector<12x32xf32> to vector<2x32xf32>
    %250 = vector.extract_strided_slice %246 {offsets = [2, 0], sizes = [2, 32], strides = [1, 1]} : vector<12x32xf32> to vector<2x32xf32>
    %251 = vector.extract_strided_slice %246 {offsets = [4, 0], sizes = [2, 32], strides = [1, 1]} : vector<12x32xf32> to vector<2x32xf32>
    %252 = vector.extract_strided_slice %246 {offsets = [6, 0], sizes = [2, 32], strides = [1, 1]} : vector<12x32xf32> to vector<2x32xf32>
    %253 = vector.extract_strided_slice %246 {offsets = [8, 0], sizes = [2, 32], strides = [1, 1]} : vector<12x32xf32> to vector<2x32xf32>
    %254 = vector.extract_strided_slice %246 {offsets = [10, 0], sizes = [2, 32], strides = [1, 1]} : vector<12x32xf32> to vector<2x32xf32>
    %255 = arith.mulf %250, %183 : vector<2x32xf32>
    %256 = vector.extract_strided_slice %248 {offsets = [0, 0], sizes = [2, 32], strides = [1, 1]} : vector<4x32xf32> to vector<2x32xf32>
    %257 = arith.mulf %249, %256 : vector<2x32xf32>
    %258 = arith.addf %255, %257 : vector<2x32xf32>
    %259 = arith.mulf %253, %183 : vector<2x32xf32>
    %260 = vector.extract_strided_slice %248 {offsets = [2, 0], sizes = [2, 32], strides = [1, 1]} : vector<4x32xf32> to vector<2x32xf32>
    %261 = arith.mulf %252, %260 : vector<2x32xf32>
    %262 = arith.addf %259, %261 : vector<2x32xf32>
    %263 = tpu.concatenate %258, %262 in 0 : vector<2x32xf32>, vector<2x32xf32> -> vector<4x32xf32>
    %264 = math.tanh %263 : vector<4x32xf32>
    %265 = vector.extract_strided_slice %264 {offsets = [0, 0], sizes = [2, 32], strides = [1, 1]} : vector<4x32xf32> to vector<2x32xf32>
    %266 = arith.mulf %251, %265 : vector<2x32xf32>
    %267 = vector.extract_strided_slice %264 {offsets = [2, 0], sizes = [2, 32], strides = [1, 1]} : vector<4x32xf32> to vector<2x32xf32>
    %268 = arith.mulf %254, %267 : vector<2x32xf32>
    %269 = arith.index_cast %c0_i32 : i32 to index
    %c0_144 = arith.constant 0 : index
    %c0_145 = arith.constant 0 : index
    %270 = vector.load %arg20[%269, %c0_144, %c0_145] : memref<4x2x32xf32, #tpu.memory_space<vmem>>, vector<1x2x32xf32>
    %271 = vector.shape_cast %270 : vector<1x2x32xf32> to vector<2x32xf32>
    %272 = vector.shape_cast %266 : vector<2x32xf32> to vector<1x2x32xf32>
    tpu.vector_store %arg20[%269, %c0_144, %c0_145], %272 {strides = array<i32>} : memref<4x2x32xf32, #tpu.memory_space<vmem>>, vector<1x2x32xf32>,
    %273 = arith.index_cast %184 : i32 to index
    %c0_146 = arith.constant 0 : index
    %c0_147 = arith.constant 0 : index
    %274 = vector.load %arg21[%273, %c0_146, %c0_147] : memref<4x2x32xf32, #tpu.memory_space<vmem>>, vector<1x2x32xf32>
    %275 = vector.shape_cast %274 : vector<1x2x32xf32> to vector<2x32xf32>
    %276 = vector.shape_cast %268 : vector<2x32xf32> to vector<1x2x32xf32>
    tpu.vector_store %arg21[%273, %c0_146, %c0_147], %276 {strides = array<i32>} : memref<4x2x32xf32, #tpu.memory_space<vmem>>, vector<1x2x32xf32>,
    %c1_i32 = arith.constant 1 : i32
    %c3_i32_148 = arith.constant 3 : i32
    %277 = arith.subi %c3_i32_148, %c1_i32 : i32
    %c0_149 = arith.constant 0 : index
    %278 = arith.index_cast %c1_i32 : i32 to index
    %c0_150 = arith.constant 0 : index
    %c0_151 = arith.constant 0 : index
    %279 = vector.load %arg18[%c0_149, %278, %c0_150, %c0_151] : memref<4x4x2x32xf32, #tpu.memory_space<vmem>>, vector<1x1x2x32xf32>
    %280 = vector.shape_cast %279 : vector<1x1x2x32xf32> to vector<2x32xf32>
    %c0_152 = arith.constant 0 : index
    %c0_153 = arith.constant 0 : index
    %c0_154 = arith.constant 0 : index
    %281 = vector.load %arg9[%c0_152, %c0_153, %c0_154] : memref<4x32x32xf32, #tpu.memory_space<vmem>>, vector<1x32x32xf32>
    %282 = vector.shape_cast %281 : vector<1x32x32xf32> to vector<32x32xf32>
    %cst_155 = arith.constant dense<0.000000e+00> : vector<2x32xf32>
    %283 = tpu.matmul %266, %282, %cst_155 {dimension_numbers = #tpu.dot_dimension_numbers<[1], [0], [0], [1], [0, 0, 1, 1], [], []>} : vector<2x32xf32>, vector<32x32xf32>, vector<2x32xf32> -> vector<2x32xf32>
    %284 = arith.addf %280, %283 : vector<2x32xf32>
    %c1_156 = arith.constant 1 : index
    %285 = arith.index_cast %c1_i32 : i32 to index
    %c0_157 = arith.constant 0 : index
    %c0_158 = arith.constant 0 : index
    %286 = vector.load %arg18[%c1_156, %285, %c0_157, %c0_158] : memref<4x4x2x32xf32, #tpu.memory_space<vmem>>, vector<1x1x2x32xf32>
    %287 = vector.shape_cast %286 : vector<1x1x2x32xf32> to vector<2x32xf32>
    %c1_159 = arith.constant 1 : index
    %c0_160 = arith.constant 0 : index
    %c0_161 = arith.constant 0 : index
    %288 = vector.load %arg9[%c1_159, %c0_160, %c0_161] : memref<4x32x32xf32, #tpu.memory_space<vmem>>, vector<1x32x32xf32>
    %289 = vector.shape_cast %288 : vector<1x32x32xf32> to vector<32x32xf32>
    %cst_162 = arith.constant dense<0.000000e+00> : vector<2x32xf32>
    %290 = tpu.matmul %266, %289, %cst_162 {dimension_numbers = #tpu.dot_dimension_numbers<[1], [0], [0], [1], [0, 0, 1, 1], [], []>} : vector<2x32xf32>, vector<32x32xf32>, vector<2x32xf32> -> vector<2x32xf32>
    %291 = arith.addf %287, %290 : vector<2x32xf32>
    %c2_163 = arith.constant 2 : index
    %292 = arith.index_cast %c1_i32 : i32 to index
    %c0_164 = arith.constant 0 : index
    %c0_165 = arith.constant 0 : index
    %293 = vector.load %arg18[%c2_163, %292, %c0_164, %c0_165] : memref<4x4x2x32xf32, #tpu.memory_space<vmem>>, vector<1x1x2x32xf32>
    %294 = vector.shape_cast %293 : vector<1x1x2x32xf32> to vector<2x32xf32>
    %c2_166 = arith.constant 2 : index
    %c0_167 = arith.constant 0 : index
    %c0_168 = arith.constant 0 : index
    %295 = vector.load %arg9[%c2_166, %c0_167, %c0_168] : memref<4x32x32xf32, #tpu.memory_space<vmem>>, vector<1x32x32xf32>
    %296 = vector.shape_cast %295 : vector<1x32x32xf32> to vector<32x32xf32>
    %cst_169 = arith.constant dense<0.000000e+00> : vector<2x32xf32>
    %297 = tpu.matmul %266, %296, %cst_169 {dimension_numbers = #tpu.dot_dimension_numbers<[1], [0], [0], [1], [0, 0, 1, 1], [], []>} : vector<2x32xf32>, vector<32x32xf32>, vector<2x32xf32> -> vector<2x32xf32>
    %298 = arith.addf %294, %297 : vector<2x32xf32>
    %c3_170 = arith.constant 3 : index
    %299 = arith.index_cast %c1_i32 : i32 to index
    %c0_171 = arith.constant 0 : index
    %c0_172 = arith.constant 0 : index
    %300 = vector.load %arg18[%c3_170, %299, %c0_171, %c0_172] : memref<4x4x2x32xf32, #tpu.memory_space<vmem>>, vector<1x1x2x32xf32>
    %301 = vector.shape_cast %300 : vector<1x1x2x32xf32> to vector<2x32xf32>
    %c3_173 = arith.constant 3 : index
    %c0_174 = arith.constant 0 : index
    %c0_175 = arith.constant 0 : index
    %302 = vector.load %arg9[%c3_173, %c0_174, %c0_175] : memref<4x32x32xf32, #tpu.memory_space<vmem>>, vector<1x32x32xf32>
    %303 = vector.shape_cast %302 : vector<1x32x32xf32> to vector<32x32xf32>
    %cst_176 = arith.constant dense<0.000000e+00> : vector<2x32xf32>
    %304 = tpu.matmul %266, %303, %cst_176 {dimension_numbers = #tpu.dot_dimension_numbers<[1], [0], [0], [1], [0, 0, 1, 1], [], []>} : vector<2x32xf32>, vector<32x32xf32>, vector<2x32xf32> -> vector<2x32xf32>
    %305 = arith.addf %301, %304 : vector<2x32xf32>
    %c0_177 = arith.constant 0 : index
    %306 = arith.index_cast %277 : i32 to index
    %c0_178 = arith.constant 0 : index
    %c0_179 = arith.constant 0 : index
    %307 = vector.load %arg19[%c0_177, %306, %c0_178, %c0_179] : memref<4x4x2x32xf32, #tpu.memory_space<vmem>>, vector<1x1x2x32xf32>
    %308 = vector.shape_cast %307 : vector<1x1x2x32xf32> to vector<2x32xf32>
    %c0_180 = arith.constant 0 : index
    %c0_181 = arith.constant 0 : index
    %c0_182 = arith.constant 0 : index
    %309 = vector.load %arg10[%c0_180, %c0_181, %c0_182] : memref<4x32x32xf32, #tpu.memory_space<vmem>>, vector<1x32x32xf32>
    %310 = vector.shape_cast %309 : vector<1x32x32xf32> to vector<32x32xf32>
    %cst_183 = arith.constant dense<0.000000e+00> : vector<2x32xf32>
    %311 = tpu.matmul %268, %310, %cst_183 {dimension_numbers = #tpu.dot_dimension_numbers<[1], [0], [0], [1], [0, 0, 1, 1], [], []>} : vector<2x32xf32>, vector<32x32xf32>, vector<2x32xf32> -> vector<2x32xf32>
    %312 = arith.addf %308, %311 : vector<2x32xf32>
    %c1_184 = arith.constant 1 : index
    %313 = arith.index_cast %277 : i32 to index
    %c0_185 = arith.constant 0 : index
    %c0_186 = arith.constant 0 : index
    %314 = vector.load %arg19[%c1_184, %313, %c0_185, %c0_186] : memref<4x4x2x32xf32, #tpu.memory_space<vmem>>, vector<1x1x2x32xf32>
    %315 = vector.shape_cast %314 : vector<1x1x2x32xf32> to vector<2x32xf32>
    %c1_187 = arith.constant 1 : index
    %c0_188 = arith.constant 0 : index
    %c0_189 = arith.constant 0 : index
    %316 = vector.load %arg10[%c1_187, %c0_188, %c0_189] : memref<4x32x32xf32, #tpu.memory_space<vmem>>, vector<1x32x32xf32>
    %317 = vector.shape_cast %316 : vector<1x32x32xf32> to vector<32x32xf32>
    %cst_190 = arith.constant dense<0.000000e+00> : vector<2x32xf32>
    %318 = tpu.matmul %268, %317, %cst_190 {dimension_numbers = #tpu.dot_dimension_numbers<[1], [0], [0], [1], [0, 0, 1, 1], [], []>} : vector<2x32xf32>, vector<32x32xf32>, vector<2x32xf32> -> vector<2x32xf32>
    %319 = arith.addf %315, %318 : vector<2x32xf32>
    %c2_191 = arith.constant 2 : index
    %320 = arith.index_cast %277 : i32 to index
    %c0_192 = arith.constant 0 : index
    %c0_193 = arith.constant 0 : index
    %321 = vector.load %arg19[%c2_191, %320, %c0_192, %c0_193] : memref<4x4x2x32xf32, #tpu.memory_space<vmem>>, vector<1x1x2x32xf32>
    %322 = vector.shape_cast %321 : vector<1x1x2x32xf32> to vector<2x32xf32>
    %c2_194 = arith.constant 2 : index
    %c0_195 = arith.constant 0 : index
    %c0_196 = arith.constant 0 : index
    %323 = vector.load %arg10[%c2_194, %c0_195, %c0_196] : memref<4x32x32xf32, #tpu.memory_space<vmem>>, vector<1x32x32xf32>
    %324 = vector.shape_cast %323 : vector<1x32x32xf32> to vector<32x32xf32>
    %cst_197 = arith.constant dense<0.000000e+00> : vector<2x32xf32>
    %325 = tpu.matmul %268, %324, %cst_197 {dimension_numbers = #tpu.dot_dimension_numbers<[1], [0], [0], [1], [0, 0, 1, 1], [], []>} : vector<2x32xf32>, vector<32x32xf32>, vector<2x32xf32> -> vector<2x32xf32>
    %326 = arith.addf %322, %325 : vector<2x32xf32>
    %c3_198 = arith.constant 3 : index
    %327 = arith.index_cast %277 : i32 to index
    %c0_199 = arith.constant 0 : index
    %c0_200 = arith.constant 0 : index
    %328 = vector.load %arg19[%c3_198, %327, %c0_199, %c0_200] : memref<4x4x2x32xf32, #tpu.memory_space<vmem>>, vector<1x1x2x32xf32>
    %329 = vector.shape_cast %328 : vector<1x1x2x32xf32> to vector<2x32xf32>
    %c3_201 = arith.constant 3 : index
    %c0_202 = arith.constant 0 : index
    %c0_203 = arith.constant 0 : index
    %330 = vector.load %arg10[%c3_201, %c0_202, %c0_203] : memref<4x32x32xf32, #tpu.memory_space<vmem>>, vector<1x32x32xf32>
    %331 = vector.shape_cast %330 : vector<1x32x32xf32> to vector<32x32xf32>
    %cst_204 = arith.constant dense<0.000000e+00> : vector<2x32xf32>
    %332 = tpu.matmul %268, %331, %cst_204 {dimension_numbers = #tpu.dot_dimension_numbers<[1], [0], [0], [1], [0, 0, 1, 1], [], []>} : vector<2x32xf32>, vector<32x32xf32>, vector<2x32xf32> -> vector<2x32xf32>
    %333 = arith.addf %329, %332 : vector<2x32xf32>
    %334 = tpu.concatenate %284, %291, %305, %312, %319, %333 in 0 : vector<2x32xf32>, vector<2x32xf32>, vector<2x32xf32>, vector<2x32xf32>, vector<2x32xf32>, vector<2x32xf32> -> vector<12x32xf32>
    %335 = arith.negf %334 : vector<12x32xf32>
    %336 = math.exp %335 : vector<12x32xf32>
    %cst_205 = arith.constant 1.000000e+00 : f32
    %337 = vector.broadcast %cst_205 : f32 to vector<12x32xf32>
    %338 = arith.addf %337, %336 : vector<12x32xf32>
    %339 = arith.divf %337, %338 : vector<12x32xf32>
    %340 = tpu.concatenate %298, %326 in 0 : vector<2x32xf32>, vector<2x32xf32> -> vector<4x32xf32>
    %341 = math.tanh %340 : vector<4x32xf32>
    %342 = vector.extract_strided_slice %339 {offsets = [0, 0], sizes = [2, 32], strides = [1, 1]} : vector<12x32xf32> to vector<2x32xf32>
    %343 = vector.extract_strided_slice %339 {offsets = [2, 0], sizes = [2, 32], strides = [1, 1]} : vector<12x32xf32> to vector<2x32xf32>
    %344 = vector.extract_strided_slice %339 {offsets = [4, 0], sizes = [2, 32], strides = [1, 1]} : vector<12x32xf32> to vector<2x32xf32>
    %345 = vector.extract_strided_slice %339 {offsets = [6, 0], sizes = [2, 32], strides = [1, 1]} : vector<12x32xf32> to vector<2x32xf32>
    %346 = vector.extract_strided_slice %339 {offsets = [8, 0], sizes = [2, 32], strides = [1, 1]} : vector<12x32xf32> to vector<2x32xf32>
    %347 = vector.extract_strided_slice %339 {offsets = [10, 0], sizes = [2, 32], strides = [1, 1]} : vector<12x32xf32> to vector<2x32xf32>
    %348 = arith.mulf %343, %258 : vector<2x32xf32>
    %349 = vector.extract_strided_slice %341 {offsets = [0, 0], sizes = [2, 32], strides = [1, 1]} : vector<4x32xf32> to vector<2x32xf32>
    %350 = arith.mulf %342, %349 : vector<2x32xf32>
    %351 = arith.addf %348, %350 : vector<2x32xf32>
    %352 = arith.mulf %346, %262 : vector<2x32xf32>
    %353 = vector.extract_strided_slice %341 {offsets = [2, 0], sizes = [2, 32], strides = [1, 1]} : vector<4x32xf32> to vector<2x32xf32>
    %354 = arith.mulf %345, %353 : vector<2x32xf32>
    %355 = arith.addf %352, %354 : vector<2x32xf32>
    %356 = tpu.concatenate %351, %355 in 0 : vector<2x32xf32>, vector<2x32xf32> -> vector<4x32xf32>
    %357 = math.tanh %356 : vector<4x32xf32>
    %358 = vector.extract_strided_slice %357 {offsets = [0, 0], sizes = [2, 32], strides = [1, 1]} : vector<4x32xf32> to vector<2x32xf32>
    %359 = arith.mulf %344, %358 : vector<2x32xf32>
    %360 = vector.extract_strided_slice %357 {offsets = [2, 0], sizes = [2, 32], strides = [1, 1]} : vector<4x32xf32> to vector<2x32xf32>
    %361 = arith.mulf %347, %360 : vector<2x32xf32>
    %362 = arith.index_cast %c1_i32 : i32 to index
    %c0_206 = arith.constant 0 : index
    %c0_207 = arith.constant 0 : index
    %363 = vector.load %arg20[%362, %c0_206, %c0_207] : memref<4x2x32xf32, #tpu.memory_space<vmem>>, vector<1x2x32xf32>
    %364 = vector.shape_cast %363 : vector<1x2x32xf32> to vector<2x32xf32>
    %365 = vector.shape_cast %359 : vector<2x32xf32> to vector<1x2x32xf32>
    tpu.vector_store %arg20[%362, %c0_206, %c0_207], %365 {strides = array<i32>} : memref<4x2x32xf32, #tpu.memory_space<vmem>>, vector<1x2x32xf32>,
    %366 = arith.index_cast %277 : i32 to index
    %c0_208 = arith.constant 0 : index
    %c0_209 = arith.constant 0 : index
    %367 = vector.load %arg21[%366, %c0_208, %c0_209] : memref<4x2x32xf32, #tpu.memory_space<vmem>>, vector<1x2x32xf32>
    %368 = vector.shape_cast %367 : vector<1x2x32xf32> to vector<2x32xf32>
    %369 = vector.shape_cast %361 : vector<2x32xf32> to vector<1x2x32xf32>
    tpu.vector_store %arg21[%366, %c0_208, %c0_209], %369 {strides = array<i32>} : memref<4x2x32xf32, #tpu.memory_space<vmem>>, vector<1x2x32xf32>,
    %c2_i32 = arith.constant 2 : i32
    %c3_i32_210 = arith.constant 3 : i32
    %370 = arith.subi %c3_i32_210, %c2_i32 : i32
    %c0_211 = arith.constant 0 : index
    %371 = arith.index_cast %c2_i32 : i32 to index
    %c0_212 = arith.constant 0 : index
    %c0_213 = arith.constant 0 : index
    %372 = vector.load %arg18[%c0_211, %371, %c0_212, %c0_213] : memref<4x4x2x32xf32, #tpu.memory_space<vmem>>, vector<1x1x2x32xf32>
    %373 = vector.shape_cast %372 : vector<1x1x2x32xf32> to vector<2x32xf32>
    %c0_214 = arith.constant 0 : index
    %c0_215 = arith.constant 0 : index
    %c0_216 = arith.constant 0 : index
    %374 = vector.load %arg9[%c0_214, %c0_215, %c0_216] : memref<4x32x32xf32, #tpu.memory_space<vmem>>, vector<1x32x32xf32>
    %375 = vector.shape_cast %374 : vector<1x32x32xf32> to vector<32x32xf32>
    %cst_217 = arith.constant dense<0.000000e+00> : vector<2x32xf32>
    %376 = tpu.matmul %359, %375, %cst_217 {dimension_numbers = #tpu.dot_dimension_numbers<[1], [0], [0], [1], [0, 0, 1, 1], [], []>} : vector<2x32xf32>, vector<32x32xf32>, vector<2x32xf32> -> vector<2x32xf32>
    %377 = arith.addf %373, %376 : vector<2x32xf32>
    %c1_218 = arith.constant 1 : index
    %378 = arith.index_cast %c2_i32 : i32 to index
    %c0_219 = arith.constant 0 : index
    %c0_220 = arith.constant 0 : index
    %379 = vector.load %arg18[%c1_218, %378, %c0_219, %c0_220] : memref<4x4x2x32xf32, #tpu.memory_space<vmem>>, vector<1x1x2x32xf32>
    %380 = vector.shape_cast %379 : vector<1x1x2x32xf32> to vector<2x32xf32>
    %c1_221 = arith.constant 1 : index
    %c0_222 = arith.constant 0 : index
    %c0_223 = arith.constant 0 : index
    %381 = vector.load %arg9[%c1_221, %c0_222, %c0_223] : memref<4x32x32xf32, #tpu.memory_space<vmem>>, vector<1x32x32xf32>
    %382 = vector.shape_cast %381 : vector<1x32x32xf32> to vector<32x32xf32>
    %cst_224 = arith.constant dense<0.000000e+00> : vector<2x32xf32>
    %383 = tpu.matmul %359, %382, %cst_224 {dimension_numbers = #tpu.dot_dimension_numbers<[1], [0], [0], [1], [0, 0, 1, 1], [], []>} : vector<2x32xf32>, vector<32x32xf32>, vector<2x32xf32> -> vector<2x32xf32>
    %384 = arith.addf %380, %383 : vector<2x32xf32>
    %c2_225 = arith.constant 2 : index
    %385 = arith.index_cast %c2_i32 : i32 to index
    %c0_226 = arith.constant 0 : index
    %c0_227 = arith.constant 0 : index
    %386 = vector.load %arg18[%c2_225, %385, %c0_226, %c0_227] : memref<4x4x2x32xf32, #tpu.memory_space<vmem>>, vector<1x1x2x32xf32>
    %387 = vector.shape_cast %386 : vector<1x1x2x32xf32> to vector<2x32xf32>
    %c2_228 = arith.constant 2 : index
    %c0_229 = arith.constant 0 : index
    %c0_230 = arith.constant 0 : index
    %388 = vector.load %arg9[%c2_228, %c0_229, %c0_230] : memref<4x32x32xf32, #tpu.memory_space<vmem>>, vector<1x32x32xf32>
    %389 = vector.shape_cast %388 : vector<1x32x32xf32> to vector<32x32xf32>
    %cst_231 = arith.constant dense<0.000000e+00> : vector<2x32xf32>
    %390 = tpu.matmul %359, %389, %cst_231 {dimension_numbers = #tpu.dot_dimension_numbers<[1], [0], [0], [1], [0, 0, 1, 1], [], []>} : vector<2x32xf32>, vector<32x32xf32>, vector<2x32xf32> -> vector<2x32xf32>
    %391 = arith.addf %387, %390 : vector<2x32xf32>
    %c3_232 = arith.constant 3 : index
    %392 = arith.index_cast %c2_i32 : i32 to index
    %c0_233 = arith.constant 0 : index
    %c0_234 = arith.constant 0 : index
    %393 = vector.load %arg18[%c3_232, %392, %c0_233, %c0_234] : memref<4x4x2x32xf32, #tpu.memory_space<vmem>>, vector<1x1x2x32xf32>
    %394 = vector.shape_cast %393 : vector<1x1x2x32xf32> to vector<2x32xf32>
    %c3_235 = arith.constant 3 : index
    %c0_236 = arith.constant 0 : index
    %c0_237 = arith.constant 0 : index
    %395 = vector.load %arg9[%c3_235, %c0_236, %c0_237] : memref<4x32x32xf32, #tpu.memory_space<vmem>>, vector<1x32x32xf32>
    %396 = vector.shape_cast %395 : vector<1x32x32xf32> to vector<32x32xf32>
    %cst_238 = arith.constant dense<0.000000e+00> : vector<2x32xf32>
    %397 = tpu.matmul %359, %396, %cst_238 {dimension_numbers = #tpu.dot_dimension_numbers<[1], [0], [0], [1], [0, 0, 1, 1], [], []>} : vector<2x32xf32>, vector<32x32xf32>, vector<2x32xf32> -> vector<2x32xf32>
    %398 = arith.addf %394, %397 : vector<2x32xf32>
    %c0_239 = arith.constant 0 : index
    %399 = arith.index_cast %370 : i32 to index
    %c0_240 = arith.constant 0 : index
    %c0_241 = arith.constant 0 : index
    %400 = vector.load %arg19[%c0_239, %399, %c0_240, %c0_241] : memref<4x4x2x32xf32, #tpu.memory_space<vmem>>, vector<1x1x2x32xf32>
    %401 = vector.shape_cast %400 : vector<1x1x2x32xf32> to vector<2x32xf32>
    %c0_242 = arith.constant 0 : index
    %c0_243 = arith.constant 0 : index
    %c0_244 = arith.constant 0 : index
    %402 = vector.load %arg10[%c0_242, %c0_243, %c0_244] : memref<4x32x32xf32, #tpu.memory_space<vmem>>, vector<1x32x32xf32>
    %403 = vector.shape_cast %402 : vector<1x32x32xf32> to vector<32x32xf32>
    %cst_245 = arith.constant dense<0.000000e+00> : vector<2x32xf32>
    %404 = tpu.matmul %361, %403, %cst_245 {dimension_numbers = #tpu.dot_dimension_numbers<[1], [0], [0], [1], [0, 0, 1, 1], [], []>} : vector<2x32xf32>, vector<32x32xf32>, vector<2x32xf32> -> vector<2x32xf32>
    %405 = arith.addf %401, %404 : vector<2x32xf32>
    %c1_246 = arith.constant 1 : index
    %406 = arith.index_cast %370 : i32 to index
    %c0_247 = arith.constant 0 : index
    %c0_248 = arith.constant 0 : index
    %407 = vector.load %arg19[%c1_246, %406, %c0_247, %c0_248] : memref<4x4x2x32xf32, #tpu.memory_space<vmem>>, vector<1x1x2x32xf32>
    %408 = vector.shape_cast %407 : vector<1x1x2x32xf32> to vector<2x32xf32>
    %c1_249 = arith.constant 1 : index
    %c0_250 = arith.constant 0 : index
    %c0_251 = arith.constant 0 : index
    %409 = vector.load %arg10[%c1_249, %c0_250, %c0_251] : memref<4x32x32xf32, #tpu.memory_space<vmem>>, vector<1x32x32xf32>
    %410 = vector.shape_cast %409 : vector<1x32x32xf32> to vector<32x32xf32>
    %cst_252 = arith.constant dense<0.000000e+00> : vector<2x32xf32>
    %411 = tpu.matmul %361, %410, %cst_252 {dimension_numbers = #tpu.dot_dimension_numbers<[1], [0], [0], [1], [0, 0, 1, 1], [], []>} : vector<2x32xf32>, vector<32x32xf32>, vector<2x32xf32> -> vector<2x32xf32>
    %412 = arith.addf %408, %411 : vector<2x32xf32>
    %c2_253 = arith.constant 2 : index
    %413 = arith.index_cast %370 : i32 to index
    %c0_254 = arith.constant 0 : index
    %c0_255 = arith.constant 0 : index
    %414 = vector.load %arg19[%c2_253, %413, %c0_254, %c0_255] : memref<4x4x2x32xf32, #tpu.memory_space<vmem>>, vector<1x1x2x32xf32>
    %415 = vector.shape_cast %414 : vector<1x1x2x32xf32> to vector<2x32xf32>
    %c2_256 = arith.constant 2 : index
    %c0_257 = arith.constant 0 : index
    %c0_258 = arith.constant 0 : index
    %416 = vector.load %arg10[%c2_256, %c0_257, %c0_258] : memref<4x32x32xf32, #tpu.memory_space<vmem>>, vector<1x32x32xf32>
    %417 = vector.shape_cast %416 : vector<1x32x32xf32> to vector<32x32xf32>
    %cst_259 = arith.constant dense<0.000000e+00> : vector<2x32xf32>
    %418 = tpu.matmul %361, %417, %cst_259 {dimension_numbers = #tpu.dot_dimension_numbers<[1], [0], [0], [1], [0, 0, 1, 1], [], []>} : vector<2x32xf32>, vector<32x32xf32>, vector<2x32xf32> -> vector<2x32xf32>
    %419 = arith.addf %415, %418 : vector<2x32xf32>
    %c3_260 = arith.constant 3 : index
    %420 = arith.index_cast %370 : i32 to index
    %c0_261 = arith.constant 0 : index
    %c0_262 = arith.constant 0 : index
    %421 = vector.load %arg19[%c3_260, %420, %c0_261, %c0_262] : memref<4x4x2x32xf32, #tpu.memory_space<vmem>>, vector<1x1x2x32xf32>
    %422 = vector.shape_cast %421 : vector<1x1x2x32xf32> to vector<2x32xf32>
    %c3_263 = arith.constant 3 : index
    %c0_264 = arith.constant 0 : index
    %c0_265 = arith.constant 0 : index
    %423 = vector.load %arg10[%c3_263, %c0_264, %c0_265] : memref<4x32x32xf32, #tpu.memory_space<vmem>>, vector<1x32x32xf32>
    %424 = vector.shape_cast %423 : vector<1x32x32xf32> to vector<32x32xf32>
    %cst_266 = arith.constant dense<0.000000e+00> : vector<2x32xf32>
    %425 = tpu.matmul %361, %424, %cst_266 {dimension_numbers = #tpu.dot_dimension_numbers<[1], [0], [0], [1], [0, 0, 1, 1], [], []>} : vector<2x32xf32>, vector<32x32xf32>, vector<2x32xf32> -> vector<2x32xf32>
    %426 = arith.addf %422, %425 : vector<2x32xf32>
    %427 = tpu.concatenate %377, %384, %398, %405, %412, %426 in 0 : vector<2x32xf32>, vector<2x32xf32>, vector<2x32xf32>, vector<2x32xf32>, vector<2x32xf32>, vector<2x32xf32> -> vector<12x32xf32>
    %428 = arith.negf %427 : vector<12x32xf32>
    %429 = math.exp %428 : vector<12x32xf32>
    %cst_267 = arith.constant 1.000000e+00 : f32
    %430 = vector.broadcast %cst_267 : f32 to vector<12x32xf32>
    %431 = arith.addf %430, %429 : vector<12x32xf32>
    %432 = arith.divf %430, %431 : vector<12x32xf32>
    %433 = tpu.concatenate %391, %419 in 0 : vector<2x32xf32>, vector<2x32xf32> -> vector<4x32xf32>
    %434 = math.tanh %433 : vector<4x32xf32>
    %435 = vector.extract_strided_slice %432 {offsets = [0, 0], sizes = [2, 32], strides = [1, 1]} : vector<12x32xf32> to vector<2x32xf32>
    %436 = vector.extract_strided_slice %432 {offsets = [2, 0], sizes = [2, 32], strides = [1, 1]} : vector<12x32xf32> to vector<2x32xf32>
    %437 = vector.extract_strided_slice %432 {offsets = [4, 0], sizes = [2, 32], strides = [1, 1]} : vector<12x32xf32> to vector<2x32xf32>
    %438 = vector.extract_strided_slice %432 {offsets = [6, 0], sizes = [2, 32], strides = [1, 1]} : vector<12x32xf32> to vector<2x32xf32>
    %439 = vector.extract_strided_slice %432 {offsets = [8, 0], sizes = [2, 32], strides = [1, 1]} : vector<12x32xf32> to vector<2x32xf32>
    %440 = vector.extract_strided_slice %432 {offsets = [10, 0], sizes = [2, 32], strides = [1, 1]} : vector<12x32xf32> to vector<2x32xf32>
    %441 = arith.mulf %436, %351 : vector<2x32xf32>
    %442 = vector.extract_strided_slice %434 {offsets = [0, 0], sizes = [2, 32], strides = [1, 1]} : vector<4x32xf32> to vector<2x32xf32>
    %443 = arith.mulf %435, %442 : vector<2x32xf32>
    %444 = arith.addf %441, %443 : vector<2x32xf32>
    %445 = arith.mulf %439, %355 : vector<2x32xf32>
    %446 = vector.extract_strided_slice %434 {offsets = [2, 0], sizes = [2, 32], strides = [1, 1]} : vector<4x32xf32> to vector<2x32xf32>
    %447 = arith.mulf %438, %446 : vector<2x32xf32>
    %448 = arith.addf %445, %447 : vector<2x32xf32>
    %449 = tpu.concatenate %444, %448 in 0 : vector<2x32xf32>, vector<2x32xf32> -> vector<4x32xf32>
    %450 = math.tanh %449 : vector<4x32xf32>
    %451 = vector.extract_strided_slice %450 {offsets = [0, 0], sizes = [2, 32], strides = [1, 1]} : vector<4x32xf32> to vector<2x32xf32>
    %452 = arith.mulf %437, %451 : vector<2x32xf32>
    %453 = vector.extract_strided_slice %450 {offsets = [2, 0], sizes = [2, 32], strides = [1, 1]} : vector<4x32xf32> to vector<2x32xf32>
    %454 = arith.mulf %440, %453 : vector<2x32xf32>
    %455 = arith.index_cast %c2_i32 : i32 to index
    %c0_268 = arith.constant 0 : index
    %c0_269 = arith.constant 0 : index
    %456 = vector.load %arg20[%455, %c0_268, %c0_269] : memref<4x2x32xf32, #tpu.memory_space<vmem>>, vector<1x2x32xf32>
    %457 = vector.shape_cast %456 : vector<1x2x32xf32> to vector<2x32xf32>
    %458 = vector.shape_cast %452 : vector<2x32xf32> to vector<1x2x32xf32>
    tpu.vector_store %arg20[%455, %c0_268, %c0_269], %458 {strides = array<i32>} : memref<4x2x32xf32, #tpu.memory_space<vmem>>, vector<1x2x32xf32>,
    %459 = arith.index_cast %370 : i32 to index
    %c0_270 = arith.constant 0 : index
    %c0_271 = arith.constant 0 : index
    %460 = vector.load %arg21[%459, %c0_270, %c0_271] : memref<4x2x32xf32, #tpu.memory_space<vmem>>, vector<1x2x32xf32>
    %461 = vector.shape_cast %460 : vector<1x2x32xf32> to vector<2x32xf32>
    %462 = vector.shape_cast %454 : vector<2x32xf32> to vector<1x2x32xf32>
    tpu.vector_store %arg21[%459, %c0_270, %c0_271], %462 {strides = array<i32>} : memref<4x2x32xf32, #tpu.memory_space<vmem>>, vector<1x2x32xf32>,
    %c3_i32_272 = arith.constant 3 : i32
    %c3_i32_273 = arith.constant 3 : i32
    %463 = arith.subi %c3_i32_273, %c3_i32_272 : i32
    %c0_274 = arith.constant 0 : index
    %464 = arith.index_cast %c3_i32_272 : i32 to index
    %c0_275 = arith.constant 0 : index
    %c0_276 = arith.constant 0 : index
    %465 = vector.load %arg18[%c0_274, %464, %c0_275, %c0_276] : memref<4x4x2x32xf32, #tpu.memory_space<vmem>>, vector<1x1x2x32xf32>
    %466 = vector.shape_cast %465 : vector<1x1x2x32xf32> to vector<2x32xf32>
    %c0_277 = arith.constant 0 : index
    %c0_278 = arith.constant 0 : index
    %c0_279 = arith.constant 0 : index
    %467 = vector.load %arg9[%c0_277, %c0_278, %c0_279] : memref<4x32x32xf32, #tpu.memory_space<vmem>>, vector<1x32x32xf32>
    %468 = vector.shape_cast %467 : vector<1x32x32xf32> to vector<32x32xf32>
    %cst_280 = arith.constant dense<0.000000e+00> : vector<2x32xf32>
    %469 = tpu.matmul %452, %468, %cst_280 {dimension_numbers = #tpu.dot_dimension_numbers<[1], [0], [0], [1], [0, 0, 1, 1], [], []>} : vector<2x32xf32>, vector<32x32xf32>, vector<2x32xf32> -> vector<2x32xf32>
    %470 = arith.addf %466, %469 : vector<2x32xf32>
    %c1_281 = arith.constant 1 : index
    %471 = arith.index_cast %c3_i32_272 : i32 to index
    %c0_282 = arith.constant 0 : index
    %c0_283 = arith.constant 0 : index
    %472 = vector.load %arg18[%c1_281, %471, %c0_282, %c0_283] : memref<4x4x2x32xf32, #tpu.memory_space<vmem>>, vector<1x1x2x32xf32>
    %473 = vector.shape_cast %472 : vector<1x1x2x32xf32> to vector<2x32xf32>
    %c1_284 = arith.constant 1 : index
    %c0_285 = arith.constant 0 : index
    %c0_286 = arith.constant 0 : index
    %474 = vector.load %arg9[%c1_284, %c0_285, %c0_286] : memref<4x32x32xf32, #tpu.memory_space<vmem>>, vector<1x32x32xf32>
    %475 = vector.shape_cast %474 : vector<1x32x32xf32> to vector<32x32xf32>
    %cst_287 = arith.constant dense<0.000000e+00> : vector<2x32xf32>
    %476 = tpu.matmul %452, %475, %cst_287 {dimension_numbers = #tpu.dot_dimension_numbers<[1], [0], [0], [1], [0, 0, 1, 1], [], []>} : vector<2x32xf32>, vector<32x32xf32>, vector<2x32xf32> -> vector<2x32xf32>
    %477 = arith.addf %473, %476 : vector<2x32xf32>
    %c2_288 = arith.constant 2 : index
    %478 = arith.index_cast %c3_i32_272 : i32 to index
    %c0_289 = arith.constant 0 : index
    %c0_290 = arith.constant 0 : index
    %479 = vector.load %arg18[%c2_288, %478, %c0_289, %c0_290] : memref<4x4x2x32xf32, #tpu.memory_space<vmem>>, vector<1x1x2x32xf32>
    %480 = vector.shape_cast %479 : vector<1x1x2x32xf32> to vector<2x32xf32>
    %c2_291 = arith.constant 2 : index
    %c0_292 = arith.constant 0 : index
    %c0_293 = arith.constant 0 : index
    %481 = vector.load %arg9[%c2_291, %c0_292, %c0_293] : memref<4x32x32xf32, #tpu.memory_space<vmem>>, vector<1x32x32xf32>
    %482 = vector.shape_cast %481 : vector<1x32x32xf32> to vector<32x32xf32>
    %cst_294 = arith.constant dense<0.000000e+00> : vector<2x32xf32>
    %483 = tpu.matmul %452, %482, %cst_294 {dimension_numbers = #tpu.dot_dimension_numbers<[1], [0], [0], [1], [0, 0, 1, 1], [], []>} : vector<2x32xf32>, vector<32x32xf32>, vector<2x32xf32> -> vector<2x32xf32>
    %484 = arith.addf %480, %483 : vector<2x32xf32>
    %c3_295 = arith.constant 3 : index
    %485 = arith.index_cast %c3_i32_272 : i32 to index
    %c0_296 = arith.constant 0 : index
    %c0_297 = arith.constant 0 : index
    %486 = vector.load %arg18[%c3_295, %485, %c0_296, %c0_297] : memref<4x4x2x32xf32, #tpu.memory_space<vmem>>, vector<1x1x2x32xf32>
    %487 = vector.shape_cast %486 : vector<1x1x2x32xf32> to vector<2x32xf32>
    %c3_298 = arith.constant 3 : index
    %c0_299 = arith.constant 0 : index
    %c0_300 = arith.constant 0 : index
    %488 = vector.load %arg9[%c3_298, %c0_299, %c0_300] : memref<4x32x32xf32, #tpu.memory_space<vmem>>, vector<1x32x32xf32>
    %489 = vector.shape_cast %488 : vector<1x32x32xf32> to vector<32x32xf32>
    %cst_301 = arith.constant dense<0.000000e+00> : vector<2x32xf32>
    %490 = tpu.matmul %452, %489, %cst_301 {dimension_numbers = #tpu.dot_dimension_numbers<[1], [0], [0], [1], [0, 0, 1, 1], [], []>} : vector<2x32xf32>, vector<32x32xf32>, vector<2x32xf32> -> vector<2x32xf32>
    %491 = arith.addf %487, %490 : vector<2x32xf32>
    %c0_302 = arith.constant 0 : index
    %492 = arith.index_cast %463 : i32 to index
    %c0_303 = arith.constant 0 : index
    %c0_304 = arith.constant 0 : index
    %493 = vector.load %arg19[%c0_302, %492, %c0_303, %c0_304] : memref<4x4x2x32xf32, #tpu.memory_space<vmem>>, vector<1x1x2x32xf32>
    %494 = vector.shape_cast %493 : vector<1x1x2x32xf32> to vector<2x32xf32>
    %c0_305 = arith.constant 0 : index
    %c0_306 = arith.constant 0 : index
    %c0_307 = arith.constant 0 : index
    %495 = vector.load %arg10[%c0_305, %c0_306, %c0_307] : memref<4x32x32xf32, #tpu.memory_space<vmem>>, vector<1x32x32xf32>
    %496 = vector.shape_cast %495 : vector<1x32x32xf32> to vector<32x32xf32>
    %cst_308 = arith.constant dense<0.000000e+00> : vector<2x32xf32>
    %497 = tpu.matmul %454, %496, %cst_308 {dimension_numbers = #tpu.dot_dimension_numbers<[1], [0], [0], [1], [0, 0, 1, 1], [], []>} : vector<2x32xf32>, vector<32x32xf32>, vector<2x32xf32> -> vector<2x32xf32>
    %498 = arith.addf %494, %497 : vector<2x32xf32>
    %c1_309 = arith.constant 1 : index
    %499 = arith.index_cast %463 : i32 to index
    %c0_310 = arith.constant 0 : index
    %c0_311 = arith.constant 0 : index
    %500 = vector.load %arg19[%c1_309, %499, %c0_310, %c0_311] : memref<4x4x2x32xf32, #tpu.memory_space<vmem>>, vector<1x1x2x32xf32>
    %501 = vector.shape_cast %500 : vector<1x1x2x32xf32> to vector<2x32xf32>
    %c1_312 = arith.constant 1 : index
    %c0_313 = arith.constant 0 : index
    %c0_314 = arith.constant 0 : index
    %502 = vector.load %arg10[%c1_312, %c0_313, %c0_314] : memref<4x32x32xf32, #tpu.memory_space<vmem>>, vector<1x32x32xf32>
    %503 = vector.shape_cast %502 : vector<1x32x32xf32> to vector<32x32xf32>
    %cst_315 = arith.constant dense<0.000000e+00> : vector<2x32xf32>
    %504 = tpu.matmul %454, %503, %cst_315 {dimension_numbers = #tpu.dot_dimension_numbers<[1], [0], [0], [1], [0, 0, 1, 1], [], []>} : vector<2x32xf32>, vector<32x32xf32>, vector<2x32xf32> -> vector<2x32xf32>
    %505 = arith.addf %501, %504 : vector<2x32xf32>
    %c2_316 = arith.constant 2 : index
    %506 = arith.index_cast %463 : i32 to index
    %c0_317 = arith.constant 0 : index
    %c0_318 = arith.constant 0 : index
    %507 = vector.load %arg19[%c2_316, %506, %c0_317, %c0_318] : memref<4x4x2x32xf32, #tpu.memory_space<vmem>>, vector<1x1x2x32xf32>
    %508 = vector.shape_cast %507 : vector<1x1x2x32xf32> to vector<2x32xf32>
    %c2_319 = arith.constant 2 : index
    %c0_320 = arith.constant 0 : index
    %c0_321 = arith.constant 0 : index
    %509 = vector.load %arg10[%c2_319, %c0_320, %c0_321] : memref<4x32x32xf32, #tpu.memory_space<vmem>>, vector<1x32x32xf32>
    %510 = vector.shape_cast %509 : vector<1x32x32xf32> to vector<32x32xf32>
    %cst_322 = arith.constant dense<0.000000e+00> : vector<2x32xf32>
    %511 = tpu.matmul %454, %510, %cst_322 {dimension_numbers = #tpu.dot_dimension_numbers<[1], [0], [0], [1], [0, 0, 1, 1], [], []>} : vector<2x32xf32>, vector<32x32xf32>, vector<2x32xf32> -> vector<2x32xf32>
    %512 = arith.addf %508, %511 : vector<2x32xf32>
    %c3_323 = arith.constant 3 : index
    %513 = arith.index_cast %463 : i32 to index
    %c0_324 = arith.constant 0 : index
    %c0_325 = arith.constant 0 : index
    %514 = vector.load %arg19[%c3_323, %513, %c0_324, %c0_325] : memref<4x4x2x32xf32, #tpu.memory_space<vmem>>, vector<1x1x2x32xf32>
    %515 = vector.shape_cast %514 : vector<1x1x2x32xf32> to vector<2x32xf32>
    %c3_326 = arith.constant 3 : index
    %c0_327 = arith.constant 0 : index
    %c0_328 = arith.constant 0 : index
    %516 = vector.load %arg10[%c3_326, %c0_327, %c0_328] : memref<4x32x32xf32, #tpu.memory_space<vmem>>, vector<1x32x32xf32>
    %517 = vector.shape_cast %516 : vector<1x32x32xf32> to vector<32x32xf32>
    %cst_329 = arith.constant dense<0.000000e+00> : vector<2x32xf32>
    %518 = tpu.matmul %454, %517, %cst_329 {dimension_numbers = #tpu.dot_dimension_numbers<[1], [0], [0], [1], [0, 0, 1, 1], [], []>} : vector<2x32xf32>, vector<32x32xf32>, vector<2x32xf32> -> vector<2x32xf32>
    %519 = arith.addf %515, %518 : vector<2x32xf32>
    %520 = tpu.concatenate %470, %477, %491, %498, %505, %519 in 0 : vector<2x32xf32>, vector<2x32xf32>, vector<2x32xf32>, vector<2x32xf32>, vector<2x32xf32>, vector<2x32xf32> -> vector<12x32xf32>
    %521 = arith.negf %520 : vector<12x32xf32>
    %522 = math.exp %521 : vector<12x32xf32>
    %cst_330 = arith.constant 1.000000e+00 : f32
    %523 = vector.broadcast %cst_330 : f32 to vector<12x32xf32>
    %524 = arith.addf %523, %522 : vector<12x32xf32>
    %525 = arith.divf %523, %524 : vector<12x32xf32>
    %526 = tpu.concatenate %484, %512 in 0 : vector<2x32xf32>, vector<2x32xf32> -> vector<4x32xf32>
    %527 = math.tanh %526 : vector<4x32xf32>
    %528 = vector.extract_strided_slice %525 {offsets = [0, 0], sizes = [2, 32], strides = [1, 1]} : vector<12x32xf32> to vector<2x32xf32>
    %529 = vector.extract_strided_slice %525 {offsets = [2, 0], sizes = [2, 32], strides = [1, 1]} : vector<12x32xf32> to vector<2x32xf32>
    %530 = vector.extract_strided_slice %525 {offsets = [4, 0], sizes = [2, 32], strides = [1, 1]} : vector<12x32xf32> to vector<2x32xf32>
    %531 = vector.extract_strided_slice %525 {offsets = [6, 0], sizes = [2, 32], strides = [1, 1]} : vector<12x32xf32> to vector<2x32xf32>
    %532 = vector.extract_strided_slice %525 {offsets = [8, 0], sizes = [2, 32], strides = [1, 1]} : vector<12x32xf32> to vector<2x32xf32>
    %533 = vector.extract_strided_slice %525 {offsets = [10, 0], sizes = [2, 32], strides = [1, 1]} : vector<12x32xf32> to vector<2x32xf32>
    %534 = arith.mulf %529, %444 : vector<2x32xf32>
    %535 = vector.extract_strided_slice %527 {offsets = [0, 0], sizes = [2, 32], strides = [1, 1]} : vector<4x32xf32> to vector<2x32xf32>
    %536 = arith.mulf %528, %535 : vector<2x32xf32>
    %537 = arith.addf %534, %536 : vector<2x32xf32>
    %538 = arith.mulf %532, %448 : vector<2x32xf32>
    %539 = vector.extract_strided_slice %527 {offsets = [2, 0], sizes = [2, 32], strides = [1, 1]} : vector<4x32xf32> to vector<2x32xf32>
    %540 = arith.mulf %531, %539 : vector<2x32xf32>
    %541 = arith.addf %538, %540 : vector<2x32xf32>
    %542 = tpu.concatenate %537, %541 in 0 : vector<2x32xf32>, vector<2x32xf32> -> vector<4x32xf32>
    %543 = math.tanh %542 : vector<4x32xf32>
    %544 = vector.extract_strided_slice %543 {offsets = [0, 0], sizes = [2, 32], strides = [1, 1]} : vector<4x32xf32> to vector<2x32xf32>
    %545 = arith.mulf %530, %544 : vector<2x32xf32>
    %546 = vector.extract_strided_slice %543 {offsets = [2, 0], sizes = [2, 32], strides = [1, 1]} : vector<4x32xf32> to vector<2x32xf32>
    %547 = arith.mulf %533, %546 : vector<2x32xf32>
    %548 = arith.index_cast %c3_i32_272 : i32 to index
    %c0_331 = arith.constant 0 : index
    %c0_332 = arith.constant 0 : index
    %549 = vector.load %arg20[%548, %c0_331, %c0_332] : memref<4x2x32xf32, #tpu.memory_space<vmem>>, vector<1x2x32xf32>
    %550 = vector.shape_cast %549 : vector<1x2x32xf32> to vector<2x32xf32>
    %551 = vector.shape_cast %545 : vector<2x32xf32> to vector<1x2x32xf32>
    tpu.vector_store %arg20[%548, %c0_331, %c0_332], %551 {strides = array<i32>} : memref<4x2x32xf32, #tpu.memory_space<vmem>>, vector<1x2x32xf32>,
    %552 = arith.index_cast %463 : i32 to index
    %c0_333 = arith.constant 0 : index
    %c0_334 = arith.constant 0 : index
    %553 = vector.load %arg21[%552, %c0_333, %c0_334] : memref<4x2x32xf32, #tpu.memory_space<vmem>>, vector<1x2x32xf32>
    %554 = vector.shape_cast %553 : vector<1x2x32xf32> to vector<2x32xf32>
    %555 = vector.shape_cast %547 : vector<2x32xf32> to vector<1x2x32xf32>
    tpu.vector_store %arg21[%552, %c0_333, %c0_334], %555 {strides = array<i32>} : memref<4x2x32xf32, #tpu.memory_space<vmem>>, vector<1x2x32xf32>,
    %c4_i32 = arith.constant 4 : i32
    %c0_335 = arith.constant 0 : index
    %c0_336 = arith.constant 0 : index
    %c0_337 = arith.constant 0 : index
    %556 = vector.load %arg20[%c0_335, %c0_336, %c0_337] : memref<4x2x32xf32, #tpu.memory_space<vmem>>, vector<4x2x32xf32>
    %557 = vector.shape_cast %556 : vector<4x2x32xf32> to vector<2x4x32xf32>
    %c0_338 = arith.constant 0 : index
    %c0_339 = arith.constant 0 : index
    %c0_340 = arith.constant 0 : index
    %558 = vector.load %arg21[%c0_338, %c0_339, %c0_340] : memref<4x2x32xf32, #tpu.memory_space<vmem>>, vector<4x2x32xf32>
    %559 = vector.shape_cast %558 : vector<4x2x32xf32> to vector<2x4x32xf32>
    %560 = vector.extract_strided_slice %557 {offsets = [0, 0, 0], sizes = [2, 1, 32], strides = [1, 1, 1]} : vector<2x4x32xf32> to vector<2x1x32xf32>
    %561 = vector.shape_cast %560 : vector<2x1x32xf32> to vector<2x32xf32>
    %562 = vector.extract_strided_slice %559 {offsets = [0, 0, 0], sizes = [2, 1, 32], strides = [1, 1, 1]} : vector<2x4x32xf32> to vector<2x1x32xf32>
    %563 = vector.shape_cast %562 : vector<2x1x32xf32> to vector<2x32xf32>
    %564 = vector.extract_strided_slice %557 {offsets = [0, 1, 0], sizes = [2, 1, 32], strides = [1, 1, 1]} : vector<2x4x32xf32> to vector<2x1x32xf32>
    %565 = vector.shape_cast %564 : vector<2x1x32xf32> to vector<2x32xf32>
    %566 = vector.extract_strided_slice %559 {offsets = [0, 1, 0], sizes = [2, 1, 32], strides = [1, 1, 1]} : vector<2x4x32xf32> to vector<2x1x32xf32>
    %567 = vector.shape_cast %566 : vector<2x1x32xf32> to vector<2x32xf32>
    %568 = vector.extract_strided_slice %557 {offsets = [0, 2, 0], sizes = [2, 1, 32], strides = [1, 1, 1]} : vector<2x4x32xf32> to vector<2x1x32xf32>
    %569 = vector.shape_cast %568 : vector<2x1x32xf32> to vector<2x32xf32>
    %570 = vector.extract_strided_slice %559 {offsets = [0, 2, 0], sizes = [2, 1, 32], strides = [1, 1, 1]} : vector<2x4x32xf32> to vector<2x1x32xf32>
    %571 = vector.shape_cast %570 : vector<2x1x32xf32> to vector<2x32xf32>
    %572 = vector.extract_strided_slice %557 {offsets = [0, 3, 0], sizes = [2, 1, 32], strides = [1, 1, 1]} : vector<2x4x32xf32> to vector<2x1x32xf32>
    %573 = vector.shape_cast %572 : vector<2x1x32xf32> to vector<2x32xf32>
    %574 = vector.extract_strided_slice %559 {offsets = [0, 3, 0], sizes = [2, 1, 32], strides = [1, 1, 1]} : vector<2x4x32xf32> to vector<2x1x32xf32>
    %575 = vector.shape_cast %574 : vector<2x1x32xf32> to vector<2x32xf32>
    %576 = tpu.concatenate %561, %563, %565, %567, %569, %571, %573, %575 in 1 : vector<2x32xf32>, vector<2x32xf32>, vector<2x32xf32>, vector<2x32xf32>, vector<2x32xf32>, vector<2x32xf32>, vector<2x32xf32>, vector<2x32xf32> -> vector<2x256xf32>
    %c0_341 = arith.constant 0 : index
    %c0_342 = arith.constant 0 : index
    %577 = vector.load %arg11[%c0_341, %c0_342] : memref<256x25xf32, #tpu.memory_space<vmem>>, vector<256x25xf32>
    %cst_343 = arith.constant dense<0.000000e+00> : vector<2x25xf32>
    %578 = tpu.matmul %576, %577, %cst_343 {dimension_numbers = #tpu.dot_dimension_numbers<[1], [0], [0], [1], [0, 0, 1, 1], [], []>} : vector<2x256xf32>, vector<256x25xf32>, vector<2x25xf32> -> vector<2x25xf32>
    %c0_344 = arith.constant 0 : index
    %c0_345 = arith.constant 0 : index
    %579 = vector.load %arg12[%c0_344, %c0_345] : memref<1x25xf32, #tpu.memory_space<vmem>>, vector<1x25xf32>
    %580 = vector.broadcast %579 : vector<1x25xf32> to vector<2x25xf32>
    %581 = arith.addf %578, %580 : vector<2x25xf32>
    %cst_346 = arith.constant 0.000000e+00 : f32
    %582 = vector.broadcast %cst_346 : f32 to vector<2x25xf32>
    %583 = arith.cmpf oge, %581, %582 : vector<2x25xf32>
    %cst_347 = arith.constant 2.500000e-01 : f32
    %584 = vector.broadcast %cst_347 : f32 to vector<2x25xf32>
    %585 = arith.mulf %584, %581 : vector<2x25xf32>
    %586 = arith.select %583, %581, %585 : vector<2x25xi1>, vector<2x25xf32>
    %c0_348 = arith.constant 0 : index
    %c0_349 = arith.constant 0 : index
    %587 = vector.load %arg13[%c0_348, %c0_349] : memref<25x5xf32, #tpu.memory_space<vmem>>, vector<25x5xf32>
    %cst_350 = arith.constant dense<0.000000e+00> : vector<2x5xf32>
    %588 = tpu.matmul %586, %587, %cst_350 {dimension_numbers = #tpu.dot_dimension_numbers<[1], [0], [0], [1], [0, 0, 1, 1], [], []>} : vector<2x25xf32>, vector<25x5xf32>, vector<2x5xf32> -> vector<2x5xf32>
    %c0_351 = arith.constant 0 : index
    %c0_352 = arith.constant 0 : index
    %589 = vector.load %arg14[%c0_351, %c0_352] : memref<1x5xf32, #tpu.memory_space<vmem>>, vector<1x5xf32>
    %590 = vector.broadcast %589 : vector<1x5xf32> to vector<2x5xf32>
    %591 = arith.addf %588, %590 : vector<2x5xf32>
    %cst_353 = arith.constant 0.000000e+00 : f32
    %592 = vector.broadcast %cst_353 : f32 to vector<2x5xf32>
    %593 = arith.cmpf oge, %591, %592 : vector<2x5xf32>
    %cst_354 = arith.constant 2.500000e-01 : f32
    %594 = vector.broadcast %cst_354 : f32 to vector<2x5xf32>
    %595 = arith.mulf %594, %591 : vector<2x5xf32>
    %596 = arith.select %593, %591, %595 : vector<2x5xi1>, vector<2x5xf32>
    %c0_355 = arith.constant 0 : index
    %c0_356 = arith.constant 0 : index
    %597 = vector.load %arg15[%c0_355, %c0_356] : memref<5x3xf32, #tpu.memory_space<vmem>>, vector<5x3xf32>
    %cst_357 = arith.constant dense<0.000000e+00> : vector<2x3xf32>
    %598 = tpu.matmul %596, %597, %cst_357 {dimension_numbers = #tpu.dot_dimension_numbers<[1], [0], [0], [1], [0, 0, 1, 1], [], []>} : vector<2x5xf32>, vector<5x3xf32>, vector<2x3xf32> -> vector<2x3xf32>
    %c0_358 = arith.constant 0 : index
    %c0_359 = arith.constant 0 : index
    %599 = vector.load %arg16[%c0_358, %c0_359] : memref<1x3xf32, #tpu.memory_space<vmem>>, vector<1x3xf32>
    %600 = vector.broadcast %599 : vector<1x3xf32> to vector<2x3xf32>
    %601 = arith.addf %598, %600 : vector<2x3xf32>
    %c0_360 = arith.constant 0 : index
    %c0_361 = arith.constant 0 : index
    %602 = vector.load %arg17[%c0_360, %c0_361] : memref<2x3xf32, #tpu.memory_space<vmem>>, vector<2x3xf32>
    tpu.vector_store %arg17[%c0_360, %c0_361], %601 {strides = array<i32>} : memref<2x3xf32, #tpu.memory_space<vmem>>, vector<2x3xf32>,
    return
  }
}

</mosaic_0001>

<llo_original>
// kernel: esnet_forward.1
$region0: #{esnet_forward.1}
  #allocation0 [shape = 'u32[]', space=smem, size = 0x4, offset = 0x4, fixed_abs, tag = 'smem constant byte address 0x4 - core index']
  #allocation1 [shape = 'u32[144,128]{1,0:T(1,128)}', space=vmem, size = 0x12000, scoped, tag = 'internal scratch']
  #allocation2 [shape = 'f32[4,4,2,32]{3,2,1,0:T(2,128)}', space=vmem, size = 0x4000, scoped, tag = 'scratch operand']
  #allocation3 [shape = 'f32[4,4,2,32]{3,2,1,0:T(2,128)}', space=vmem, size = 0x4000, scoped, tag = 'scratch operand']
  #allocation4 [shape = 'f32[4,2,32]{2,1,0:T(2,128)}', space=vmem, size = 0x1000, scoped, tag = 'scratch operand']
  #allocation5 [shape = 'f32[4,2,32]{2,1,0:T(2,128)}', space=vmem, size = 0x1000, scoped, tag = 'scratch operand']
  %s0 = inlined_call_operand.vmem [shape: f32[2,2,8,8], index: 0, kind: input, shape index: {}]
  %s1 = inlined_call_operand.vmem [shape: f32[8,16], index: 1, kind: input, shape index: {}]
  %s2 = inlined_call_operand.vmem [shape: f32[1,16], index: 2, kind: input, shape index: {}]
  %s3 = inlined_call_operand.vmem [shape: f32[1,16], index: 3, kind: input, shape index: {}]
  %s4 = inlined_call_operand.vmem [shape: f32[10,16,32], index: 4, kind: input, shape index: {}]
  %s5 = inlined_call_operand.vmem [shape: f32[1,32], index: 5, kind: input, shape index: {}]
  %s6 = inlined_call_operand.vmem [shape: f32[1,32], index: 6, kind: input, shape index: {}]
  %s7 = inlined_call_operand.vmem [shape: f32[32,256], index: 7, kind: input, shape index: {}]
  %s8 = inlined_call_operand.vmem [shape: f32[1,256], index: 8, kind: input, shape index: {}]
  %s9 = inlined_call_operand.vmem [shape: f32[4,32,32], index: 9, kind: input, shape index: {}]
  %s10 = inlined_call_operand.vmem [shape: f32[4,32,32], index: 10, kind: input, shape index: {}]
  %s11 = inlined_call_operand.vmem [shape: f32[256,25], index: 11, kind: input, shape index: {}]
  %s12 = inlined_call_operand.vmem [shape: f32[1,25], index: 12, kind: input, shape index: {}]
  %s13 = inlined_call_operand.vmem [shape: f32[25,5], index: 13, kind: input, shape index: {}]
  %s14 = inlined_call_operand.vmem [shape: f32[1,5], index: 14, kind: input, shape index: {}]
  %s15 = inlined_call_operand.vmem [shape: f32[5,3], index: 15, kind: input, shape index: {}]
  %s16 = inlined_call_operand.vmem [shape: f32[1,3], index: 16, kind: input, shape index: {}]
  %s17 = inlined_call_operand.hbm [shape: f32[2,3], index: 17, kind: output, shape index: {}]
  %s18 = sld [smem:[#allocation0]]
  $region78: #{esnet_forward.1} parent=0
    _
  %s20 = ssub.s32 1, %s18
  %s21 = scalar_select 0, %s20, %s18
  $region1: #{esnet_forward.1} parent=0
    #allocation6 [shape = 'u8[1024]{0}', space=vmem, size = 0x400, scoped, tag = 'output window, operand 0, single buffered']
    #allocation7 [shape = 's32[1]{0}', space=sflag, size = 0x4, scoped, tag = 'scoped memory for esnet_forward.1']
    %22 = vsyncpa [#allocation7], 0
    // Predicated region
    $region2: #{esnet_forward.1} parent=1 // pred_check
      _
    $region3: #{esnet_forward.1} parent=1 // pred_check_branch
      %24 = sbr.rel (0) target = $region5
    $region4: #{esnet_forward.1} parent=1 // pred_region
      _
    $region5: #{esnet_forward.1} parent=1 // pred_fallthru
      _
    // Predicated region
    $region6: #{esnet_forward.1} parent=1 // pred_check
      _
    $region7: #{esnet_forward.1} parent=1 // pred_check_branch
      %26 = sbr.rel (0) target = $region9
    $region8: #{esnet_forward.1} parent=1 // pred_region
      _
    $region9: #{esnet_forward.1} parent=1 // pred_fallthru
      _
    // Predicated region
    $region10: #{esnet_forward.1} parent=1 // pred_check
      _
    $region11: #{esnet_forward.1} parent=1 // pred_check_branch
      %28 = sbr.rel (0) target = $region13
    $region12: #{esnet_forward.1} parent=1 // pred_region
      _
    $region13: #{esnet_forward.1} parent=1 // pred_fallthru
      _
    // Predicated region
    $region14: #{esnet_forward.1} parent=1 // pred_check
      _
    $region15: #{esnet_forward.1} parent=1 // pred_check_branch
      %30 = sbr.rel (0) target = $region17
    $region16: #{esnet_forward.1} parent=1 // pred_region
      _
    $region17: #{esnet_forward.1} parent=1 // pred_fallthru
      _
    // Predicated region
    $region18: #{esnet_forward.1} parent=1 // pred_check
      _
    $region19: #{esnet_forward.1} parent=1 // pred_check_branch
      %32 = sbr.rel (0) target = $region21
    $region20: #{esnet_forward.1} parent=1 // pred_region
      _
    $region21: #{esnet_forward.1} parent=1 // pred_fallthru
      _
    // Predicated region
    $region22: #{esnet_forward.1} parent=1 // pred_check
      _
    $region23: #{esnet_forward.1} parent=1 // pred_check_branch
      %34 = sbr.rel (0) target = $region25
    $region24: #{esnet_forward.1} parent=1 // pred_region
      _
    $region25: #{esnet_forward.1} parent=1 // pred_fallthru
      _
    // Predicated region
    $region26: #{esnet_forward.1} parent=1 // pred_check
      _
    $region27: #{esnet_forward.1} parent=1 // pred_check_branch
      %36 = sbr.rel (0) target = $region29
    $region28: #{esnet_forward.1} parent=1 // pred_region
      _
    $region29: #{esnet_forward.1} parent=1 // pred_fallthru
      _
    // Predicated region
    $region30: #{esnet_forward.1} parent=1 // pred_check
      _
    $region31: #{esnet_forward.1} parent=1 // pred_check_branch
      %38 = sbr.rel (0) target = $region33
    $region32: #{esnet_forward.1} parent=1 // pred_region
      _
    $region33: #{esnet_forward.1} parent=1 // pred_fallthru
      _
    // Predicated region
    $region34: #{esnet_forward.1} parent=1 // pred_check
      _
    $region35: #{esnet_forward.1} parent=1 // pred_check_branch
      %40 = sbr.rel (0) target = $region37
    $region36: #{esnet_forward.1} parent=1 // pred_region
      _
    $region37: #{esnet_forward.1} parent=1 // pred_fallthru
      _
    // Predicated region
    $region38: #{esnet_forward.1} parent=1 // pred_check
      _
    $region39: #{esnet_forward.1} parent=1 // pred_check_branch
      %42 = sbr.rel (0) target = $region41
    $region40: #{esnet_forward.1} parent=1 // pred_region
      _
    $region41: #{esnet_forward.1} parent=1 // pred_fallthru
      _
    // Predicated region
    $region42: #{esnet_forward.1} parent=1 // pred_check
      _
    $region43: #{esnet_forward.1} parent=1 // pred_check_branch
      %44 = sbr.rel (0) target = $region45
    $region44: #{esnet_forward.1} parent=1 // pred_region
      _
    $region45: #{esnet_forward.1} parent=1 // pred_fallthru
      _
    // Predicated region
    $region46: #{esnet_forward.1} parent=1 // pred_check
      _
    $region47: #{esnet_forward.1} parent=1 // pred_check_branch
      %46 = sbr.rel (0) target = $region49
    $region48: #{esnet_forward.1} parent=1 // pred_region
      _
    $region49: #{esnet_forward.1} parent=1 // pred_fallthru
      _
    // Predicated region
    $region50: #{esnet_forward.1} parent=1 // pred_check
      _
    $region51: #{esnet_forward.1} parent=1 // pred_check_branch
      %48 = sbr.rel (0) target = $region53
    $region52: #{esnet_forward.1} parent=1 // pred_region
      _
    $region53: #{esnet_forward.1} parent=1 // pred_fallthru
      _
    // Predicated region
    $region54: #{esnet_forward.1} parent=1 // pred_check
      _
    $region55: #{esnet_forward.1} parent=1 // pred_check_branch
      %50 = sbr.rel (0) target = $region57
    $region56: #{esnet_forward.1} parent=1 // pred_region
      _
    $region57: #{esnet_forward.1} parent=1 // pred_fallthru
      _
    // Predicated region
    $region58: #{esnet_forward.1} parent=1 // pred_check
      _
    $region59: #{esnet_forward.1} parent=1 // pred_check_branch
      %52 = sbr.rel (0) target = $region61
    $region60: #{esnet_forward.1} parent=1 // pred_region
      _
    $region61: #{esnet_forward.1} parent=1 // pred_fallthru
      _
    // Predicated region
    $region62: #{esnet_forward.1} parent=1 // pred_check
      _
    $region63: #{esnet_forward.1} parent=1 // pred_check_branch
      %54 = sbr.rel (0) target = $region65
    $region64: #{esnet_forward.1} parent=1 // pred_region
      _
    $region65: #{esnet_forward.1} parent=1 // pred_fallthru
      _
    // Predicated region
    $region66: #{esnet_forward.1} parent=1 // pred_check
      _
    $region67: #{esnet_forward.1} parent=1 // pred_check_branch
      %56 = sbr.rel (0) target = $region69
    $region68: #{esnet_forward.1} parent=1 // pred_region
      _
    $region69: #{esnet_forward.1} parent=1 // pred_fallthru
      _
    %v57 = vld [vmem:[%s0] sm:$0xff]
    %v58 = vld [vmem:[%s0 + $0x8] sm:$0xff]
    %v59 = vld [vmem:[%s0 + $0x10] sm:$0xff]
    %v60 = vld [vmem:[%s0 + $0x18] sm:$0xff]
    %v61 = vld [vmem:[%s1] sm:$0xff]
    %vm62 = vcmask 64512
    %v64 = vsel %vm62, %v57, 0
    %v67 = vsel %vm62, %v58, 0
    %v70 = vsel %vm62, %v59, 0
    %v73 = vsel %vm62, %v60, 0
    %75 = vmatprep.subr.mxu0 0.0
    %76 = vmatpush1.msra.mxu0 %v61
    %77 = vmatprep.subr.mxu0 0.0
    %78 = vmatpush1.msra.mxu0 0.0
    %79 = vmatprep.subr.mxu0 0.0
    %80 = vmatpush1.msra.mxu0 0.0
    %81 = vmatprep.subr.mxu0 0.0
    %82 = vmatpush1.msra.mxu0 0.0
    %83 = vmatprep.subr.mxu0 0.0
    %84 = vmatpush1.msra.mxu0 0.0
    %85 = vmatprep.subr.mxu0 0.0
    %86 = vmatpush1.msra.mxu0 0.0
    %87 = vmatprep.subr.mxu0 0.0
    %88 = vmatpush1.msra.mxu0 0.0
    %89 = vmatprep.subr.mxu0 0.0
    %90 = vmatpush1.msra.mxu0 0.0
    %91 = vmatprep.subr.mxu0 0.0
    %92 = vmatpush1.msra.mxu0 0.0
    %93 = vmatprep.subr.mxu0 0.0
    %94 = vmatpush1.msra.mxu0 0.0
    %95 = vmatprep.subr.mxu0 0.0
    %96 = vmatpush1.msra.mxu0 0.0
    %97 = vmatprep.subr.mxu0 0.0
    %98 = vmatpush1.msra.mxu0 0.0
    %99 = vmatprep.subr.mxu0 0.0
    %100 = vmatpush1.msra.mxu0 0.0
    %101 = vmatprep.subr.mxu0 0.0
    %102 = vmatpush1.msra.mxu0 0.0
    %103 = vmatprep.subr.mxu0 0.0
    %104 = vmatpush1.msra.mxu0 0.0
    %105 = vmatprep.subr.mxu0 0.0
    %106 = vmatpush1.msra.mxu0 0.0
    %107 = vmatprep.subr.mxu0 0.0
    %108 = vmatpush1.msra.mxu0 0.0
    %109 = vmatprep.subr.mxu0 0.0
    %110 = vmatpush1.msra.mxu0 0.0
    %111 = vmatprep.subr.mxu0 0.0
    %112 = vmatpush1.msra.mxu0 0.0
    %113 = vmatprep.subr.mxu0 0.0
    %114 = vmatpush1.msra.mxu0 0.0
    %115 = vmatprep.subr.mxu0 0.0
    %116 = vmatpush1.msra.mxu0 0.0
    %117 = vmatprep.subr.mxu0 0.0
    %118 = vmatpush1.msra.mxu0 0.0
    %119 = vmatprep.subr.mxu0 0.0
    %120 = vmatpush1.msra.mxu0 0.0
    %121 = vmatprep.subr.mxu0 0.0
    %122 = vmatpush1.msra.mxu0 0.0
    %123 = vmatprep.subr.mxu0 0.0
    %124 = vmatpush1.msra.mxu0 0.0
    %125 = vmatprep.subr.mxu0 0.0
    %126 = vmatpush1.msra.mxu0 0.0
    %127 = vmatprep.subr.mxu0 0.0
    %128 = vmatpush1.msra.mxu0 0.0
    %129 = vmatprep.subr.mxu0 0.0
    %130 = vmatpush1.msra.mxu0 0.0
    %131 = vmatprep.subr.mxu0 0.0
    %132 = vmatpush1.msra.mxu0 0.0
    %133 = vmatprep.subr.mxu0 0.0
    %134 = vmatpush1.msra.mxu0 0.0
    %135 = vmatprep.subr.mxu0 0.0
    %136 = vmatpush1.msra.mxu0 0.0
    %137 = vmatprep.subr.mxu0 0.0
    %138 = vmatpush1.msra.mxu0 0.0
    %139 = vmatprep.mubr.f32.mxu0 0.0
    %140 = vmatmul.mubr.f32.gmra.mrb[0].mxu0 %v64
    %v141 = vpop.f32.mrb[0].mxu0
    %v142 = vadd.f32 0.0, %v141
    %v143 = vpop.f32.mrb[0].mxu0
    %144 = vmatprep.mubr.f32.mxu0 0.0
    %145 = vmatmul.mubr.f32.gmra.mrb[0].mxu0 %v67
    %v146 = vpop.f32.mrb[0].mxu0
    %v147 = vadd.f32 0.0, %v146
    %v148 = vpop.f32.mrb[0].mxu0
    %149 = vmatprep.mubr.f32.mxu0 0.0
    %150 = vmatmul.mubr.f32.gmra.mrb[0].mxu0 %v70
    %v151 = vpop.f32.mrb[0].mxu0
    %v152 = vadd.f32 0.0, %v151
    %v153 = vpop.f32.mrb[0].mxu0
    %154 = vmatprep.mubr.f32.mxu0 0.0
    %155 = vmatmul.mubr.f32.gmra.mrb[0].mxu0 %v73
    %v156 = vpop.f32.mrb[0].mxu0
    %v157 = vadd.f32 0.0, %v156
    %v158 = vpop.f32.mrb[0].mxu0
    %159 = vdwg.mxu0
    %v160 = vld [vmem:[%s2] sm:$0x1]
    %v162 = vlaneseq
    %v163 = vshrl.u32 %v162, 7
    %v164 = vsub.s32 0, %v163
    %v165 = vrot.slane %v160, %v164
    %v167 = vmul.f32 %v142, %v165
    %v168 = vmul.f32 %v147, %v165
    %v169 = vmul.f32 %v152, %v165
    %v170 = vmul.f32 %v157, %v165
    %v171 = vld [vmem:[%s3] sm:$0x1]
    %v173 = vlaneseq
    %v174 = vshrl.u32 %v173, 7
    %v175 = vsub.s32 0, %v174
    %v176 = vrot.slane %v171, %v175
    %v178 = vadd.f32 %v167, %v176
    %v179 = vadd.f32 %v168, %v176
    %v180 = vadd.f32 %v169, %v176
    %v181 = vadd.f32 %v170, %v176
    %vm182 = vcmp.ge.f32.partialorder %v178, 0.0
    %vm183 = vcmp.ge.f32.partialorder %v179, 0.0
    %vm184 = vcmp.ge.f32.partialorder %v180, 0.0
    %vm185 = vcmp.ge.f32.partialorder %v181, 0.0
    %v186 = vmul.f32 %v178, 0.25
    %v187 = vmul.f32 %v179, 0.25
    %v188 = vmul.f32 %v180, 0.25
    %v189 = vmul.f32 %v181, 0.25
    %v190 = vsel %vm182, %v178, %v186
    %v191 = vsel %vm183, %v179, %v187
    %v192 = vsel %vm184, %v180, %v188
    %v193 = vsel %vm185, %v181, %v189
    %v194 = vld [vmem:[%s4] sm:$0xff]
    %v195 = vld [vmem:[%s4 + $0x8] sm:$0xff]
    %s196 = scalar_lea.vmem %s4, 16
    %v197 = vld [vmem:[%s196] sm:$0xff]
    %v198 = vld [vmem:[%s196 + $0x8] sm:$0xff]
    %v201 = vcombine.low %v192, %v193
    %vm202 = vcmask 130048
    %v203 = vsel %vm202, %v201, 0
    %205 = vmatprep.subr.mxu0 0.0
    %206 = vmatpush1.msra.mxu0 %v197
    %207 = vmatprep.subr.mxu0 0.0
    %208 = vmatpush1.msra.mxu0 %v198
    %209 = vmatprep.subr.mxu0 0.0
    %210 = vmatpush1.msra.mxu0 0.0
    %211 = vmatprep.subr.mxu0 0.0
    %212 = vmatpush1.msra.mxu0 0.0
    %213 = vmatprep.subr.mxu0 0.0
    %214 = vmatpush1.msra.mxu0 0.0
    %215 = vmatprep.subr.mxu0 0.0
    %216 = vmatpush1.msra.mxu0 0.0
    %217 = vmatprep.subr.mxu0 0.0
    %218 = vmatpush1.msra.mxu0 0.0
    %219 = vmatprep.subr.mxu0 0.0
    %220 = vmatpush1.msra.mxu0 0.0
    %221 = vmatprep.subr.mxu0 0.0
    %222 = vmatpush1.msra.mxu0 0.0
    %223 = vmatprep.subr.mxu0 0.0
    %224 = vmatpush1.msra.mxu0 0.0
    %225 = vmatprep.subr.mxu0 0.0
    %226 = vmatpush1.msra.mxu0 0.0
    %227 = vmatprep.subr.mxu0 0.0
    %228 = vmatpush1.msra.mxu0 0.0
    %229 = vmatprep.subr.mxu0 0.0
    %230 = vmatpush1.msra.mxu0 0.0
    %231 = vmatprep.subr.mxu0 0.0
    %232 = vmatpush1.msra.mxu0 0.0
    %233 = vmatprep.subr.mxu0 0.0
    %234 = vmatpush1.msra.mxu0 0.0
    %235 = vmatprep.subr.mxu0 0.0
    %236 = vmatpush1.msra.mxu0 0.0
    %237 = vmatprep.subr.mxu0 0.0
    %238 = vmatpush1.msra.mxu0 0.0
    %239 = vmatprep.subr.mxu0 0.0
    %240 = vmatpush1.msra.mxu0 0.0
    %241 = vmatprep.subr.mxu0 0.0
    %242 = vmatpush1.msra.mxu0 0.0
    %243 = vmatprep.subr.mxu0 0.0
    %244 = vmatpush1.msra.mxu0 0.0
    %245 = vmatprep.subr.mxu0 0.0
    %246 = vmatpush1.msra.mxu0 0.0
    %247 = vmatprep.subr.mxu0 0.0
    %248 = vmatpush1.msra.mxu0 0.0
    %249 = vmatprep.subr.mxu0 0.0
    %250 = vmatpush1.msra.mxu0 0.0
    %251 = vmatprep.subr.mxu0 0.0
    %252 = vmatpush1.msra.mxu0 0.0
    %253 = vmatprep.subr.mxu0 0.0
    %254 = vmatpush1.msra.mxu0 0.0
    %255 = vmatprep.subr.mxu0 0.0
    %256 = vmatpush1.msra.mxu0 0.0
    %257 = vmatprep.subr.mxu0 0.0
    %258 = vmatpush1.msra.mxu0 0.0
    %259 = vmatprep.subr.mxu0 0.0
    %260 = vmatpush1.msra.mxu0 0.0
    %261 = vmatprep.subr.mxu0 0.0
    %262 = vmatpush1.msra.mxu0 0.0
    %263 = vmatprep.subr.mxu0 0.0
    %264 = vmatpush1.msra.mxu0 0.0
    %265 = vmatprep.subr.mxu0 0.0
    %266 = vmatpush1.msra.mxu0 0.0
    %267 = vmatprep.subr.mxu0 0.0
    %268 = vmatpush1.msra.mxu0 0.0
    %269 = vmatprep.mubr.f32.mxu0 0.0
    %270 = vmatmul.mubr.f32.gmra.mrb[0].mxu0 %v203
    %v271 = vpop.f32.mrb[0].mxu0
    %v272 = vadd.f32 0.0, %v271
    %v273 = vpop.f32.mrb[0].mxu0
    %274 = vdwg.mxu0
    %v277 = vcombine.low %v190, %v191
    %v278 = vsel %vm202, %v277, 0
    %280 = vmatprep.subr.mxu0 0.0
    %281 = vmatpush1.msra.mxu0 %v194
    %282 = vmatprep.subr.mxu0 0.0
    %283 = vmatpush1.msra.mxu0 %v195
    %284 = vmatprep.subr.mxu0 0.0
    %285 = vmatpush1.msra.mxu0 0.0
    %286 = vmatprep.subr.mxu0 0.0
    %287 = vmatpush1.msra.mxu0 0.0
    %288 = vmatprep.subr.mxu0 0.0
    %289 = vmatpush1.msra.mxu0 0.0
    %290 = vmatprep.subr.mxu0 0.0
    %291 = vmatpush1.msra.mxu0 0.0
    %292 = vmatprep.subr.mxu0 0.0
    %293 = vmatpush1.msra.mxu0 0.0
    %294 = vmatprep.subr.mxu0 0.0
    %295 = vmatpush1.msra.mxu0 0.0
    %296 = vmatprep.subr.mxu0 0.0
    %297 = vmatpush1.msra.mxu0 0.0
    %298 = vmatprep.subr.mxu0 0.0
    %299 = vmatpush1.msra.mxu0 0.0
    %300 = vmatprep.subr.mxu0 0.0
    %301 = vmatpush1.msra.mxu0 0.0
    %302 = vmatprep.subr.mxu0 0.0
    %303 = vmatpush1.msra.mxu0 0.0
    %304 = vmatprep.subr.mxu0 0.0
    %305 = vmatpush1.msra.mxu0 0.0
    %306 = vmatprep.subr.mxu0 0.0
    %307 = vmatpush1.msra.mxu0 0.0
    %308 = vmatprep.subr.mxu0 0.0
    %309 = vmatpush1.msra.mxu0 0.0
    %310 = vmatprep.subr.mxu0 0.0
    %311 = vmatpush1.msra.mxu0 0.0
    %312 = vmatprep.subr.mxu0 0.0
    %313 = vmatpush1.msra.mxu0 0.0
    %314 = vmatprep.subr.mxu0 0.0
    %315 = vmatpush1.msra.mxu0 0.0
    %316 = vmatprep.subr.mxu0 0.0
    %317 = vmatpush1.msra.mxu0 0.0
    %318 = vmatprep.subr.mxu0 0.0
    %319 = vmatpush1.msra.mxu0 0.0
    %320 = vmatprep.subr.mxu0 0.0
    %321 = vmatpush1.msra.mxu0 0.0
    %322 = vmatprep.subr.mxu0 0.0
    %323 = vmatpush1.msra.mxu0 0.0
    %324 = vmatprep.subr.mxu0 0.0
    %325 = vmatpush1.msra.mxu0 0.0
    %326 = vmatprep.subr.mxu0 0.0
    %327 = vmatpush1.msra.mxu0 0.0
    %328 = vmatprep.subr.mxu0 0.0
    %329 = vmatpush1.msra.mxu0 0.0
    %330 = vmatprep.subr.mxu0 0.0
    %331 = vmatpush1.msra.mxu0 0.0
    %332 = vmatprep.subr.mxu0 0.0
    %333 = vmatpush1.msra.mxu0 0.0
    %334 = vmatprep.subr.mxu0 0.0
    %335 = vmatpush1.msra.mxu0 0.0
    %336 = vmatprep.subr.mxu0 0.0
    %337 = vmatpush1.msra.mxu0 0.0
    %338 = vmatprep.subr.mxu0 0.0
    %339 = vmatpush1.msra.mxu0 0.0
    %340 = vmatprep.subr.mxu0 0.0
    %341 = vmatpush1.msra.mxu0 0.0
    %342 = vmatprep.subr.mxu0 0.0
    %343 = vmatpush1.msra.mxu0 0.0
    %344 = vmatprep.mubr.f32.mxu0 0.0
    %345 = vmatmul.mubr.f32.gmra.mrb[0].mxu0 %v278
    %v346 = vpop.f32.mrb[0].mxu0
    %v347 = vadd.f32 %v272, %v346
    %v348 = vpop.f32.mrb[0].mxu0
    %349 = vdwg.mxu0
    %v350 = vcombine.high %v190, %v190
    %v351 = vcombine.high %v191, %v191
    %vm352 = vcmask 1042432
    %vm353 = vcmask 1046532
    %vm354 = vmor %vm352, %vm353
    %v355 = vrot.slane %v190, 5
    %v356 = vrot.slane %v355, 4
    %v357 = vrot.slane %v350, 5
    %v358 = vsel %vm354, %v356, %v357
    %v359 = vrot.slane %v191, 5
    %v360 = vrot.slane %v359, 4
    %v361 = vrot.slane %v351, 5
    %v362 = vsel %vm354, %v360, %v361
    %s363 = scalar_lea.vmem %s4, 32
    %v364 = vld [vmem:[%s363] sm:$0xff]
    %v365 = vld [vmem:[%s363 + $0x8] sm:$0xff]
    %v366 = vcombine.low %v358, %v362
    %v367 = vsel %vm202, %v366, 0
    %369 = vmatprep.subr.mxu0 0.0
    %370 = vmatpush1.msra.mxu0 %v364
    %371 = vmatprep.subr.mxu0 0.0
    %372 = vmatpush1.msra.mxu0 %v365
    %373 = vmatprep.subr.mxu0 0.0
    %374 = vmatpush1.msra.mxu0 0.0
    %375 = vmatprep.subr.mxu0 0.0
    %376 = vmatpush1.msra.mxu0 0.0
    %377 = vmatprep.subr.mxu0 0.0
    %378 = vmatpush1.msra.mxu0 0.0
    %379 = vmatprep.subr.mxu0 0.0
    %380 = vmatpush1.msra.mxu0 0.0
    %381 = vmatprep.subr.mxu0 0.0
    %382 = vmatpush1.msra.mxu0 0.0
    %383 = vmatprep.subr.mxu0 0.0
    %384 = vmatpush1.msra.mxu0 0.0
    %385 = vmatprep.subr.mxu0 0.0
    %386 = vmatpush1.msra.mxu0 0.0
    %387 = vmatprep.subr.mxu0 0.0
    %388 = vmatpush1.msra.mxu0 0.0
    %389 = vmatprep.subr.mxu0 0.0
    %390 = vmatpush1.msra.mxu0 0.0
    %391 = vmatprep.subr.mxu0 0.0
    %392 = vmatpush1.msra.mxu0 0.0
    %393 = vmatprep.subr.mxu0 0.0
    %394 = vmatpush1.msra.mxu0 0.0
    %395 = vmatprep.subr.mxu0 0.0
    %396 = vmatpush1.msra.mxu0 0.0
    %397 = vmatprep.subr.mxu0 0.0
    %398 = vmatpush1.msra.mxu0 0.0
    %399 = vmatprep.subr.mxu0 0.0
    %400 = vmatpush1.msra.mxu0 0.0
    %401 = vmatprep.subr.mxu0 0.0
    %402 = vmatpush1.msra.mxu0 0.0
    %403 = vmatprep.subr.mxu0 0.0
    %404 = vmatpush1.msra.mxu0 0.0
    %405 = vmatprep.subr.mxu0 0.0
    %406 = vmatpush1.msra.mxu0 0.0
    %407 = vmatprep.subr.mxu0 0.0
    %408 = vmatpush1.msra.mxu0 0.0
    %409 = vmatprep.subr.mxu0 0.0
    %410 = vmatpush1.msra.mxu0 0.0
    %411 = vmatprep.subr.mxu0 0.0
    %412 = vmatpush1.msra.mxu0 0.0
    %413 = vmatprep.subr.mxu0 0.0
    %414 = vmatpush1.msra.mxu0 0.0
    %415 = vmatprep.subr.mxu0 0.0
    %416 = vmatpush1.msra.mxu0 0.0
    %417 = vmatprep.subr.mxu0 0.0
    %418 = vmatpush1.msra.mxu0 0.0
    %419 = vmatprep.subr.mxu0 0.0
    %420 = vmatpush1.msra.mxu0 0.0
    %421 = vmatprep.subr.mxu0 0.0
    %422 = vmatpush1.msra.mxu0 0.0
    %423 = vmatprep.subr.mxu0 0.0
    %424 = vmatpush1.msra.mxu0 0.0
    %425 = vmatprep.subr.mxu0 0.0
    %426 = vmatpush1.msra.mxu0 0.0
    %427 = vmatprep.subr.mxu0 0.0
    %428 = vmatpush1.msra.mxu0 0.0
    %429 = vmatprep.subr.mxu0 0.0
    %430 = vmatpush1.msra.mxu0 0.0
    %431 = vmatprep.subr.mxu0 0.0
    %432 = vmatpush1.msra.mxu0 0.0
    %433 = vmatprep.mubr.f32.mxu0 0.0
    %434 = vmatmul.mubr.f32.gmra.mrb[0].mxu0 %v367
    %v435 = vpop.f32.mrb[0].mxu0
    %v436 = vadd.f32 0.0, %v435
    %v437 = vpop.f32.mrb[0].mxu0
    %438 = vdwg.mxu0
    %v439 = vadd.f32 %v347, %v436
    %v440 = vcombine.high %v192, %v192
    %v441 = vcombine.high %v193, %v193
    %v442 = vrot.slane %v192, 5
    %v443 = vrot.slane %v442, 4
    %v444 = vrot.slane %v440, 5
    %v445 = vsel %vm354, %v443, %v444
    %v446 = vrot.slane %v193, 5
    %v447 = vrot.slane %v446, 4
    %v448 = vrot.slane %v441, 5
    %v449 = vsel %vm354, %v447, %v448
    %s450 = scalar_lea.vmem %s4, 48
    %v451 = vld [vmem:[%s450] sm:$0xff]
    %v452 = vld [vmem:[%s450 + $0x8] sm:$0xff]
    %v453 = vcombine.low %v445, %v449
    %v454 = vsel %vm202, %v453, 0
    %456 = vmatprep.subr.mxu0 0.0
    %457 = vmatpush1.msra.mxu0 %v451
    %458 = vmatprep.subr.mxu0 0.0
    %459 = vmatpush1.msra.mxu0 %v452
    %460 = vmatprep.subr.mxu0 0.0
    %461 = vmatpush1.msra.mxu0 0.0
    %462 = vmatprep.subr.mxu0 0.0
    %463 = vmatpush1.msra.mxu0 0.0
    %464 = vmatprep.subr.mxu0 0.0
    %465 = vmatpush1.msra.mxu0 0.0
    %466 = vmatprep.subr.mxu0 0.0
    %467 = vmatpush1.msra.mxu0 0.0
    %468 = vmatprep.subr.mxu0 0.0
    %469 = vmatpush1.msra.mxu0 0.0
    %470 = vmatprep.subr.mxu0 0.0
    %471 = vmatpush1.msra.mxu0 0.0
    %472 = vmatprep.subr.mxu0 0.0
    %473 = vmatpush1.msra.mxu0 0.0
    %474 = vmatprep.subr.mxu0 0.0
    %475 = vmatpush1.msra.mxu0 0.0
    %476 = vmatprep.subr.mxu0 0.0
    %477 = vmatpush1.msra.mxu0 0.0
    %478 = vmatprep.subr.mxu0 0.0
    %479 = vmatpush1.msra.mxu0 0.0
    %480 = vmatprep.subr.mxu0 0.0
    %481 = vmatpush1.msra.mxu0 0.0
    %482 = vmatprep.subr.mxu0 0.0
    %483 = vmatpush1.msra.mxu0 0.0
    %484 = vmatprep.subr.mxu0 0.0
    %485 = vmatpush1.msra.mxu0 0.0
    %486 = vmatprep.subr.mxu0 0.0
    %487 = vmatpush1.msra.mxu0 0.0
    %488 = vmatprep.subr.mxu0 0.0
    %489 = vmatpush1.msra.mxu0 0.0
    %490 = vmatprep.subr.mxu0 0.0
    %491 = vmatpush1.msra.mxu0 0.0
    %492 = vmatprep.subr.mxu0 0.0
    %493 = vmatpush1.msra.mxu0 0.0
    %494 = vmatprep.subr.mxu0 0.0
    %495 = vmatpush1.msra.mxu0 0.0
    %496 = vmatprep.subr.mxu0 0.0
    %497 = vmatpush1.msra.mxu0 0.0
    %498 = vmatprep.subr.mxu0 0.0
    %499 = vmatpush1.msra.mxu0 0.0
    %500 = vmatprep.subr.mxu0 0.0
    %501 = vmatpush1.msra.mxu0 0.0
    %502 = vmatprep.subr.mxu0 0.0
    %503 = vmatpush1.msra.mxu0 0.0
    %504 = vmatprep.subr.mxu0 0.0
    %505 = vmatpush1.msra.mxu0 0.0
    %506 = vmatprep.subr.mxu0 0.0
    %507 = vmatpush1.msra.mxu0 0.0
    %508 = vmatprep.subr.mxu0 0.0
    %509 = vmatpush1.msra.mxu0 0.0
    %510 = vmatprep.subr.mxu0 0.0
    %511 = vmatpush1.msra.mxu0 0.0
    %512 = vmatprep.subr.mxu0 0.0
    %513 = vmatpush1.msra.mxu0 0.0
    %514 = vmatprep.subr.mxu0 0.0
    %515 = vmatpush1.msra.mxu0 0.0
    %516 = vmatprep.subr.mxu0 0.0
    %517 = vmatpush1.msra.mxu0 0.0
    %518 = vmatprep.subr.mxu0 0.0
    %519 = vmatpush1.msra.mxu0 0.0
    %520 = vmatprep.mubr.f32.mxu0 0.0
    %521 = vmatmul.mubr.f32.gmra.mrb[0].mxu0 %v454
    %v522 = vpop.f32.mrb[0].mxu0
    %v523 = vadd.f32 0.0, %v522
    %v524 = vpop.f32.mrb[0].mxu0
    %525 = vdwg.mxu0
    %v526 = vadd.f32 %v439, %v523
    %vm527 = vcmask 1041408
    %vm528 = vcmask 1045508
    %vm529 = vmor %vm527, %vm528
    %v530 = vrot.slane %v190, 6
    %v531 = vrot.slane %v530, 4
    %v532 = vrot.slane %v350, 6
    %v533 = vsel %vm529, %v531, %v532
    %v534 = vrot.slane %v191, 6
    %v535 = vrot.slane %v534, 4
    %v536 = vrot.slane %v351, 6
    %v537 = vsel %vm529, %v535, %v536
    %s538 = scalar_lea.vmem %s4, 64
    %v539 = vld [vmem:[%s538] sm:$0xff]
    %v540 = vld [vmem:[%s538 + $0x8] sm:$0xff]
    %v541 = vcombine.low %v533, %v537
    %v542 = vsel %vm202, %v541, 0
    %544 = vmatprep.subr.mxu0 0.0
    %545 = vmatpush1.msra.mxu0 %v539
    %546 = vmatprep.subr.mxu0 0.0
    %547 = vmatpush1.msra.mxu0 %v540
    %548 = vmatprep.subr.mxu0 0.0
    %549 = vmatpush1.msra.mxu0 0.0
    %550 = vmatprep.subr.mxu0 0.0
    %551 = vmatpush1.msra.mxu0 0.0
    %552 = vmatprep.subr.mxu0 0.0
    %553 = vmatpush1.msra.mxu0 0.0
    %554 = vmatprep.subr.mxu0 0.0
    %555 = vmatpush1.msra.mxu0 0.0
    %556 = vmatprep.subr.mxu0 0.0
    %557 = vmatpush1.msra.mxu0 0.0
    %558 = vmatprep.subr.mxu0 0.0
    %559 = vmatpush1.msra.mxu0 0.0
    %560 = vmatprep.subr.mxu0 0.0
    %561 = vmatpush1.msra.mxu0 0.0
    %562 = vmatprep.subr.mxu0 0.0
    %563 = vmatpush1.msra.mxu0 0.0
    %564 = vmatprep.subr.mxu0 0.0
    %565 = vmatpush1.msra.mxu0 0.0
    %566 = vmatprep.subr.mxu0 0.0
    %567 = vmatpush1.msra.mxu0 0.0
    %568 = vmatprep.subr.mxu0 0.0
    %569 = vmatpush1.msra.mxu0 0.0
    %570 = vmatprep.subr.mxu0 0.0
    %571 = vmatpush1.msra.mxu0 0.0
    %572 = vmatprep.subr.mxu0 0.0
    %573 = vmatpush1.msra.mxu0 0.0
    %574 = vmatprep.subr.mxu0 0.0
    %575 = vmatpush1.msra.mxu0 0.0
    %576 = vmatprep.subr.mxu0 0.0
    %577 = vmatpush1.msra.mxu0 0.0
    %578 = vmatprep.subr.mxu0 0.0
    %579 = vmatpush1.msra.mxu0 0.0
    %580 = vmatprep.subr.mxu0 0.0
    %581 = vmatpush1.msra.mxu0 0.0
    %582 = vmatprep.subr.mxu0 0.0
    %583 = vmatpush1.msra.mxu0 0.0
    %584 = vmatprep.subr.mxu0 0.0
    %585 = vmatpush1.msra.mxu0 0.0
    %586 = vmatprep.subr.mxu0 0.0
    %587 = vmatpush1.msra.mxu0 0.0
    %588 = vmatprep.subr.mxu0 0.0
    %589 = vmatpush1.msra.mxu0 0.0
    %590 = vmatprep.subr.mxu0 0.0
    %591 = vmatpush1.msra.mxu0 0.0
    %592 = vmatprep.subr.mxu0 0.0
    %593 = vmatpush1.msra.mxu0 0.0
    %594 = vmatprep.subr.mxu0 0.0
    %595 = vmatpush1.msra.mxu0 0.0
    %596 = vmatprep.subr.mxu0 0.0
    %597 = vmatpush1.msra.mxu0 0.0
    %598 = vmatprep.subr.mxu0 0.0
    %599 = vmatpush1.msra.mxu0 0.0
    %600 = vmatprep.subr.mxu0 0.0
    %601 = vmatpush1.msra.mxu0 0.0
    %602 = vmatprep.subr.mxu0 0.0
    %603 = vmatpush1.msra.mxu0 0.0
    %604 = vmatprep.subr.mxu0 0.0
    %605 = vmatpush1.msra.mxu0 0.0
    %606 = vmatprep.subr.mxu0 0.0
    %607 = vmatpush1.msra.mxu0 0.0
    %608 = vmatprep.mubr.f32.mxu0 0.0
    %609 = vmatmul.mubr.f32.gmra.mrb[0].mxu0 %v542
    %v610 = vpop.f32.mrb[0].mxu0
    %v611 = vadd.f32 0.0, %v610
    %v612 = vpop.f32.mrb[0].mxu0
    %613 = vdwg.mxu0
    %v614 = vadd.f32 %v526, %v611
    %v615 = vrot.slane %v192, 6
    %v616 = vrot.slane %v615, 4
    %v617 = vrot.slane %v440, 6
    %v618 = vsel %vm529, %v616, %v617
    %v619 = vrot.slane %v193, 6
    %v620 = vrot.slane %v619, 4
    %v621 = vrot.slane %v441, 6
    %v622 = vsel %vm529, %v620, %v621
    %s623 = scalar_lea.vmem %s4, 80
    %v624 = vld [vmem:[%s623] sm:$0xff]
    %v625 = vld [vmem:[%s623 + $0x8] sm:$0xff]
    %v626 = vcombine.low %v618, %v622
    %v627 = vsel %vm202, %v626, 0
    %629 = vmatprep.subr.mxu0 0.0
    %630 = vmatpush1.msra.mxu0 %v624
    %631 = vmatprep.subr.mxu0 0.0
    %632 = vmatpush1.msra.mxu0 %v625
    %633 = vmatprep.subr.mxu0 0.0
    %634 = vmatpush1.msra.mxu0 0.0
    %635 = vmatprep.subr.mxu0 0.0
    %636 = vmatpush1.msra.mxu0 0.0
    %637 = vmatprep.subr.mxu0 0.0
    %638 = vmatpush1.msra.mxu0 0.0
    %639 = vmatprep.subr.mxu0 0.0
    %640 = vmatpush1.msra.mxu0 0.0
    %641 = vmatprep.subr.mxu0 0.0
    %642 = vmatpush1.msra.mxu0 0.0
    %643 = vmatprep.subr.mxu0 0.0
    %644 = vmatpush1.msra.mxu0 0.0
    %645 = vmatprep.subr.mxu0 0.0
    %646 = vmatpush1.msra.mxu0 0.0
    %647 = vmatprep.subr.mxu0 0.0
    %648 = vmatpush1.msra.mxu0 0.0
    %649 = vmatprep.subr.mxu0 0.0
    %650 = vmatpush1.msra.mxu0 0.0
    %651 = vmatprep.subr.mxu0 0.0
    %652 = vmatpush1.msra.mxu0 0.0
    %653 = vmatprep.subr.mxu0 0.0
    %654 = vmatpush1.msra.mxu0 0.0
    %655 = vmatprep.subr.mxu0 0.0
    %656 = vmatpush1.msra.mxu0 0.0
    %657 = vmatprep.subr.mxu0 0.0
    %658 = vmatpush1.msra.mxu0 0.0
    %659 = vmatprep.subr.mxu0 0.0
    %660 = vmatpush1.msra.mxu0 0.0
    %661 = vmatprep.subr.mxu0 0.0
    %662 = vmatpush1.msra.mxu0 0.0
    %663 = vmatprep.subr.mxu0 0.0
    %664 = vmatpush1.msra.mxu0 0.0
    %665 = vmatprep.subr.mxu0 0.0
    %666 = vmatpush1.msra.mxu0 0.0
    %667 = vmatprep.subr.mxu0 0.0
    %668 = vmatpush1.msra.mxu0 0.0
    %669 = vmatprep.subr.mxu0 0.0
    %670 = vmatpush1.msra.mxu0 0.0
    %671 = vmatprep.subr.mxu0 0.0
    %672 = vmatpush1.msra.mxu0 0.0
    %673 = vmatprep.subr.mxu0 0.0
    %674 = vmatpush1.msra.mxu0 0.0
    %675 = vmatprep.subr.mxu0 0.0
    %676 = vmatpush1.msra.mxu0 0.0
    %677 = vmatprep.subr.mxu0 0.0
    %678 = vmatpush1.msra.mxu0 0.0
    %679 = vmatprep.subr.mxu0 0.0
    %680 = vmatpush1.msra.mxu0 0.0
    %681 = vmatprep.subr.mxu0 0.0
    %682 = vmatpush1.msra.mxu0 0.0
    %683 = vmatprep.subr.mxu0 0.0
    %684 = vmatpush1.msra.mxu0 0.0
    %685 = vmatprep.subr.mxu0 0.0
    %686 = vmatpush1.msra.mxu0 0.0
    %687 = vmatprep.subr.mxu0 0.0
    %688 = vmatpush1.msra.mxu0 0.0
    %689 = vmatprep.subr.mxu0 0.0
    %690 = vmatpush1.msra.mxu0 0.0
    %691 = vmatprep.subr.mxu0 0.0
    %692 = vmatpush1.msra.mxu0 0.0
    %693 = vmatprep.mubr.f32.mxu0 0.0
    %694 = vmatmul.mubr.f32.gmra.mrb[0].mxu0 %v627
    %v695 = vpop.f32.mrb[0].mxu0
    %v696 = vadd.f32 0.0, %v695
    %v697 = vpop.f32.mrb[0].mxu0
    %698 = vdwg.mxu0
    %v699 = vadd.f32 %v614, %v696
    %vm700 = vcmask 1040384
    %vm701 = vcmask 1044484
    %vm702 = vmor %vm700, %vm701
    %v703 = vrot.slane %v190, 7
    %v704 = vrot.slane %v703, 4
    %v705 = vrot.slane %v350, 7
    %v706 = vsel %vm702, %v704, %v705
    %v707 = vrot.slane %v191, 7
    %v708 = vrot.slane %v707, 4
    %v709 = vrot.slane %v351, 7
    %v710 = vsel %vm702, %v708, %v709
    %s711 = scalar_lea.vmem %s4, 96
    %v712 = vld [vmem:[%s711] sm:$0xff]
    %v713 = vld [vmem:[%s711 + $0x8] sm:$0xff]
    %v714 = vcombine.low %v706, %v710
    %v715 = vsel %vm202, %v714, 0
    %717 = vmatprep.subr.mxu0 0.0
    %718 = vmatpush1.msra.mxu0 %v712
    %719 = vmatprep.subr.mxu0 0.0
    %720 = vmatpush1.msra.mxu0 %v713
    %721 = vmatprep.subr.mxu0 0.0
    %722 = vmatpush1.msra.mxu0 0.0
    %723 = vmatprep.subr.mxu0 0.0
    %724 = vmatpush1.msra.mxu0 0.0
    %725 = vmatprep.subr.mxu0 0.0
    %726 = vmatpush1.msra.mxu0 0.0
    %727 = vmatprep.subr.mxu0 0.0
    %728 = vmatpush1.msra.mxu0 0.0
    %729 = vmatprep.subr.mxu0 0.0
    %730 = vmatpush1.msra.mxu0 0.0
    %731 = vmatprep.subr.mxu0 0.0
    %732 = vmatpush1.msra.mxu0 0.0
    %733 = vmatprep.subr.mxu0 0.0
    %734 = vmatpush1.msra.mxu0 0.0
    %735 = vmatprep.subr.mxu0 0.0
    %736 = vmatpush1.msra.mxu0 0.0
    %737 = vmatprep.subr.mxu0 0.0
    %738 = vmatpush1.msra.mxu0 0.0
    %739 = vmatprep.subr.mxu0 0.0
    %740 = vmatpush1.msra.mxu0 0.0
    %741 = vmatprep.subr.mxu0 0.0
    %742 = vmatpush1.msra.mxu0 0.0
    %743 = vmatprep.subr.mxu0 0.0
    %744 = vmatpush1.msra.mxu0 0.0
    %745 = vmatprep.subr.mxu0 0.0
    %746 = vmatpush1.msra.mxu0 0.0
    %747 = vmatprep.subr.mxu0 0.0
    %748 = vmatpush1.msra.mxu0 0.0
    %749 = vmatprep.subr.mxu0 0.0
    %750 = vmatpush1.msra.mxu0 0.0
    %751 = vmatprep.subr.mxu0 0.0
    %752 = vmatpush1.msra.mxu0 0.0
    %753 = vmatprep.subr.mxu0 0.0
    %754 = vmatpush1.msra.mxu0 0.0
    %755 = vmatprep.subr.mxu0 0.0
    %756 = vmatpush1.msra.mxu0 0.0
    %757 = vmatprep.subr.mxu0 0.0
    %758 = vmatpush1.msra.mxu0 0.0
    %759 = vmatprep.subr.mxu0 0.0
    %760 = vmatpush1.msra.mxu0 0.0
    %761 = vmatprep.subr.mxu0 0.0
    %762 = vmatpush1.msra.mxu0 0.0
    %763 = vmatprep.subr.mxu0 0.0
    %764 = vmatpush1.msra.mxu0 0.0
    %765 = vmatprep.subr.mxu0 0.0
    %766 = vmatpush1.msra.mxu0 0.0
    %767 = vmatprep.subr.mxu0 0.0
    %768 = vmatpush1.msra.mxu0 0.0
    %769 = vmatprep.subr.mxu0 0.0
    %770 = vmatpush1.msra.mxu0 0.0
    %771 = vmatprep.subr.mxu0 0.0
    %772 = vmatpush1.msra.mxu0 0.0
    %773 = vmatprep.subr.mxu0 0.0
    %774 = vmatpush1.msra.mxu0 0.0
    %775 = vmatprep.subr.mxu0 0.0
    %776 = vmatpush1.msra.mxu0 0.0
    %777 = vmatprep.subr.mxu0 0.0
    %778 = vmatpush1.msra.mxu0 0.0
    %779 = vmatprep.subr.mxu0 0.0
    %780 = vmatpush1.msra.mxu0 0.0
    %781 = vmatprep.mubr.f32.mxu0 0.0
    %782 = vmatmul.mubr.f32.gmra.mrb[0].mxu0 %v715
    %v783 = vpop.f32.mrb[0].mxu0
    %v784 = vadd.f32 0.0, %v783
    %v785 = vpop.f32.mrb[0].mxu0
    %786 = vdwg.mxu0
    %v787 = vadd.f32 %v699, %v784
    %v788 = vrot.slane %v192, 7
    %v789 = vrot.slane %v788, 4
    %v790 = vrot.slane %v440, 7
    %v791 = vsel %vm702, %v789, %v790
    %v792 = vrot.slane %v193, 7
    %v793 = vrot.slane %v792, 4
    %v794 = vrot.slane %v441, 7
    %v795 = vsel %vm702, %v793, %v794
    %s796 = scalar_lea.vmem %s4, 112
    %v797 = vld [vmem:[%s796] sm:$0xff]
    %v798 = vld [vmem:[%s796 + $0x8] sm:$0xff]
    %v799 = vcombine.low %v791, %v795
    %v800 = vsel %vm202, %v799, 0
    %802 = vmatprep.subr.mxu0 0.0
    %803 = vmatpush1.msra.mxu0 %v797
    %804 = vmatprep.subr.mxu0 0.0
    %805 = vmatpush1.msra.mxu0 %v798
    %806 = vmatprep.subr.mxu0 0.0
    %807 = vmatpush1.msra.mxu0 0.0
    %808 = vmatprep.subr.mxu0 0.0
    %809 = vmatpush1.msra.mxu0 0.0
    %810 = vmatprep.subr.mxu0 0.0
    %811 = vmatpush1.msra.mxu0 0.0
    %812 = vmatprep.subr.mxu0 0.0
    %813 = vmatpush1.msra.mxu0 0.0
    %814 = vmatprep.subr.mxu0 0.0
    %815 = vmatpush1.msra.mxu0 0.0
    %816 = vmatprep.subr.mxu0 0.0
    %817 = vmatpush1.msra.mxu0 0.0
    %818 = vmatprep.subr.mxu0 0.0
    %819 = vmatpush1.msra.mxu0 0.0
    %820 = vmatprep.subr.mxu0 0.0
    %821 = vmatpush1.msra.mxu0 0.0
    %822 = vmatprep.subr.mxu0 0.0
    %823 = vmatpush1.msra.mxu0 0.0
    %824 = vmatprep.subr.mxu0 0.0
    %825 = vmatpush1.msra.mxu0 0.0
    %826 = vmatprep.subr.mxu0 0.0
    %827 = vmatpush1.msra.mxu0 0.0
    %828 = vmatprep.subr.mxu0 0.0
    %829 = vmatpush1.msra.mxu0 0.0
    %830 = vmatprep.subr.mxu0 0.0
    %831 = vmatpush1.msra.mxu0 0.0
    %832 = vmatprep.subr.mxu0 0.0
    %833 = vmatpush1.msra.mxu0 0.0
    %834 = vmatprep.subr.mxu0 0.0
    %835 = vmatpush1.msra.mxu0 0.0
    %836 = vmatprep.subr.mxu0 0.0
    %837 = vmatpush1.msra.mxu0 0.0
    %838 = vmatprep.subr.mxu0 0.0
    %839 = vmatpush1.msra.mxu0 0.0
    %840 = vmatprep.subr.mxu0 0.0
    %841 = vmatpush1.msra.mxu0 0.0
    %842 = vmatprep.subr.mxu0 0.0
    %843 = vmatpush1.msra.mxu0 0.0
    %844 = vmatprep.subr.mxu0 0.0
    %845 = vmatpush1.msra.mxu0 0.0
    %846 = vmatprep.subr.mxu0 0.0
    %847 = vmatpush1.msra.mxu0 0.0
    %848 = vmatprep.subr.mxu0 0.0
    %849 = vmatpush1.msra.mxu0 0.0
    %850 = vmatprep.subr.mxu0 0.0
    %851 = vmatpush1.msra.mxu0 0.0
    %852 = vmatprep.subr.mxu0 0.0
    %853 = vmatpush1.msra.mxu0 0.0
    %854 = vmatprep.subr.mxu0 0.0
    %855 = vmatpush1.msra.mxu0 0.0
    %856 = vmatprep.subr.mxu0 0.0
    %857 = vmatpush1.msra.mxu0 0.0
    %858 = vmatprep.subr.mxu0 0.0
    %859 = vmatpush1.msra.mxu0 0.0
    %860 = vmatprep.subr.mxu0 0.0
    %861 = vmatpush1.msra.mxu0 0.0
    %862 = vmatprep.subr.mxu0 0.0
    %863 = vmatpush1.msra.mxu0 0.0
    %864 = vmatprep.subr.mxu0 0.0
    %865 = vmatpush1.msra.mxu0 0.0
    %866 = vmatprep.mubr.f32.mxu0 0.0
    %867 = vmatmul.mubr.f32.gmra.mrb[0].mxu0 %v800
    %v868 = vpop.f32.mrb[0].mxu0
    %v869 = vadd.f32 0.0, %v868
    %v870 = vpop.f32.mrb[0].mxu0
    %871 = vdwg.mxu0
    %v872 = vadd.f32 %v787, %v869
    %s873 = scalar_lea.vmem %s4, 128
    %v874 = vld [vmem:[%s873] sm:$0xff]
    %v875 = vld [vmem:[%s873 + $0x8] sm:$0xff]
    %v876 = vcombine.low %v350, %v351
    %v877 = vsel %vm202, %v876, 0
    %879 = vmatprep.subr.mxu0 0.0
    %880 = vmatpush1.msra.mxu0 %v874
    %881 = vmatprep.subr.mxu0 0.0
    %882 = vmatpush1.msra.mxu0 %v875
    %883 = vmatprep.subr.mxu0 0.0
    %884 = vmatpush1.msra.mxu0 0.0
    %885 = vmatprep.subr.mxu0 0.0
    %886 = vmatpush1.msra.mxu0 0.0
    %887 = vmatprep.subr.mxu0 0.0
    %888 = vmatpush1.msra.mxu0 0.0
    %889 = vmatprep.subr.mxu0 0.0
    %890 = vmatpush1.msra.mxu0 0.0
    %891 = vmatprep.subr.mxu0 0.0
    %892 = vmatpush1.msra.mxu0 0.0
    %893 = vmatprep.subr.mxu0 0.0
    %894 = vmatpush1.msra.mxu0 0.0
    %895 = vmatprep.subr.mxu0 0.0
    %896 = vmatpush1.msra.mxu0 0.0
    %897 = vmatprep.subr.mxu0 0.0
    %898 = vmatpush1.msra.mxu0 0.0
    %899 = vmatprep.subr.mxu0 0.0
    %900 = vmatpush1.msra.mxu0 0.0
    %901 = vmatprep.subr.mxu0 0.0
    %902 = vmatpush1.msra.mxu0 0.0
    %903 = vmatprep.subr.mxu0 0.0
    %904 = vmatpush1.msra.mxu0 0.0
    %905 = vmatprep.subr.mxu0 0.0
    %906 = vmatpush1.msra.mxu0 0.0
    %907 = vmatprep.subr.mxu0 0.0
    %908 = vmatpush1.msra.mxu0 0.0
    %909 = vmatprep.subr.mxu0 0.0
    %910 = vmatpush1.msra.mxu0 0.0
    %911 = vmatprep.subr.mxu0 0.0
    %912 = vmatpush1.msra.mxu0 0.0
    %913 = vmatprep.subr.mxu0 0.0
    %914 = vmatpush1.msra.mxu0 0.0
    %915 = vmatprep.subr.mxu0 0.0
    %916 = vmatpush1.msra.mxu0 0.0
    %917 = vmatprep.subr.mxu0 0.0
    %918 = vmatpush1.msra.mxu0 0.0
    %919 = vmatprep.subr.mxu0 0.0
    %920 = vmatpush1.msra.mxu0 0.0
    %921 = vmatprep.subr.mxu0 0.0
    %922 = vmatpush1.msra.mxu0 0.0
    %923 = vmatprep.subr.mxu0 0.0
    %924 = vmatpush1.msra.mxu0 0.0
    %925 = vmatprep.subr.mxu0 0.0
    %926 = vmatpush1.msra.mxu0 0.0
    %927 = vmatprep.subr.mxu0 0.0
    %928 = vmatpush1.msra.mxu0 0.0
    %929 = vmatprep.subr.mxu0 0.0
    %930 = vmatpush1.msra.mxu0 0.0
    %931 = vmatprep.subr.mxu0 0.0
    %932 = vmatpush1.msra.mxu0 0.0
    %933 = vmatprep.subr.mxu0 0.0
    %934 = vmatpush1.msra.mxu0 0.0
    %935 = vmatprep.subr.mxu0 0.0
    %936 = vmatpush1.msra.mxu0 0.0
    %937 = vmatprep.subr.mxu0 0.0
    %938 = vmatpush1.msra.mxu0 0.0
    %939 = vmatprep.subr.mxu0 0.0
    %940 = vmatpush1.msra.mxu0 0.0
    %941 = vmatprep.subr.mxu0 0.0
    %942 = vmatpush1.msra.mxu0 0.0
    %943 = vmatprep.mubr.f32.mxu0 0.0
    %944 = vmatmul.mubr.f32.gmra.mrb[0].mxu0 %v877
    %v945 = vpop.f32.mrb[0].mxu0
    %v946 = vadd.f32 0.0, %v945
    %v947 = vpop.f32.mrb[0].mxu0
    %948 = vdwg.mxu0
    %v949 = vadd.f32 %v872, %v946
    %s950 = scalar_lea.vmem %s4, 144
    %v951 = vld [vmem:[%s950] sm:$0xff]
    %v952 = vld [vmem:[%s950 + $0x8] sm:$0xff]
    %v953 = vcombine.low %v440, %v441
    %v954 = vsel %vm202, %v953, 0
    %956 = vmatprep.subr.mxu0 0.0
    %957 = vmatpush1.msra.mxu0 %v951
    %958 = vmatprep.subr.mxu0 0.0
    %959 = vmatpush1.msra.mxu0 %v952
    %960 = vmatprep.subr.mxu0 0.0
    %961 = vmatpush1.msra.mxu0 0.0
    %962 = vmatprep.subr.mxu0 0.0
    %963 = vmatpush1.msra.mxu0 0.0
    %964 = vmatprep.subr.mxu0 0.0
    %965 = vmatpush1.msra.mxu0 0.0
    %966 = vmatprep.subr.mxu0 0.0
    %967 = vmatpush1.msra.mxu0 0.0
    %968 = vmatprep.subr.mxu0 0.0
    %969 = vmatpush1.msra.mxu0 0.0
    %970 = vmatprep.subr.mxu0 0.0
    %971 = vmatpush1.msra.mxu0 0.0
    %972 = vmatprep.subr.mxu0 0.0
    %973 = vmatpush1.msra.mxu0 0.0
    %974 = vmatprep.subr.mxu0 0.0
    %975 = vmatpush1.msra.mxu0 0.0
    %976 = vmatprep.subr.mxu0 0.0
    %977 = vmatpush1.msra.mxu0 0.0
    %978 = vmatprep.subr.mxu0 0.0
    %979 = vmatpush1.msra.mxu0 0.0
    %980 = vmatprep.subr.mxu0 0.0
    %981 = vmatpush1.msra.mxu0 0.0
    %982 = vmatprep.subr.mxu0 0.0
    %983 = vmatpush1.msra.mxu0 0.0
    %984 = vmatprep.subr.mxu0 0.0
    %985 = vmatpush1.msra.mxu0 0.0
    %986 = vmatprep.subr.mxu0 0.0
    %987 = vmatpush1.msra.mxu0 0.0
    %988 = vmatprep.subr.mxu0 0.0
    %989 = vmatpush1.msra.mxu0 0.0
    %990 = vmatprep.subr.mxu0 0.0
    %991 = vmatpush1.msra.mxu0 0.0
    %992 = vmatprep.subr.mxu0 0.0
    %993 = vmatpush1.msra.mxu0 0.0
    %994 = vmatprep.subr.mxu0 0.0
    %995 = vmatpush1.msra.mxu0 0.0
    %996 = vmatprep.subr.mxu0 0.0
    %997 = vmatpush1.msra.mxu0 0.0
    %998 = vmatprep.subr.mxu0 0.0
    %999 = vmatpush1.msra.mxu0 0.0
    %1000 = vmatprep.subr.mxu0 0.0
    %1001 = vmatpush1.msra.mxu0 0.0
    %1002 = vmatprep.subr.mxu0 0.0
    %1003 = vmatpush1.msra.mxu0 0.0
    %1004 = vmatprep.subr.mxu0 0.0
    %1005 = vmatpush1.msra.mxu0 0.0
    %1006 = vmatprep.subr.mxu0 0.0
    %1007 = vmatpush1.msra.mxu0 0.0
    %1008 = vmatprep.subr.mxu0 0.0
    %1009 = vmatpush1.msra.mxu0 0.0
    %1010 = vmatprep.subr.mxu0 0.0
    %1011 = vmatpush1.msra.mxu0 0.0
    %1012 = vmatprep.subr.mxu0 0.0
    %1013 = vmatpush1.msra.mxu0 0.0
    %1014 = vmatprep.subr.mxu0 0.0
    %1015 = vmatpush1.msra.mxu0 0.0
    %1016 = vmatprep.subr.mxu0 0.0
    %1017 = vmatpush1.msra.mxu0 0.0
    %1018 = vmatprep.subr.mxu0 0.0
    %1019 = vmatpush1.msra.mxu0 0.0
    %1020 = vmatprep.mubr.f32.mxu0 0.0
    %1021 = vmatmul.mubr.f32.gmra.mrb[0].mxu0 %v954
    %v1022 = vpop.f32.mrb[0].mxu0
    %v1023 = vadd.f32 0.0, %v1022
    %v1024 = vpop.f32.mrb[0].mxu0
    %1025 = vdwg.mxu0
    %v1026 = vadd.f32 %v949, %v1023
    %v1027 = vld [vmem:[%s5] sm:$0x1]
    %v1029 = vlaneseq
    %v1030 = vshrl.u32 %v1029, 7
    %v1031 = vsub.s32 0, %v1030
    %v1032 = vrot.slane %v1027, %v1031
    %v1034 = vmul.f32 %v1026, %v1032
    %v1035 = vld [vmem:[%s6] sm:$0x1]
    %v1037 = vlaneseq
    %v1038 = vshrl.u32 %v1037, 7
    %v1039 = vsub.s32 0, %v1038
    %v1040 = vrot.slane %v1035, %v1039
    %v1042 = vadd.f32 %v1034, %v1040
    %vm1043 = vcmp.ge.f32.partialorder %v1042, 0.0
    %v1044 = vmul.f32 %v1042, 0.25
    %v1045 = vsel %vm1043, %v1042, %v1044
    %1046 = vxpose.xlu0.b32.start [1/16] %v1045, 128
    %1047 = vxpose.xlu0.b32.cont [2/16] 0.0, 128
    %1048 = vxpose.xlu0.b32.cont [3/16] 0.0, 128
    %1049 = vxpose.xlu0.b32.cont [4/16] 0.0, 128
    %1050 = vxpose.xlu0.b32.cont [5/16] 0.0, 128
    %1051 = vxpose.xlu0.b32.cont [6/16] 0.0, 128
    %1052 = vxpose.xlu0.b32.cont [7/16] 0.0, 128
    %1053 = vxpose.xlu0.b32.cont [8/16] 0.0, 128
    %1054 = vxpose.xlu0.b32.cont [9/16] 0.0, 128
    %1055 = vxpose.xlu0.b32.cont [10/16] 0.0, 128
    %1056 = vxpose.xlu0.b32.cont [11/16] 0.0, 128
    %1057 = vxpose.xlu0.b32.cont [12/16] 0.0, 128
    %1058 = vxpose.xlu0.b32.cont [13/16] 0.0, 128
    %1059 = vxpose.xlu0.b32.cont [14/16] 0.0, 128
    %1060 = vxpose.xlu0.b32.cont [15/16] 0.0, 128
    %1061 = vxpose.xlu0.b32.end [16/16] 0.0, 128
    %v1062 = vpop.trf.xlu0
    %v1063 = vpop.trf.xlu0
    %v1064 = vpop.trf.xlu0
    %v1065 = vpop.trf.xlu0
    %v1066 = vpop.trf.xlu0
    %v1067 = vpop.trf.xlu0
    %v1068 = vpop.trf.xlu0
    %v1069 = vpop.trf.xlu0
    %v1070 = vpop.trf.xlu0
    %v1071 = vpop.trf.xlu0
    %v1072 = vpop.trf.xlu0
    %v1073 = vpop.trf.xlu0
    %v1074 = vpop.trf.xlu0
    %v1075 = vpop.trf.xlu0
    %v1076 = vpop.trf.xlu0
    %v1077 = vpop.trf.xlu0
    %v1082 = vrot.slane %v1063, 7
    %vm1083 = vcmask 1041409
    %v1084 = vsel %vm1083, %v1082, %v1062
    %v1085 = vrot.slane %v1064, 6
    %vm1086 = vcmask 1042434
    %v1087 = vsel %vm1086, %v1085, %v1084
    %v1088 = vrot.slane %v1065, 5
    %vm1089 = vcmask 1043459
    %v1090 = vsel %vm1089, %v1088, %v1087
    %v1092 = vrot.slane %v1062, 1
    %v1093 = vsel %vm1083, %v1063, %v1092
    %v1094 = vrot.slane %v1064, 7
    %v1095 = vsel %vm1086, %v1094, %v1093
    %v1096 = vrot.slane %v1065, 6
    %v1097 = vsel %vm1089, %v1096, %v1095
    %1098 = vrot.lane.b32.xlu0 %v1097, 4
    %v1099 = vpop.permute.xlu0 %1098
    %v1101 = vrot.slane %v1062, 2
    %v1102 = vrot.slane %v1063, 1
    %v1103 = vsel %vm1083, %v1102, %v1101
    %v1104 = vsel %vm1086, %v1064, %v1103
    %v1105 = vrot.slane %v1065, 7
    %v1106 = vsel %vm1089, %v1105, %v1104
    %1107 = vrot.lane.b32.xlu0 %v1106, 8
    %v1108 = vpop.permute.xlu0 %1107
    %v1110 = vrot.slane %v1062, 3
    %v1111 = vrot.slane %v1063, 2
    %v1112 = vsel %vm1083, %v1111, %v1110
    %v1113 = vrot.slane %v1064, 1
    %v1114 = vsel %vm1086, %v1113, %v1112
    %v1115 = vsel %vm1089, %v1065, %v1114
    %1116 = vrot.lane.b32.xlu0 %v1115, 12
    %v1117 = vpop.permute.xlu0 %1116
    %v1119 = vrot.slane %v1062, 4
    %v1120 = vrot.slane %v1063, 3
    %v1121 = vsel %vm1083, %v1120, %v1119
    %v1122 = vrot.slane %v1064, 2
    %v1123 = vsel %vm1086, %v1122, %v1121
    %v1124 = vrot.slane %v1065, 1
    %v1125 = vsel %vm1089, %v1124, %v1123
    %1126 = vrot.lane.b32.xlu0 %v1125, 16
    %v1127 = vpop.permute.xlu0 %1126
    %v1129 = vrot.slane %v1062, 5
    %v1130 = vrot.slane %v1063, 4
    %v1131 = vsel %vm1083, %v1130, %v1129
    %v1132 = vrot.slane %v1064, 3
    %v1133 = vsel %vm1086, %v1132, %v1131
    %v1134 = vrot.slane %v1065, 2
    %v1135 = vsel %vm1089, %v1134, %v1133
    %1136 = vrot.lane.b32.xlu0 %v1135, 20
    %v1137 = vpop.permute.xlu0 %1136
    %v1139 = vrot.slane %v1062, 6
    %v1140 = vrot.slane %v1063, 5
    %v1141 = vsel %vm1083, %v1140, %v1139
    %v1142 = vrot.slane %v1064, 4
    %v1143 = vsel %vm1086, %v1142, %v1141
    %v1144 = vrot.slane %v1065, 3
    %v1145 = vsel %vm1089, %v1144, %v1143
    %1146 = vrot.lane.b32.xlu0 %v1145, 24
    %v1147 = vpop.permute.xlu0 %1146
    %v1149 = vrot.slane %v1062, 7
    %v1150 = vrot.slane %v1063, 6
    %v1151 = vsel %vm1083, %v1150, %v1149
    %v1152 = vrot.slane %v1064, 5
    %v1153 = vsel %vm1086, %v1152, %v1151
    %v1154 = vrot.slane %v1065, 4
    %v1155 = vsel %vm1089, %v1154, %v1153
    %1156 = vrot.lane.b32.xlu0 %v1155, 28
    %v1157 = vpop.permute.xlu0 %1156
    %vm1159 = vcmask 31744
    %v1160 = vsel %vm1159, %v1090, %v1099
    %v1161 = vsel %vm62, %v1160, %v1108
    %vm1162 = vcmask 97280
    %v1163 = vsel %vm1162, %v1161, %v1117
    %v1164 = vsel %vm202, %v1163, %v1127
    %vm1165 = vcmask 162816
    %v1166 = vsel %vm1165, %v1164, %v1137
    %vm1167 = vcmask 195584
    %v1168 = vsel %vm1167, %v1166, %v1147
    %vm1169 = vcmask 228352
    %v1170 = vsel %vm1169, %v1168, %v1157
    %1171 = vrot.lane.b32.xlu0 %v1090, 124
    %v1172 = vpop.permute.xlu0 %1171
    %1175 = vrot.lane.b32.xlu0 %v1106, 4
    %v1176 = vpop.permute.xlu0 %1175
    %1178 = vrot.lane.b32.xlu0 %v1115, 8
    %v1179 = vpop.permute.xlu0 %1178
    %1181 = vrot.lane.b32.xlu0 %v1125, 12
    %v1182 = vpop.permute.xlu0 %1181
    %1184 = vrot.lane.b32.xlu0 %v1135, 16
    %v1185 = vpop.permute.xlu0 %1184
    %1187 = vrot.lane.b32.xlu0 %v1145, 20
    %v1188 = vpop.permute.xlu0 %1187
    %1190 = vrot.lane.b32.xlu0 %v1155, 24
    %v1191 = vpop.permute.xlu0 %1190
    %v1193 = vsel %vm1159, %v1172, %v1097
    %v1194 = vsel %vm62, %v1193, %v1176
    %v1195 = vsel %vm1162, %v1194, %v1179
    %v1196 = vsel %vm202, %v1195, %v1182
    %v1197 = vsel %vm1165, %v1196, %v1185
    %v1198 = vsel %vm1167, %v1197, %v1188
    %v1199 = vsel %vm1169, %v1198, %v1191
    %v1201 = vrot.slane %v1199, 4
    %vm1203 = vcmask 1043456
    %v1204 = vsel %vm1203, %v1170, %v1201
    %v1205 = vld [vmem:[%s7] sm:$0xff]
    %v1206 = vld [vmem:[%s7 + $0x8] sm:$0xff]
    %v1207 = vld [vmem:[%s7 + $0x10] sm:$0xff]
    %v1208 = vld [vmem:[%s7 + $0x18] sm:$0xff]
    %v1209 = vld [vmem:[%s7 + $0x20] sm:$0xff]
    %v1210 = vld [vmem:[%s7 + $0x28] sm:$0xff]
    %v1211 = vld [vmem:[%s7 + $0x30] sm:$0xff]
    %v1212 = vld [vmem:[%s7 + $0x38] sm:$0xff]
    %v1213 = vld [vmem:[%s8] sm:$0x3]
    %v1215 = vlaneseq
    %v1216 = vshrl.u32 %v1215, 7
    %v1217 = vsub.s32 0, %v1216
    %v1218 = vrot.slane %v1213, %v1217
    %v1219 = vlaneseq
    %v1220 = vshrl.u32 %v1219, 7
    %v1221 = vsub.s32 1, %v1220
    %v1222 = vrot.slane %v1213, %v1221
    %vm1225 = vcmask 261120
    %v1227 = vsel %vm1225, %v1204, 0
    %1229 = vmatprep.subr.mxu0 %v1206
    %1230 = vmatpush1.msra.mxu0 %v1205
    %1231 = vmatprep.subr.mxu0 %v1208
    %1232 = vmatpush1.msra.mxu0 %v1207
    %1233 = vmatprep.subr.mxu0 %v1210
    %1234 = vmatpush1.msra.mxu0 %v1209
    %1235 = vmatprep.subr.mxu0 %v1212
    %1236 = vmatpush1.msra.mxu0 %v1211
    %1237 = vmatprep.subr.mxu0 0.0
    %1238 = vmatpush1.msra.mxu0 0.0
    %1239 = vmatprep.subr.mxu0 0.0
    %1240 = vmatpush1.msra.mxu0 0.0
    %1241 = vmatprep.subr.mxu0 0.0
    %1242 = vmatpush1.msra.mxu0 0.0
    %1243 = vmatprep.subr.mxu0 0.0
    %1244 = vmatpush1.msra.mxu0 0.0
    %1245 = vmatprep.subr.mxu0 0.0
    %1246 = vmatpush1.msra.mxu0 0.0
    %1247 = vmatprep.subr.mxu0 0.0
    %1248 = vmatpush1.msra.mxu0 0.0
    %1249 = vmatprep.subr.mxu0 0.0
    %1250 = vmatpush1.msra.mxu0 0.0
    %1251 = vmatprep.subr.mxu0 0.0
    %1252 = vmatpush1.msra.mxu0 0.0
    %1253 = vmatprep.subr.mxu0 0.0
    %1254 = vmatpush1.msra.mxu0 0.0
    %1255 = vmatprep.subr.mxu0 0.0
    %1256 = vmatpush1.msra.mxu0 0.0
    %1257 = vmatprep.subr.mxu0 0.0
    %1258 = vmatpush1.msra.mxu0 0.0
    %1259 = vmatprep.subr.mxu0 0.0
    %1260 = vmatpush1.msra.mxu0 0.0
    %1261 = vmatprep.subr.mxu0 0.0
    %1262 = vmatpush1.msra.mxu0 0.0
    %1263 = vmatprep.subr.mxu0 0.0
    %1264 = vmatpush1.msra.mxu0 0.0
    %1265 = vmatprep.subr.mxu0 0.0
    %1266 = vmatpush1.msra.mxu0 0.0
    %1267 = vmatprep.subr.mxu0 0.0
    %1268 = vmatpush1.msra.mxu0 0.0
    %1269 = vmatprep.subr.mxu0 0.0
    %1270 = vmatpush1.msra.mxu0 0.0
    %1271 = vmatprep.subr.mxu0 0.0
    %1272 = vmatpush1.msra.mxu0 0.0
    %1273 = vmatprep.subr.mxu0 0.0
    %1274 = vmatpush1.msra.mxu0 0.0
    %1275 = vmatprep.subr.mxu0 0.0
    %1276 = vmatpush1.msra.mxu0 0.0
    %1277 = vmatprep.subr.mxu0 0.0
    %1278 = vmatpush1.msra.mxu0 0.0
    %1279 = vmatprep.subr.mxu0 0.0
    %1280 = vmatpush1.msra.mxu0 0.0
    %1281 = vmatprep.subr.mxu0 0.0
    %1282 = vmatpush1.msra.mxu0 0.0
    %1283 = vmatprep.subr.mxu0 0.0
    %1284 = vmatpush1.msra.mxu0 0.0
    %1285 = vmatprep.subr.mxu0 0.0
    %1286 = vmatpush1.msra.mxu0 0.0
    %1287 = vmatprep.subr.mxu0 0.0
    %1288 = vmatpush1.msra.mxu0 0.0
    %1289 = vmatprep.subr.mxu0 0.0
    %1290 = vmatpush1.msra.mxu0 0.0
    %1291 = vmatprep.subr.mxu0 0.0
    %1292 = vmatpush1.msra.mxu0 0.0
    %1293 = vmatprep.mubr.f32.mxu0 0.0
    %1294 = vmatmul.mubr.f32.gmra.mrb[0].mxu0 %v1227
    %v1295 = vpop.f32.mrb[0].mxu0
    %v1296 = vadd.f32 %v1218, %v1295
    %v1297 = vpop.f32.mrb[0].mxu0
    %v1298 = vadd.f32 %v1222, %v1297
    %1299 = vdwg.mxu0
    %v1301 = vcombine.high %v1296, %v1296
    %v1303 = vunpack.c.l.s4 1983009808
    %v1304 = vunpack.c.0.s8 %v1303
    %v1305 = vlaneseq
    %v1306 = vshrl.u32 %v1305, 7
    %v1307 = vsub.s32 %v1304, %v1306
    %v1308 = vrot.slane %v1296, %v1307
    %v1310 = vunpack.c.l.s4 1983009808
    %v1311 = vunpack.c.0.s8 %v1310
    %v1312 = vlaneseq
    %v1313 = vshrl.u32 %v1312, 7
    %v1314 = vsub.s32 %v1311, %v1313
    %v1315 = vrot.slane %v1301, %v1314
    %v1316 = vcombine.high %v1308, %v1308
    %v1317 = vcombine.high %v1315, %v1315
    %vm1322 = vcmask 254976
    %1323 = vst.msk [vmem:[#allocation2] sm:$0x3] %vm1322, %v1308
    %1324 = vst.msk [vmem:[#allocation2 + $0x2] sm:$0x3] %vm1322, %v1316
    %1325 = vst.msk [vmem:[#allocation2 + $0x4] sm:$0x3] %vm1322, %v1315
    %1326 = vst.msk [vmem:[#allocation2 + $0x6] sm:$0x3] %vm1322, %v1317
    %v1328 = vcombine.high %v1298, %v1298
    %v1330 = vunpack.c.l.s4 1983009808
    %v1331 = vunpack.c.0.s8 %v1330
    %v1332 = vlaneseq
    %v1333 = vshrl.u32 %v1332, 7
    %v1334 = vsub.s32 %v1331, %v1333
    %v1335 = vrot.slane %v1298, %v1334
    %v1337 = vunpack.c.l.s4 1983009808
    %v1338 = vunpack.c.0.s8 %v1337
    %v1339 = vlaneseq
    %v1340 = vshrl.u32 %v1339, 7
    %v1341 = vsub.s32 %v1338, %v1340
    %v1342 = vrot.slane %v1328, %v1341
    %v1343 = vcombine.high %v1335, %v1335
    %v1344 = vcombine.high %v1342, %v1342
    %1349 = vst.msk [vmem:[#allocation3] sm:$0x3] %vm1322, %v1335
    %1350 = vst.msk [vmem:[#allocation3 + $0x2] sm:$0x3] %vm1322, %v1343
    %1351 = vst.msk [vmem:[#allocation3 + $0x4] sm:$0x3] %vm1322, %v1342
    %1352 = vst.msk [vmem:[#allocation3 + $0x6] sm:$0x3] %vm1322, %v1344
    %v1354 = vunpack.c.l.s4 1983009808
    %v1355 = vunpack.c.0.s8 %v1354
    %v1356 = vlaneseq
    %v1357 = vshrl.u32 %v1356, 7
    %v1358 = vsub.s32 %v1355, %v1357
    %v1359 = vrot.slane %v1308, %v1358
    %v1361 = vunpack.c.l.s4 1983009808
    %v1362 = vunpack.c.0.s8 %v1361
    %v1363 = vlaneseq
    %v1364 = vshrl.u32 %v1363, 7
    %v1365 = vsub.s32 %v1362, %v1364
    %v1366 = vrot.slane %v1316, %v1365
    %v1368 = vunpack.c.l.s4 1983009808
    %v1369 = vunpack.c.0.s8 %v1368
    %v1370 = vlaneseq
    %v1371 = vshrl.u32 %v1370, 7
    %v1372 = vsub.s32 %v1369, %v1371
    %v1373 = vrot.slane %v1315, %v1372
    %v1375 = vunpack.c.l.s4 1983009808
    %v1376 = vunpack.c.0.s8 %v1375
    %v1377 = vlaneseq
    %v1378 = vshrl.u32 %v1377, 7
    %v1379 = vsub.s32 %v1376, %v1378
    %v1380 = vrot.slane %v1317, %v1379
    %1381 = vrot.lane.b32.xlu0 %v1359, 96
    %v1382 = vpop.permute.xlu0 %1381
    %1383 = vrot.lane.b32.xlu0 %v1366, 96
    %v1384 = vpop.permute.xlu0 %1383
    %1385 = vrot.lane.b32.xlu0 %v1373, 96
    %v1386 = vpop.permute.xlu0 %1385
    %1387 = vrot.lane.b32.xlu0 %v1380, 96
    %v1388 = vpop.permute.xlu0 %1387
    %s1393 = scalar_lea.vmem [#allocation2], 8
    %1394 = vst.msk [vmem:[%s1393] sm:$0x3] %vm1322, %v1382
    %1395 = vst.msk [vmem:[%s1393 + $0x2] sm:$0x3] %vm1322, %v1384
    %1396 = vst.msk [vmem:[%s1393 + $0x4] sm:$0x3] %vm1322, %v1386
    %1397 = vst.msk [vmem:[%s1393 + $0x6] sm:$0x3] %vm1322, %v1388
    %v1399 = vunpack.c.l.s4 1983009808
    %v1400 = vunpack.c.0.s8 %v1399
    %v1401 = vlaneseq
    %v1402 = vshrl.u32 %v1401, 7
    %v1403 = vsub.s32 %v1400, %v1402
    %v1404 = vrot.slane %v1335, %v1403
    %v1406 = vunpack.c.l.s4 1983009808
    %v1407 = vunpack.c.0.s8 %v1406
    %v1408 = vlaneseq
    %v1409 = vshrl.u32 %v1408, 7
    %v1410 = vsub.s32 %v1407, %v1409
    %v1411 = vrot.slane %v1343, %v1410
    %v1413 = vunpack.c.l.s4 1983009808
    %v1414 = vunpack.c.0.s8 %v1413
    %v1415 = vlaneseq
    %v1416 = vshrl.u32 %v1415, 7
    %v1417 = vsub.s32 %v1414, %v1416
    %v1418 = vrot.slane %v1342, %v1417
    %v1420 = vunpack.c.l.s4 1983009808
    %v1421 = vunpack.c.0.s8 %v1420
    %v1422 = vlaneseq
    %v1423 = vshrl.u32 %v1422, 7
    %v1424 = vsub.s32 %v1421, %v1423
    %v1425 = vrot.slane %v1344, %v1424
    %1426 = vrot.lane.b32.xlu0 %v1404, 96
    %v1427 = vpop.permute.xlu0 %1426
    %1428 = vrot.lane.b32.xlu0 %v1411, 96
    %v1429 = vpop.permute.xlu0 %1428
    %1430 = vrot.lane.b32.xlu0 %v1418, 96
    %v1431 = vpop.permute.xlu0 %1430
    %1432 = vrot.lane.b32.xlu0 %v1425, 96
    %v1433 = vpop.permute.xlu0 %1432
    %s1438 = scalar_lea.vmem [#allocation3], 8
    %1439 = vst.msk [vmem:[%s1438] sm:$0x3] %vm1322, %v1427
    %1440 = vst.msk [vmem:[%s1438 + $0x2] sm:$0x3] %vm1322, %v1429
    %1441 = vst.msk [vmem:[%s1438 + $0x4] sm:$0x3] %vm1322, %v1431
    %1442 = vst.msk [vmem:[%s1438 + $0x6] sm:$0x3] %vm1322, %v1433
    %1443 = vrot.lane.b32.xlu0 %v1359, 64
    %v1444 = vpop.permute.xlu0 %1443
    %1445 = vrot.lane.b32.xlu0 %v1366, 64
    %v1446 = vpop.permute.xlu0 %1445
    %1447 = vrot.lane.b32.xlu0 %v1373, 64
    %v1448 = vpop.permute.xlu0 %1447
    %1449 = vrot.lane.b32.xlu0 %v1380, 64
    %v1450 = vpop.permute.xlu0 %1449
    %s1455 = scalar_lea.vmem [#allocation2], 16
    %1456 = vst.msk [vmem:[%s1455] sm:$0x3] %vm1322, %v1444
    %1457 = vst.msk [vmem:[%s1455 + $0x2] sm:$0x3] %vm1322, %v1446
    %1458 = vst.msk [vmem:[%s1455 + $0x4] sm:$0x3] %vm1322, %v1448
    %1459 = vst.msk [vmem:[%s1455 + $0x6] sm:$0x3] %vm1322, %v1450
    %1460 = vrot.lane.b32.xlu0 %v1404, 64
    %v1461 = vpop.permute.xlu0 %1460
    %1462 = vrot.lane.b32.xlu0 %v1411, 64
    %v1463 = vpop.permute.xlu0 %1462
    %1464 = vrot.lane.b32.xlu0 %v1418, 64
    %v1465 = vpop.permute.xlu0 %1464
    %1466 = vrot.lane.b32.xlu0 %v1425, 64
    %v1467 = vpop.permute.xlu0 %1466
    %s1472 = scalar_lea.vmem [#allocation3], 16
    %1473 = vst.msk [vmem:[%s1472] sm:$0x3] %vm1322, %v1461
    %1474 = vst.msk [vmem:[%s1472 + $0x2] sm:$0x3] %vm1322, %v1463
    %1475 = vst.msk [vmem:[%s1472 + $0x4] sm:$0x3] %vm1322, %v1465
    %1476 = vst.msk [vmem:[%s1472 + $0x6] sm:$0x3] %vm1322, %v1467
    %1477 = vrot.lane.b32.xlu0 %v1359, 32
    %v1478 = vpop.permute.xlu0 %1477
    %1479 = vrot.lane.b32.xlu0 %v1366, 32
    %v1480 = vpop.permute.xlu0 %1479
    %1481 = vrot.lane.b32.xlu0 %v1373, 32
    %v1482 = vpop.permute.xlu0 %1481
    %1483 = vrot.lane.b32.xlu0 %v1380, 32
    %v1484 = vpop.permute.xlu0 %1483
    %s1489 = scalar_lea.vmem [#allocation2], 24
    %1490 = vst.msk [vmem:[%s1489] sm:$0x3] %vm1322, %v1478
    %1491 = vst.msk [vmem:[%s1489 + $0x2] sm:$0x3] %vm1322, %v1480
    %1492 = vst.msk [vmem:[%s1489 + $0x4] sm:$0x3] %vm1322, %v1482
    %1493 = vst.msk [vmem:[%s1489 + $0x6] sm:$0x3] %vm1322, %v1484
    %1494 = vrot.lane.b32.xlu0 %v1404, 32
    %v1495 = vpop.permute.xlu0 %1494
    %1496 = vrot.lane.b32.xlu0 %v1411, 32
    %v1497 = vpop.permute.xlu0 %1496
    %1498 = vrot.lane.b32.xlu0 %v1418, 32
    %v1499 = vpop.permute.xlu0 %1498
    %1500 = vrot.lane.b32.xlu0 %v1425, 32
    %v1501 = vpop.permute.xlu0 %1500
    %s1506 = scalar_lea.vmem [#allocation3], 24
    %1507 = vst.msk [vmem:[%s1506] sm:$0x3] %vm1322, %v1495
    %1508 = vst.msk [vmem:[%s1506 + $0x2] sm:$0x3] %vm1322, %v1497
    %1509 = vst.msk [vmem:[%s1506 + $0x4] sm:$0x3] %vm1322, %v1499
    %1510 = vst.msk [vmem:[%s1506 + $0x6] sm:$0x3] %vm1322, %v1501
    %v1511 = vld [vmem:[#allocation2] sm:$0x3]
    %v1512 = vld [vmem:[%s9] sm:$0xff]
    %v1513 = vld [vmem:[%s9 + $0x8] sm:$0xff]
    %v1514 = vld [vmem:[%s9 + $0x10] sm:$0xff]
    %v1515 = vld [vmem:[%s9 + $0x18] sm:$0xff]
    %v1517 = vsel %vm1225, 0.0, 0
    %1519 = vmatprep.subr.mxu0 0.0
    %1520 = vmatpush1.msra.mxu0 %v1512
    %1521 = vmatprep.subr.mxu0 0.0
    %1522 = vmatpush1.msra.mxu0 %v1513
    %1523 = vmatprep.subr.mxu0 0.0
    %1524 = vmatpush1.msra.mxu0 %v1514
    %1525 = vmatprep.subr.mxu0 0.0
    %1526 = vmatpush1.msra.mxu0 %v1515
    %1527 = vmatprep.subr.mxu0 0.0
    %1528 = vmatpush1.msra.mxu0 0.0
    %1529 = vmatprep.subr.mxu0 0.0
    %1530 = vmatpush1.msra.mxu0 0.0
    %1531 = vmatprep.subr.mxu0 0.0
    %1532 = vmatpush1.msra.mxu0 0.0
    %1533 = vmatprep.subr.mxu0 0.0
    %1534 = vmatpush1.msra.mxu0 0.0
    %1535 = vmatprep.subr.mxu0 0.0
    %1536 = vmatpush1.msra.mxu0 0.0
    %1537 = vmatprep.subr.mxu0 0.0
    %1538 = vmatpush1.msra.mxu0 0.0
    %1539 = vmatprep.subr.mxu0 0.0
    %1540 = vmatpush1.msra.mxu0 0.0
    %1541 = vmatprep.subr.mxu0 0.0
    %1542 = vmatpush1.msra.mxu0 0.0
    %1543 = vmatprep.subr.mxu0 0.0
    %1544 = vmatpush1.msra.mxu0 0.0
    %1545 = vmatprep.subr.mxu0 0.0
    %1546 = vmatpush1.msra.mxu0 0.0
    %1547 = vmatprep.subr.mxu0 0.0
    %1548 = vmatpush1.msra.mxu0 0.0
    %1549 = vmatprep.subr.mxu0 0.0
    %1550 = vmatpush1.msra.mxu0 0.0
    %1551 = vmatprep.subr.mxu0 0.0
    %1552 = vmatpush1.msra.mxu0 0.0
    %1553 = vmatprep.subr.mxu0 0.0
    %1554 = vmatpush1.msra.mxu0 0.0
    %1555 = vmatprep.subr.mxu0 0.0
    %1556 = vmatpush1.msra.mxu0 0.0
    %1557 = vmatprep.subr.mxu0 0.0
    %1558 = vmatpush1.msra.mxu0 0.0
    %1559 = vmatprep.subr.mxu0 0.0
    %1560 = vmatpush1.msra.mxu0 0.0
    %1561 = vmatprep.subr.mxu0 0.0
    %1562 = vmatpush1.msra.mxu0 0.0
    %1563 = vmatprep.subr.mxu0 0.0
    %1564 = vmatpush1.msra.mxu0 0.0
    %1565 = vmatprep.subr.mxu0 0.0
    %1566 = vmatpush1.msra.mxu0 0.0
    %1567 = vmatprep.subr.mxu0 0.0
    %1568 = vmatpush1.msra.mxu0 0.0
    %1569 = vmatprep.subr.mxu0 0.0
    %1570 = vmatpush1.msra.mxu0 0.0
    %1571 = vmatprep.subr.mxu0 0.0
    %1572 = vmatpush1.msra.mxu0 0.0
    %1573 = vmatprep.subr.mxu0 0.0
    %1574 = vmatpush1.msra.mxu0 0.0
    %1575 = vmatprep.subr.mxu0 0.0
    %1576 = vmatpush1.msra.mxu0 0.0
    %1577 = vmatprep.subr.mxu0 0.0
    %1578 = vmatpush1.msra.mxu0 0.0
    %1579 = vmatprep.subr.mxu0 0.0
    %1580 = vmatpush1.msra.mxu0 0.0
    %1581 = vmatprep.subr.mxu0 0.0
    %1582 = vmatpush1.msra.mxu0 0.0
    %1583 = vmatprep.mubr.f32.mxu0 0.0
    %1584 = vmatmul.mubr.f32.gmra.mrb[0].mxu0 %v1517
    %v1585 = vpop.f32.mrb[0].mxu0
    %v1586 = vadd.f32 0.0, %v1585
    %v1587 = vpop.f32.mrb[0].mxu0
    %1588 = vdwg.mxu0
    %v1589 = vadd.f32 %v1511, %v1586
    %v1590 = vld [vmem:[%s1393] sm:$0x3]
    %s1591 = scalar_lea.vmem %s9, 32
    %v1592 = vld [vmem:[%s1591] sm:$0xff]
    %v1593 = vld [vmem:[%s1591 + $0x8] sm:$0xff]
    %v1594 = vld [vmem:[%s1591 + $0x10] sm:$0xff]
    %v1595 = vld [vmem:[%s1591 + $0x18] sm:$0xff]
    %1596 = vmatprep.subr.mxu0 0.0
    %1597 = vmatpush1.msra.mxu0 %v1592
    %1598 = vmatprep.subr.mxu0 0.0
    %1599 = vmatpush1.msra.mxu0 %v1593
    %1600 = vmatprep.subr.mxu0 0.0
    %1601 = vmatpush1.msra.mxu0 %v1594
    %1602 = vmatprep.subr.mxu0 0.0
    %1603 = vmatpush1.msra.mxu0 %v1595
    %1604 = vmatprep.subr.mxu0 0.0
    %1605 = vmatpush1.msra.mxu0 0.0
    %1606 = vmatprep.subr.mxu0 0.0
    %1607 = vmatpush1.msra.mxu0 0.0
    %1608 = vmatprep.subr.mxu0 0.0
    %1609 = vmatpush1.msra.mxu0 0.0
    %1610 = vmatprep.subr.mxu0 0.0
    %1611 = vmatpush1.msra.mxu0 0.0
    %1612 = vmatprep.subr.mxu0 0.0
    %1613 = vmatpush1.msra.mxu0 0.0
    %1614 = vmatprep.subr.mxu0 0.0
    %1615 = vmatpush1.msra.mxu0 0.0
    %1616 = vmatprep.subr.mxu0 0.0
    %1617 = vmatpush1.msra.mxu0 0.0
    %1618 = vmatprep.subr.mxu0 0.0
    %1619 = vmatpush1.msra.mxu0 0.0
    %1620 = vmatprep.subr.mxu0 0.0
    %1621 = vmatpush1.msra.mxu0 0.0
    %1622 = vmatprep.subr.mxu0 0.0
    %1623 = vmatpush1.msra.mxu0 0.0
    %1624 = vmatprep.subr.mxu0 0.0
    %1625 = vmatpush1.msra.mxu0 0.0
    %1626 = vmatprep.subr.mxu0 0.0
    %1627 = vmatpush1.msra.mxu0 0.0
    %1628 = vmatprep.subr.mxu0 0.0
    %1629 = vmatpush1.msra.mxu0 0.0
    %1630 = vmatprep.subr.mxu0 0.0
    %1631 = vmatpush1.msra.mxu0 0.0
    %1632 = vmatprep.subr.mxu0 0.0
    %1633 = vmatpush1.msra.mxu0 0.0
    %1634 = vmatprep.subr.mxu0 0.0
    %1635 = vmatpush1.msra.mxu0 0.0
    %1636 = vmatprep.subr.mxu0 0.0
    %1637 = vmatpush1.msra.mxu0 0.0
    %1638 = vmatprep.subr.mxu0 0.0
    %1639 = vmatpush1.msra.mxu0 0.0
    %1640 = vmatprep.subr.mxu0 0.0
    %1641 = vmatpush1.msra.mxu0 0.0
    %1642 = vmatprep.subr.mxu0 0.0
    %1643 = vmatpush1.msra.mxu0 0.0
    %1644 = vmatprep.subr.mxu0 0.0
    %1645 = vmatpush1.msra.mxu0 0.0
    %1646 = vmatprep.subr.mxu0 0.0
    %1647 = vmatpush1.msra.mxu0 0.0
    %1648 = vmatprep.subr.mxu0 0.0
    %1649 = vmatpush1.msra.mxu0 0.0
    %1650 = vmatprep.subr.mxu0 0.0
    %1651 = vmatpush1.msra.mxu0 0.0
    %1652 = vmatprep.subr.mxu0 0.0
    %1653 = vmatpush1.msra.mxu0 0.0
    %1654 = vmatprep.subr.mxu0 0.0
    %1655 = vmatpush1.msra.mxu0 0.0
    %1656 = vmatprep.subr.mxu0 0.0
    %1657 = vmatpush1.msra.mxu0 0.0
    %1658 = vmatprep.subr.mxu0 0.0
    %1659 = vmatpush1.msra.mxu0 0.0
    %1660 = vmatprep.mubr.f32.mxu0 0.0
    %1661 = vmatmul.mubr.f32.gmra.mrb[0].mxu0 %v1517
    %v1662 = vpop.f32.mrb[0].mxu0
    %v1663 = vadd.f32 0.0, %v1662
    %v1664 = vpop.f32.mrb[0].mxu0
    %1665 = vdwg.mxu0
    %v1666 = vadd.f32 %v1590, %v1663
    %v1667 = vld [vmem:[%s1455] sm:$0x3]
    %s1668 = scalar_lea.vmem %s9, 64
    %v1669 = vld [vmem:[%s1668] sm:$0xff]
    %v1670 = vld [vmem:[%s1668 + $0x8] sm:$0xff]
    %v1671 = vld [vmem:[%s1668 + $0x10] sm:$0xff]
    %v1672 = vld [vmem:[%s1668 + $0x18] sm:$0xff]
    %1673 = vmatprep.subr.mxu0 0.0
    %1674 = vmatpush1.msra.mxu0 %v1669
    %1675 = vmatprep.subr.mxu0 0.0
    %1676 = vmatpush1.msra.mxu0 %v1670
    %1677 = vmatprep.subr.mxu0 0.0
    %1678 = vmatpush1.msra.mxu0 %v1671
    %1679 = vmatprep.subr.mxu0 0.0
    %1680 = vmatpush1.msra.mxu0 %v1672
    %1681 = vmatprep.subr.mxu0 0.0
    %1682 = vmatpush1.msra.mxu0 0.0
    %1683 = vmatprep.subr.mxu0 0.0
    %1684 = vmatpush1.msra.mxu0 0.0
    %1685 = vmatprep.subr.mxu0 0.0
    %1686 = vmatpush1.msra.mxu0 0.0
    %1687 = vmatprep.subr.mxu0 0.0
    %1688 = vmatpush1.msra.mxu0 0.0
    %1689 = vmatprep.subr.mxu0 0.0
    %1690 = vmatpush1.msra.mxu0 0.0
    %1691 = vmatprep.subr.mxu0 0.0
    %1692 = vmatpush1.msra.mxu0 0.0
    %1693 = vmatprep.subr.mxu0 0.0
    %1694 = vmatpush1.msra.mxu0 0.0
    %1695 = vmatprep.subr.mxu0 0.0
    %1696 = vmatpush1.msra.mxu0 0.0
    %1697 = vmatprep.subr.mxu0 0.0
    %1698 = vmatpush1.msra.mxu0 0.0
    %1699 = vmatprep.subr.mxu0 0.0
    %1700 = vmatpush1.msra.mxu0 0.0
    %1701 = vmatprep.subr.mxu0 0.0
    %1702 = vmatpush1.msra.mxu0 0.0
    %1703 = vmatprep.subr.mxu0 0.0
    %1704 = vmatpush1.msra.mxu0 0.0
    %1705 = vmatprep.subr.mxu0 0.0
    %1706 = vmatpush1.msra.mxu0 0.0
    %1707 = vmatprep.subr.mxu0 0.0
    %1708 = vmatpush1.msra.mxu0 0.0
    %1709 = vmatprep.subr.mxu0 0.0
    %1710 = vmatpush1.msra.mxu0 0.0
    %1711 = vmatprep.subr.mxu0 0.0
    %1712 = vmatpush1.msra.mxu0 0.0
    %1713 = vmatprep.subr.mxu0 0.0
    %1714 = vmatpush1.msra.mxu0 0.0
    %1715 = vmatprep.subr.mxu0 0.0
    %1716 = vmatpush1.msra.mxu0 0.0
    %1717 = vmatprep.subr.mxu0 0.0
    %1718 = vmatpush1.msra.mxu0 0.0
    %1719 = vmatprep.subr.mxu0 0.0
    %1720 = vmatpush1.msra.mxu0 0.0
    %1721 = vmatprep.subr.mxu0 0.0
    %1722 = vmatpush1.msra.mxu0 0.0
    %1723 = vmatprep.subr.mxu0 0.0
    %1724 = vmatpush1.msra.mxu0 0.0
    %1725 = vmatprep.subr.mxu0 0.0
    %1726 = vmatpush1.msra.mxu0 0.0
    %1727 = vmatprep.subr.mxu0 0.0
    %1728 = vmatpush1.msra.mxu0 0.0
    %1729 = vmatprep.subr.mxu0 0.0
    %1730 = vmatpush1.msra.mxu0 0.0
    %1731 = vmatprep.subr.mxu0 0.0
    %1732 = vmatpush1.msra.mxu0 0.0
    %1733 = vmatprep.subr.mxu0 0.0
    %1734 = vmatpush1.msra.mxu0 0.0
    %1735 = vmatprep.subr.mxu0 0.0
    %1736 = vmatpush1.msra.mxu0 0.0
    %1737 = vmatprep.mubr.f32.mxu0 0.0
    %1738 = vmatmul.mubr.f32.gmra.mrb[0].mxu0 %v1517
    %v1739 = vpop.f32.mrb[0].mxu0
    %v1740 = vadd.f32 0.0, %v1739
    %v1741 = vpop.f32.mrb[0].mxu0
    %1742 = vdwg.mxu0
    %v1743 = vadd.f32 %v1667, %v1740
    %v1744 = vld [vmem:[%s1489] sm:$0x3]
    %s1745 = scalar_lea.vmem %s9, 96
    %v1746 = vld [vmem:[%s1745] sm:$0xff]
    %v1747 = vld [vmem:[%s1745 + $0x8] sm:$0xff]
    %v1748 = vld [vmem:[%s1745 + $0x10] sm:$0xff]
    %v1749 = vld [vmem:[%s1745 + $0x18] sm:$0xff]
    %1750 = vmatprep.subr.mxu0 0.0
    %1751 = vmatpush1.msra.mxu0 %v1746
    %1752 = vmatprep.subr.mxu0 0.0
    %1753 = vmatpush1.msra.mxu0 %v1747
    %1754 = vmatprep.subr.mxu0 0.0
    %1755 = vmatpush1.msra.mxu0 %v1748
    %1756 = vmatprep.subr.mxu0 0.0
    %1757 = vmatpush1.msra.mxu0 %v1749
    %1758 = vmatprep.subr.mxu0 0.0
    %1759 = vmatpush1.msra.mxu0 0.0
    %1760 = vmatprep.subr.mxu0 0.0
    %1761 = vmatpush1.msra.mxu0 0.0
    %1762 = vmatprep.subr.mxu0 0.0
    %1763 = vmatpush1.msra.mxu0 0.0
    %1764 = vmatprep.subr.mxu0 0.0
    %1765 = vmatpush1.msra.mxu0 0.0
    %1766 = vmatprep.subr.mxu0 0.0
    %1767 = vmatpush1.msra.mxu0 0.0
    %1768 = vmatprep.subr.mxu0 0.0
    %1769 = vmatpush1.msra.mxu0 0.0
    %1770 = vmatprep.subr.mxu0 0.0
    %1771 = vmatpush1.msra.mxu0 0.0
    %1772 = vmatprep.subr.mxu0 0.0
    %1773 = vmatpush1.msra.mxu0 0.0
    %1774 = vmatprep.subr.mxu0 0.0
    %1775 = vmatpush1.msra.mxu0 0.0
    %1776 = vmatprep.subr.mxu0 0.0
    %1777 = vmatpush1.msra.mxu0 0.0
    %1778 = vmatprep.subr.mxu0 0.0
    %1779 = vmatpush1.msra.mxu0 0.0
    %1780 = vmatprep.subr.mxu0 0.0
    %1781 = vmatpush1.msra.mxu0 0.0
    %1782 = vmatprep.subr.mxu0 0.0
    %1783 = vmatpush1.msra.mxu0 0.0
    %1784 = vmatprep.subr.mxu0 0.0
    %1785 = vmatpush1.msra.mxu0 0.0
    %1786 = vmatprep.subr.mxu0 0.0
    %1787 = vmatpush1.msra.mxu0 0.0
    %1788 = vmatprep.subr.mxu0 0.0
    %1789 = vmatpush1.msra.mxu0 0.0
    %1790 = vmatprep.subr.mxu0 0.0
    %1791 = vmatpush1.msra.mxu0 0.0
    %1792 = vmatprep.subr.mxu0 0.0
    %1793 = vmatpush1.msra.mxu0 0.0
    %1794 = vmatprep.subr.mxu0 0.0
    %1795 = vmatpush1.msra.mxu0 0.0
    %1796 = vmatprep.subr.mxu0 0.0
    %1797 = vmatpush1.msra.mxu0 0.0
    %1798 = vmatprep.subr.mxu0 0.0
    %1799 = vmatpush1.msra.mxu0 0.0
    %1800 = vmatprep.subr.mxu0 0.0
    %1801 = vmatpush1.msra.mxu0 0.0
    %1802 = vmatprep.subr.mxu0 0.0
    %1803 = vmatpush1.msra.mxu0 0.0
    %1804 = vmatprep.subr.mxu0 0.0
    %1805 = vmatpush1.msra.mxu0 0.0
    %1806 = vmatprep.subr.mxu0 0.0
    %1807 = vmatpush1.msra.mxu0 0.0
    %1808 = vmatprep.subr.mxu0 0.0
    %1809 = vmatpush1.msra.mxu0 0.0
    %1810 = vmatprep.subr.mxu0 0.0
    %1811 = vmatpush1.msra.mxu0 0.0
    %1812 = vmatprep.subr.mxu0 0.0
    %1813 = vmatpush1.msra.mxu0 0.0
    %1814 = vmatprep.mubr.f32.mxu0 0.0
    %1815 = vmatmul.mubr.f32.gmra.mrb[0].mxu0 %v1517
    %v1816 = vpop.f32.mrb[0].mxu0
    %v1817 = vadd.f32 0.0, %v1816
    %v1818 = vpop.f32.mrb[0].mxu0
    %1819 = vdwg.mxu0
    %v1820 = vadd.f32 %v1744, %v1817
    %s1821 = scalar_lea.vmem [#allocation3], 6
    %v1822 = vld [vmem:[%s1821] sm:$0x3]
    %v1823 = vld [vmem:[%s10] sm:$0xff]
    %v1824 = vld [vmem:[%s10 + $0x8] sm:$0xff]
    %v1825 = vld [vmem:[%s10 + $0x10] sm:$0xff]
    %v1826 = vld [vmem:[%s10 + $0x18] sm:$0xff]
    %1827 = vmatprep.subr.mxu0 0.0
    %1828 = vmatpush1.msra.mxu0 %v1823
    %1829 = vmatprep.subr.mxu0 0.0
    %1830 = vmatpush1.msra.mxu0 %v1824
    %1831 = vmatprep.subr.mxu0 0.0
    %1832 = vmatpush1.msra.mxu0 %v1825
    %1833 = vmatprep.subr.mxu0 0.0
    %1834 = vmatpush1.msra.mxu0 %v1826
    %1835 = vmatprep.subr.mxu0 0.0
    %1836 = vmatpush1.msra.mxu0 0.0
    %1837 = vmatprep.subr.mxu0 0.0
    %1838 = vmatpush1.msra.mxu0 0.0
    %1839 = vmatprep.subr.mxu0 0.0
    %1840 = vmatpush1.msra.mxu0 0.0
    %1841 = vmatprep.subr.mxu0 0.0
    %1842 = vmatpush1.msra.mxu0 0.0
    %1843 = vmatprep.subr.mxu0 0.0
    %1844 = vmatpush1.msra.mxu0 0.0
    %1845 = vmatprep.subr.mxu0 0.0
    %1846 = vmatpush1.msra.mxu0 0.0
    %1847 = vmatprep.subr.mxu0 0.0
    %1848 = vmatpush1.msra.mxu0 0.0
    %1849 = vmatprep.subr.mxu0 0.0
    %1850 = vmatpush1.msra.mxu0 0.0
    %1851 = vmatprep.subr.mxu0 0.0
    %1852 = vmatpush1.msra.mxu0 0.0
    %1853 = vmatprep.subr.mxu0 0.0
    %1854 = vmatpush1.msra.mxu0 0.0
    %1855 = vmatprep.subr.mxu0 0.0
    %1856 = vmatpush1.msra.mxu0 0.0
    %1857 = vmatprep.subr.mxu0 0.0
    %1858 = vmatpush1.msra.mxu0 0.0
    %1859 = vmatprep.subr.mxu0 0.0
    %1860 = vmatpush1.msra.mxu0 0.0
    %1861 = vmatprep.subr.mxu0 0.0
    %1862 = vmatpush1.msra.mxu0 0.0
    %1863 = vmatprep.subr.mxu0 0.0
    %1864 = vmatpush1.msra.mxu0 0.0
    %1865 = vmatprep.subr.mxu0 0.0
    %1866 = vmatpush1.msra.mxu0 0.0
    %1867 = vmatprep.subr.mxu0 0.0
    %1868 = vmatpush1.msra.mxu0 0.0
    %1869 = vmatprep.subr.mxu0 0.0
    %1870 = vmatpush1.msra.mxu0 0.0
    %1871 = vmatprep.subr.mxu0 0.0
    %1872 = vmatpush1.msra.mxu0 0.0
    %1873 = vmatprep.subr.mxu0 0.0
    %1874 = vmatpush1.msra.mxu0 0.0
    %1875 = vmatprep.subr.mxu0 0.0
    %1876 = vmatpush1.msra.mxu0 0.0
    %1877 = vmatprep.subr.mxu0 0.0
    %1878 = vmatpush1.msra.mxu0 0.0
    %1879 = vmatprep.subr.mxu0 0.0
    %1880 = vmatpush1.msra.mxu0 0.0
    %1881 = vmatprep.subr.mxu0 0.0
    %1882 = vmatpush1.msra.mxu0 0.0
    %1883 = vmatprep.subr.mxu0 0.0
    %1884 = vmatpush1.msra.mxu0 0.0
    %1885 = vmatprep.subr.mxu0 0.0
    %1886 = vmatpush1.msra.mxu0 0.0
    %1887 = vmatprep.subr.mxu0 0.0
    %1888 = vmatpush1.msra.mxu0 0.0
    %1889 = vmatprep.subr.mxu0 0.0
    %1890 = vmatpush1.msra.mxu0 0.0
    %1891 = vmatprep.mubr.f32.mxu0 0.0
    %1892 = vmatmul.mubr.f32.gmra.mrb[0].mxu0 %v1517
    %v1893 = vpop.f32.mrb[0].mxu0
    %v1894 = vadd.f32 0.0, %v1893
    %v1895 = vpop.f32.mrb[0].mxu0
    %1896 = vdwg.mxu0
    %v1897 = vadd.f32 %v1822, %v1894
    %s1898 = scalar_lea.vmem [#allocation3], 14
    %v1899 = vld [vmem:[%s1898] sm:$0x3]
    %s1900 = scalar_lea.vmem %s10, 32
    %v1901 = vld [vmem:[%s1900] sm:$0xff]
    %v1902 = vld [vmem:[%s1900 + $0x8] sm:$0xff]
    %v1903 = vld [vmem:[%s1900 + $0x10] sm:$0xff]
    %v1904 = vld [vmem:[%s1900 + $0x18] sm:$0xff]
    %1905 = vmatprep.subr.mxu0 0.0
    %1906 = vmatpush1.msra.mxu0 %v1901
    %1907 = vmatprep.subr.mxu0 0.0
    %1908 = vmatpush1.msra.mxu0 %v1902
    %1909 = vmatprep.subr.mxu0 0.0
    %1910 = vmatpush1.msra.mxu0 %v1903
    %1911 = vmatprep.subr.mxu0 0.0
    %1912 = vmatpush1.msra.mxu0 %v1904
    %1913 = vmatprep.subr.mxu0 0.0
    %1914 = vmatpush1.msra.mxu0 0.0
    %1915 = vmatprep.subr.mxu0 0.0
    %1916 = vmatpush1.msra.mxu0 0.0
    %1917 = vmatprep.subr.mxu0 0.0
    %1918 = vmatpush1.msra.mxu0 0.0
    %1919 = vmatprep.subr.mxu0 0.0
    %1920 = vmatpush1.msra.mxu0 0.0
    %1921 = vmatprep.subr.mxu0 0.0
    %1922 = vmatpush1.msra.mxu0 0.0
    %1923 = vmatprep.subr.mxu0 0.0
    %1924 = vmatpush1.msra.mxu0 0.0
    %1925 = vmatprep.subr.mxu0 0.0
    %1926 = vmatpush1.msra.mxu0 0.0
    %1927 = vmatprep.subr.mxu0 0.0
    %1928 = vmatpush1.msra.mxu0 0.0
    %1929 = vmatprep.subr.mxu0 0.0
    %1930 = vmatpush1.msra.mxu0 0.0
    %1931 = vmatprep.subr.mxu0 0.0
    %1932 = vmatpush1.msra.mxu0 0.0
    %1933 = vmatprep.subr.mxu0 0.0
    %1934 = vmatpush1.msra.mxu0 0.0
    %1935 = vmatprep.subr.mxu0 0.0
    %1936 = vmatpush1.msra.mxu0 0.0
    %1937 = vmatprep.subr.mxu0 0.0
    %1938 = vmatpush1.msra.mxu0 0.0
    %1939 = vmatprep.subr.mxu0 0.0
    %1940 = vmatpush1.msra.mxu0 0.0
    %1941 = vmatprep.subr.mxu0 0.0
    %1942 = vmatpush1.msra.mxu0 0.0
    %1943 = vmatprep.subr.mxu0 0.0
    %1944 = vmatpush1.msra.mxu0 0.0
    %1945 = vmatprep.subr.mxu0 0.0
    %1946 = vmatpush1.msra.mxu0 0.0
    %1947 = vmatprep.subr.mxu0 0.0
    %1948 = vmatpush1.msra.mxu0 0.0
    %1949 = vmatprep.subr.mxu0 0.0
    %1950 = vmatpush1.msra.mxu0 0.0
    %1951 = vmatprep.subr.mxu0 0.0
    %1952 = vmatpush1.msra.mxu0 0.0
    %1953 = vmatprep.subr.mxu0 0.0
    %1954 = vmatpush1.msra.mxu0 0.0
    %1955 = vmatprep.subr.mxu0 0.0
    %1956 = vmatpush1.msra.mxu0 0.0
    %1957 = vmatprep.subr.mxu0 0.0
    %1958 = vmatpush1.msra.mxu0 0.0
    %1959 = vmatprep.subr.mxu0 0.0
    %1960 = vmatpush1.msra.mxu0 0.0
    %1961 = vmatprep.subr.mxu0 0.0
    %1962 = vmatpush1.msra.mxu0 0.0
    %1963 = vmatprep.subr.mxu0 0.0
    %1964 = vmatpush1.msra.mxu0 0.0
    %1965 = vmatprep.subr.mxu0 0.0
    %1966 = vmatpush1.msra.mxu0 0.0
    %1967 = vmatprep.subr.mxu0 0.0
    %1968 = vmatpush1.msra.mxu0 0.0
    %1969 = vmatprep.mubr.f32.mxu0 0.0
    %1970 = vmatmul.mubr.f32.gmra.mrb[0].mxu0 %v1517
    %v1971 = vpop.f32.mrb[0].mxu0
    %v1972 = vadd.f32 0.0, %v1971
    %v1973 = vpop.f32.mrb[0].mxu0
    %1974 = vdwg.mxu0
    %v1975 = vadd.f32 %v1899, %v1972
    %s1976 = scalar_lea.vmem [#allocation3], 22
    %v1977 = vld [vmem:[%s1976] sm:$0x3]
    %s1978 = scalar_lea.vmem %s10, 64
    %v1979 = vld [vmem:[%s1978] sm:$0xff]
    %v1980 = vld [vmem:[%s1978 + $0x8] sm:$0xff]
    %v1981 = vld [vmem:[%s1978 + $0x10] sm:$0xff]
    %v1982 = vld [vmem:[%s1978 + $0x18] sm:$0xff]
    %1983 = vmatprep.subr.mxu0 0.0
    %1984 = vmatpush1.msra.mxu0 %v1979
    %1985 = vmatprep.subr.mxu0 0.0
    %1986 = vmatpush1.msra.mxu0 %v1980
    %1987 = vmatprep.subr.mxu0 0.0
    %1988 = vmatpush1.msra.mxu0 %v1981
    %1989 = vmatprep.subr.mxu0 0.0
    %1990 = vmatpush1.msra.mxu0 %v1982
    %1991 = vmatprep.subr.mxu0 0.0
    %1992 = vmatpush1.msra.mxu0 0.0
    %1993 = vmatprep.subr.mxu0 0.0
    %1994 = vmatpush1.msra.mxu0 0.0
    %1995 = vmatprep.subr.mxu0 0.0
    %1996 = vmatpush1.msra.mxu0 0.0
    %1997 = vmatprep.subr.mxu0 0.0
    %1998 = vmatpush1.msra.mxu0 0.0
    %1999 = vmatprep.subr.mxu0 0.0
    %2000 = vmatpush1.msra.mxu0 0.0
    %2001 = vmatprep.subr.mxu0 0.0
    %2002 = vmatpush1.msra.mxu0 0.0
    %2003 = vmatprep.subr.mxu0 0.0
    %2004 = vmatpush1.msra.mxu0 0.0
    %2005 = vmatprep.subr.mxu0 0.0
    %2006 = vmatpush1.msra.mxu0 0.0
    %2007 = vmatprep.subr.mxu0 0.0
    %2008 = vmatpush1.msra.mxu0 0.0
    %2009 = vmatprep.subr.mxu0 0.0
    %2010 = vmatpush1.msra.mxu0 0.0
    %2011 = vmatprep.subr.mxu0 0.0
    %2012 = vmatpush1.msra.mxu0 0.0
    %2013 = vmatprep.subr.mxu0 0.0
    %2014 = vmatpush1.msra.mxu0 0.0
    %2015 = vmatprep.subr.mxu0 0.0
    %2016 = vmatpush1.msra.mxu0 0.0
    %2017 = vmatprep.subr.mxu0 0.0
    %2018 = vmatpush1.msra.mxu0 0.0
    %2019 = vmatprep.subr.mxu0 0.0
    %2020 = vmatpush1.msra.mxu0 0.0
    %2021 = vmatprep.subr.mxu0 0.0
    %2022 = vmatpush1.msra.mxu0 0.0
    %2023 = vmatprep.subr.mxu0 0.0
    %2024 = vmatpush1.msra.mxu0 0.0
    %2025 = vmatprep.subr.mxu0 0.0
    %2026 = vmatpush1.msra.mxu0 0.0
    %2027 = vmatprep.subr.mxu0 0.0
    %2028 = vmatpush1.msra.mxu0 0.0
    %2029 = vmatprep.subr.mxu0 0.0
    %2030 = vmatpush1.msra.mxu0 0.0
    %2031 = vmatprep.subr.mxu0 0.0
    %2032 = vmatpush1.msra.mxu0 0.0
    %2033 = vmatprep.subr.mxu0 0.0
    %2034 = vmatpush1.msra.mxu0 0.0
    %2035 = vmatprep.subr.mxu0 0.0
    %2036 = vmatpush1.msra.mxu0 0.0
    %2037 = vmatprep.subr.mxu0 0.0
    %2038 = vmatpush1.msra.mxu0 0.0
    %2039 = vmatprep.subr.mxu0 0.0
    %2040 = vmatpush1.msra.mxu0 0.0
    %2041 = vmatprep.subr.mxu0 0.0
    %2042 = vmatpush1.msra.mxu0 0.0
    %2043 = vmatprep.subr.mxu0 0.0
    %2044 = vmatpush1.msra.mxu0 0.0
    %2045 = vmatprep.subr.mxu0 0.0
    %2046 = vmatpush1.msra.mxu0 0.0
    %2047 = vmatprep.mubr.f32.mxu0 0.0
    %2048 = vmatmul.mubr.f32.gmra.mrb[0].mxu0 %v1517
    %v2049 = vpop.f32.mrb[0].mxu0
    %v2050 = vadd.f32 0.0, %v2049
    %v2051 = vpop.f32.mrb[0].mxu0
    %2052 = vdwg.mxu0
    %v2053 = vadd.f32 %v1977, %v2050
    %s2054 = scalar_lea.vmem [#allocation3], 30
    %v2055 = vld [vmem:[%s2054] sm:$0x3]
    %s2056 = scalar_lea.vmem %s10, 96
    %v2057 = vld [vmem:[%s2056] sm:$0xff]
    %v2058 = vld [vmem:[%s2056 + $0x8] sm:$0xff]
    %v2059 = vld [vmem:[%s2056 + $0x10] sm:$0xff]
    %v2060 = vld [vmem:[%s2056 + $0x18] sm:$0xff]
    %2061 = vmatprep.subr.mxu0 0.0
    %2062 = vmatpush1.msra.mxu0 %v2057
    %2063 = vmatprep.subr.mxu0 0.0
    %2064 = vmatpush1.msra.mxu0 %v2058
    %2065 = vmatprep.subr.mxu0 0.0
    %2066 = vmatpush1.msra.mxu0 %v2059
    %2067 = vmatprep.subr.mxu0 0.0
    %2068 = vmatpush1.msra.mxu0 %v2060
    %2069 = vmatprep.subr.mxu0 0.0
    %2070 = vmatpush1.msra.mxu0 0.0
    %2071 = vmatprep.subr.mxu0 0.0
    %2072 = vmatpush1.msra.mxu0 0.0
    %2073 = vmatprep.subr.mxu0 0.0
    %2074 = vmatpush1.msra.mxu0 0.0
    %2075 = vmatprep.subr.mxu0 0.0
    %2076 = vmatpush1.msra.mxu0 0.0
    %2077 = vmatprep.subr.mxu0 0.0
    %2078 = vmatpush1.msra.mxu0 0.0
    %2079 = vmatprep.subr.mxu0 0.0
    %2080 = vmatpush1.msra.mxu0 0.0
    %2081 = vmatprep.subr.mxu0 0.0
    %2082 = vmatpush1.msra.mxu0 0.0
    %2083 = vmatprep.subr.mxu0 0.0
    %2084 = vmatpush1.msra.mxu0 0.0
    %2085 = vmatprep.subr.mxu0 0.0
    %2086 = vmatpush1.msra.mxu0 0.0
    %2087 = vmatprep.subr.mxu0 0.0
    %2088 = vmatpush1.msra.mxu0 0.0
    %2089 = vmatprep.subr.mxu0 0.0
    %2090 = vmatpush1.msra.mxu0 0.0
    %2091 = vmatprep.subr.mxu0 0.0
    %2092 = vmatpush1.msra.mxu0 0.0
    %2093 = vmatprep.subr.mxu0 0.0
    %2094 = vmatpush1.msra.mxu0 0.0
    %2095 = vmatprep.subr.mxu0 0.0
    %2096 = vmatpush1.msra.mxu0 0.0
    %2097 = vmatprep.subr.mxu0 0.0
    %2098 = vmatpush1.msra.mxu0 0.0
    %2099 = vmatprep.subr.mxu0 0.0
    %2100 = vmatpush1.msra.mxu0 0.0
    %2101 = vmatprep.subr.mxu0 0.0
    %2102 = vmatpush1.msra.mxu0 0.0
    %2103 = vmatprep.subr.mxu0 0.0
    %2104 = vmatpush1.msra.mxu0 0.0
    %2105 = vmatprep.subr.mxu0 0.0
    %2106 = vmatpush1.msra.mxu0 0.0
    %2107 = vmatprep.subr.mxu0 0.0
    %2108 = vmatpush1.msra.mxu0 0.0
    %2109 = vmatprep.subr.mxu0 0.0
    %2110 = vmatpush1.msra.mxu0 0.0
    %2111 = vmatprep.subr.mxu0 0.0
    %2112 = vmatpush1.msra.mxu0 0.0
    %2113 = vmatprep.subr.mxu0 0.0
    %2114 = vmatpush1.msra.mxu0 0.0
    %2115 = vmatprep.subr.mxu0 0.0
    %2116 = vmatpush1.msra.mxu0 0.0
    %2117 = vmatprep.subr.mxu0 0.0
    %2118 = vmatpush1.msra.mxu0 0.0
    %2119 = vmatprep.subr.mxu0 0.0
    %2120 = vmatpush1.msra.mxu0 0.0
    %2121 = vmatprep.subr.mxu0 0.0
    %2122 = vmatpush1.msra.mxu0 0.0
    %2123 = vmatprep.subr.mxu0 0.0
    %2124 = vmatpush1.msra.mxu0 0.0
    %2125 = vmatprep.mubr.f32.mxu0 0.0
    %2126 = vmatmul.mubr.f32.gmra.mrb[0].mxu0 %v1517
    %v2127 = vpop.f32.mrb[0].mxu0
    %v2128 = vadd.f32 0.0, %v2127
    %v2129 = vpop.f32.mrb[0].mxu0
    %2130 = vdwg.mxu0
    %v2131 = vadd.f32 %v2055, %v2128
    %v2133 = vrot.slane %v1666, 6
    %v2136 = vrot.slane %v1820, 4
    %v2139 = vrot.slane %v1897, 2
    %v2142 = vrot.slane %v2131, 6
    %v2144 = vsel %vm527, %v1589, %v2133
    %v2145 = vsel %vm1203, %v2144, %v2136
    %vm2146 = vcmask 1045504
    %v2147 = vsel %vm2146, %v2145, %v2139
    %v2148 = vsel %vm527, %v1975, %v2142
    %v2149 = vxor.u32 %v2147, 2147483648
    %v2150 = vxor.u32 %v2148, 2147483648
    %v2151 = vmul.f32 %v2149, 1.442695
    %v2152 = vpow.pop %v2151
    %v2153 = vmul.f32 %v2150, 1.442695
    %v2154 = vpow.pop %v2153
    %v2155 = vadd.f32 %v2152, 1.0
    %v2156 = vadd.f32 %v2154, 1.0
    %v2157 = vrcp.pop %v2155
    %v2158 = vmul.f32 1.0, %v2157
    %v2159 = vrcp.pop %v2156
    %v2160 = vmul.f32 1.0, %v2159
    %v2162 = vrot.slane %v2053, 6
    %v2164 = vsel %vm527, %v1743, %v2162
    %v2165 = vtanh.pop %v2164
    %v2166 = vmul.f32 %v2158, 0.0
    %v2167 = vmul.f32 %v2158, %v2165
    %v2169 = vrot.slane %v2167, 6
    %v2171 = vadd.f32 %v2166, %v2169
    %v2172 = vmul.f32 %v2160, 0.0
    %v2174 = vrot.slane %v2165, 4
    %v2176 = vmul.f32 %v2158, %v2174
    %v2178 = vrot.slane %v2176, 6
    %v2180 = vadd.f32 %v2172, %v2178
    %v2182 = vrot.slane %v2171, 2
    %v2185 = vrot.slane %v2180, 6
    %v2187 = vsel %vm527, %v2182, %v2185
    %v2188 = vtanh.pop %v2187
    %v2190 = vrot.slane %v2188, 4
    %v2192 = vmul.f32 %v2158, %v2190
    %v2193 = vmul.f32 %v2160, %v2188
    %vm2194 = vcmask 259076
    %2195 = vst.msk [vmem:[#allocation4 - $0x4] sm:$0x30] %vm2194, %v2192
    %s2196 = scalar_lea.vmem [#allocation5], 6
    %vm2197 = vcmask 257026
    %2198 = vst.msk [vmem:[%s2196 - $0x2] sm:$0xc] %vm2197, %v2193
    %s2199 = scalar_lea.vmem [#allocation2], 2
    %v2200 = vld [vmem:[%s2199] sm:$0x3]
    %v2201 = vld [vmem:[%s9] sm:$0xff]
    %v2202 = vld [vmem:[%s9 + $0x8] sm:$0xff]
    %v2203 = vld [vmem:[%s9 + $0x10] sm:$0xff]
    %v2204 = vld [vmem:[%s9 + $0x18] sm:$0xff]
    %v2206 = vrot.slane %v2192, 4
    %v2207 = vsel %vm1225, %v2206, 0
    %2209 = vmatprep.subr.mxu0 0.0
    %2210 = vmatpush1.msra.mxu0 %v2201
    %2211 = vmatprep.subr.mxu0 0.0
    %2212 = vmatpush1.msra.mxu0 %v2202
    %2213 = vmatprep.subr.mxu0 0.0
    %2214 = vmatpush1.msra.mxu0 %v2203
    %2215 = vmatprep.subr.mxu0 0.0
    %2216 = vmatpush1.msra.mxu0 %v2204
    %2217 = vmatprep.subr.mxu0 0.0
    %2218 = vmatpush1.msra.mxu0 0.0
    %2219 = vmatprep.subr.mxu0 0.0
    %2220 = vmatpush1.msra.mxu0 0.0
    %2221 = vmatprep.subr.mxu0 0.0
    %2222 = vmatpush1.msra.mxu0 0.0
    %2223 = vmatprep.subr.mxu0 0.0
    %2224 = vmatpush1.msra.mxu0 0.0
    %2225 = vmatprep.subr.mxu0 0.0
    %2226 = vmatpush1.msra.mxu0 0.0
    %2227 = vmatprep.subr.mxu0 0.0
    %2228 = vmatpush1.msra.mxu0 0.0
    %2229 = vmatprep.subr.mxu0 0.0
    %2230 = vmatpush1.msra.mxu0 0.0
    %2231 = vmatprep.subr.mxu0 0.0
    %2232 = vmatpush1.msra.mxu0 0.0
    %2233 = vmatprep.subr.mxu0 0.0
    %2234 = vmatpush1.msra.mxu0 0.0
    %2235 = vmatprep.subr.mxu0 0.0
    %2236 = vmatpush1.msra.mxu0 0.0
    %2237 = vmatprep.subr.mxu0 0.0
    %2238 = vmatpush1.msra.mxu0 0.0
    %2239 = vmatprep.subr.mxu0 0.0
    %2240 = vmatpush1.msra.mxu0 0.0
    %2241 = vmatprep.subr.mxu0 0.0
    %2242 = vmatpush1.msra.mxu0 0.0
    %2243 = vmatprep.subr.mxu0 0.0
    %2244 = vmatpush1.msra.mxu0 0.0
    %2245 = vmatprep.subr.mxu0 0.0
    %2246 = vmatpush1.msra.mxu0 0.0
    %2247 = vmatprep.subr.mxu0 0.0
    %2248 = vmatpush1.msra.mxu0 0.0
    %2249 = vmatprep.subr.mxu0 0.0
    %2250 = vmatpush1.msra.mxu0 0.0
    %2251 = vmatprep.subr.mxu0 0.0
    %2252 = vmatpush1.msra.mxu0 0.0
    %2253 = vmatprep.subr.mxu0 0.0
    %2254 = vmatpush1.msra.mxu0 0.0
    %2255 = vmatprep.subr.mxu0 0.0
    %2256 = vmatpush1.msra.mxu0 0.0
    %2257 = vmatprep.subr.mxu0 0.0
    %2258 = vmatpush1.msra.mxu0 0.0
    %2259 = vmatprep.subr.mxu0 0.0
    %2260 = vmatpush1.msra.mxu0 0.0
    %2261 = vmatprep.subr.mxu0 0.0
    %2262 = vmatpush1.msra.mxu0 0.0
    %2263 = vmatprep.subr.mxu0 0.0
    %2264 = vmatpush1.msra.mxu0 0.0
    %2265 = vmatprep.subr.mxu0 0.0
    %2266 = vmatpush1.msra.mxu0 0.0
    %2267 = vmatprep.subr.mxu0 0.0
    %2268 = vmatpush1.msra.mxu0 0.0
    %2269 = vmatprep.subr.mxu0 0.0
    %2270 = vmatpush1.msra.mxu0 0.0
    %2271 = vmatprep.subr.mxu0 0.0
    %2272 = vmatpush1.msra.mxu0 0.0
    %2273 = vmatprep.mubr.f32.mxu0 0.0
    %2274 = vmatmul.mubr.f32.gmra.mrb[0].mxu0 %v2207
    %v2275 = vpop.f32.mrb[0].mxu0
    %v2276 = vadd.f32 0.0, %v2275
    %v2277 = vpop.f32.mrb[0].mxu0
    %2278 = vdwg.mxu0
    %v2279 = vadd.f32 %v2200, %v2276
    %s2280 = scalar_lea.vmem [#allocation2], 10
    %v2281 = vld [vmem:[%s2280] sm:$0x3]
    %v2282 = vld [vmem:[%s1591] sm:$0xff]
    %v2283 = vld [vmem:[%s1591 + $0x8] sm:$0xff]
    %v2284 = vld [vmem:[%s1591 + $0x10] sm:$0xff]
    %v2285 = vld [vmem:[%s1591 + $0x18] sm:$0xff]
    %2286 = vmatprep.subr.mxu0 0.0
    %2287 = vmatpush1.msra.mxu0 %v2282
    %2288 = vmatprep.subr.mxu0 0.0
    %2289 = vmatpush1.msra.mxu0 %v2283
    %2290 = vmatprep.subr.mxu0 0.0
    %2291 = vmatpush1.msra.mxu0 %v2284
    %2292 = vmatprep.subr.mxu0 0.0
    %2293 = vmatpush1.msra.mxu0 %v2285
    %2294 = vmatprep.subr.mxu0 0.0
    %2295 = vmatpush1.msra.mxu0 0.0
    %2296 = vmatprep.subr.mxu0 0.0
    %2297 = vmatpush1.msra.mxu0 0.0
    %2298 = vmatprep.subr.mxu0 0.0
    %2299 = vmatpush1.msra.mxu0 0.0
    %2300 = vmatprep.subr.mxu0 0.0
    %2301 = vmatpush1.msra.mxu0 0.0
    %2302 = vmatprep.subr.mxu0 0.0
    %2303 = vmatpush1.msra.mxu0 0.0
    %2304 = vmatprep.subr.mxu0 0.0
    %2305 = vmatpush1.msra.mxu0 0.0
    %2306 = vmatprep.subr.mxu0 0.0
    %2307 = vmatpush1.msra.mxu0 0.0
    %2308 = vmatprep.subr.mxu0 0.0
    %2309 = vmatpush1.msra.mxu0 0.0
    %2310 = vmatprep.subr.mxu0 0.0
    %2311 = vmatpush1.msra.mxu0 0.0
    %2312 = vmatprep.subr.mxu0 0.0
    %2313 = vmatpush1.msra.mxu0 0.0
    %2314 = vmatprep.subr.mxu0 0.0
    %2315 = vmatpush1.msra.mxu0 0.0
    %2316 = vmatprep.subr.mxu0 0.0
    %2317 = vmatpush1.msra.mxu0 0.0
    %2318 = vmatprep.subr.mxu0 0.0
    %2319 = vmatpush1.msra.mxu0 0.0
    %2320 = vmatprep.subr.mxu0 0.0
    %2321 = vmatpush1.msra.mxu0 0.0
    %2322 = vmatprep.subr.mxu0 0.0
    %2323 = vmatpush1.msra.mxu0 0.0
    %2324 = vmatprep.subr.mxu0 0.0
    %2325 = vmatpush1.msra.mxu0 0.0
    %2326 = vmatprep.subr.mxu0 0.0
    %2327 = vmatpush1.msra.mxu0 0.0
    %2328 = vmatprep.subr.mxu0 0.0
    %2329 = vmatpush1.msra.mxu0 0.0
    %2330 = vmatprep.subr.mxu0 0.0
    %2331 = vmatpush1.msra.mxu0 0.0
    %2332 = vmatprep.subr.mxu0 0.0
    %2333 = vmatpush1.msra.mxu0 0.0
    %2334 = vmatprep.subr.mxu0 0.0
    %2335 = vmatpush1.msra.mxu0 0.0
    %2336 = vmatprep.subr.mxu0 0.0
    %2337 = vmatpush1.msra.mxu0 0.0
    %2338 = vmatprep.subr.mxu0 0.0
    %2339 = vmatpush1.msra.mxu0 0.0
    %2340 = vmatprep.subr.mxu0 0.0
    %2341 = vmatpush1.msra.mxu0 0.0
    %2342 = vmatprep.subr.mxu0 0.0
    %2343 = vmatpush1.msra.mxu0 0.0
    %2344 = vmatprep.subr.mxu0 0.0
    %2345 = vmatpush1.msra.mxu0 0.0
    %2346 = vmatprep.subr.mxu0 0.0
    %2347 = vmatpush1.msra.mxu0 0.0
    %2348 = vmatprep.subr.mxu0 0.0
    %2349 = vmatpush1.msra.mxu0 0.0
    %2350 = vmatprep.mubr.f32.mxu0 0.0
    %2351 = vmatmul.mubr.f32.gmra.mrb[0].mxu0 %v2207
    %v2352 = vpop.f32.mrb[0].mxu0
    %v2353 = vadd.f32 0.0, %v2352
    %v2354 = vpop.f32.mrb[0].mxu0
    %2355 = vdwg.mxu0
    %v2356 = vadd.f32 %v2281, %v2353
    %s2357 = scalar_lea.vmem [#allocation2], 18
    %v2358 = vld [vmem:[%s2357] sm:$0x3]
    %v2359 = vld [vmem:[%s1668] sm:$0xff]
    %v2360 = vld [vmem:[%s1668 + $0x8] sm:$0xff]
    %v2361 = vld [vmem:[%s1668 + $0x10] sm:$0xff]
    %v2362 = vld [vmem:[%s1668 + $0x18] sm:$0xff]
    %2363 = vmatprep.subr.mxu0 0.0
    %2364 = vmatpush1.msra.mxu0 %v2359
    %2365 = vmatprep.subr.mxu0 0.0
    %2366 = vmatpush1.msra.mxu0 %v2360
    %2367 = vmatprep.subr.mxu0 0.0
    %2368 = vmatpush1.msra.mxu0 %v2361
    %2369 = vmatprep.subr.mxu0 0.0
    %2370 = vmatpush1.msra.mxu0 %v2362
    %2371 = vmatprep.subr.mxu0 0.0
    %2372 = vmatpush1.msra.mxu0 0.0
    %2373 = vmatprep.subr.mxu0 0.0
    %2374 = vmatpush1.msra.mxu0 0.0
    %2375 = vmatprep.subr.mxu0 0.0
    %2376 = vmatpush1.msra.mxu0 0.0
    %2377 = vmatprep.subr.mxu0 0.0
    %2378 = vmatpush1.msra.mxu0 0.0
    %2379 = vmatprep.subr.mxu0 0.0
    %2380 = vmatpush1.msra.mxu0 0.0
    %2381 = vmatprep.subr.mxu0 0.0
    %2382 = vmatpush1.msra.mxu0 0.0
    %2383 = vmatprep.subr.mxu0 0.0
    %2384 = vmatpush1.msra.mxu0 0.0
    %2385 = vmatprep.subr.mxu0 0.0
    %2386 = vmatpush1.msra.mxu0 0.0
    %2387 = vmatprep.subr.mxu0 0.0
    %2388 = vmatpush1.msra.mxu0 0.0
    %2389 = vmatprep.subr.mxu0 0.0
    %2390 = vmatpush1.msra.mxu0 0.0
    %2391 = vmatprep.subr.mxu0 0.0
    %2392 = vmatpush1.msra.mxu0 0.0
    %2393 = vmatprep.subr.mxu0 0.0
    %2394 = vmatpush1.msra.mxu0 0.0
    %2395 = vmatprep.subr.mxu0 0.0
    %2396 = vmatpush1.msra.mxu0 0.0
    %2397 = vmatprep.subr.mxu0 0.0
    %2398 = vmatpush1.msra.mxu0 0.0
    %2399 = vmatprep.subr.mxu0 0.0
    %2400 = vmatpush1.msra.mxu0 0.0
    %2401 = vmatprep.subr.mxu0 0.0
    %2402 = vmatpush1.msra.mxu0 0.0
    %2403 = vmatprep.subr.mxu0 0.0
    %2404 = vmatpush1.msra.mxu0 0.0
    %2405 = vmatprep.subr.mxu0 0.0
    %2406 = vmatpush1.msra.mxu0 0.0
    %2407 = vmatprep.subr.mxu0 0.0
    %2408 = vmatpush1.msra.mxu0 0.0
    %2409 = vmatprep.subr.mxu0 0.0
    %2410 = vmatpush1.msra.mxu0 0.0
    %2411 = vmatprep.subr.mxu0 0.0
    %2412 = vmatpush1.msra.mxu0 0.0
    %2413 = vmatprep.subr.mxu0 0.0
    %2414 = vmatpush1.msra.mxu0 0.0
    %2415 = vmatprep.subr.mxu0 0.0
    %2416 = vmatpush1.msra.mxu0 0.0
    %2417 = vmatprep.subr.mxu0 0.0
    %2418 = vmatpush1.msra.mxu0 0.0
    %2419 = vmatprep.subr.mxu0 0.0
    %2420 = vmatpush1.msra.mxu0 0.0
    %2421 = vmatprep.subr.mxu0 0.0
    %2422 = vmatpush1.msra.mxu0 0.0
    %2423 = vmatprep.subr.mxu0 0.0
    %2424 = vmatpush1.msra.mxu0 0.0
    %2425 = vmatprep.subr.mxu0 0.0
    %2426 = vmatpush1.msra.mxu0 0.0
    %2427 = vmatprep.mubr.f32.mxu0 0.0
    %2428 = vmatmul.mubr.f32.gmra.mrb[0].mxu0 %v2207
    %v2429 = vpop.f32.mrb[0].mxu0
    %v2430 = vadd.f32 0.0, %v2429
    %v2431 = vpop.f32.mrb[0].mxu0
    %2432 = vdwg.mxu0
    %v2433 = vadd.f32 %v2358, %v2430
    %s2434 = scalar_lea.vmem [#allocation2], 26
    %v2435 = vld [vmem:[%s2434] sm:$0x3]
    %v2436 = vld [vmem:[%s1745] sm:$0xff]
    %v2437 = vld [vmem:[%s1745 + $0x8] sm:$0xff]
    %v2438 = vld [vmem:[%s1745 + $0x10] sm:$0xff]
    %v2439 = vld [vmem:[%s1745 + $0x18] sm:$0xff]
    %2440 = vmatprep.subr.mxu0 0.0
    %2441 = vmatpush1.msra.mxu0 %v2436
    %2442 = vmatprep.subr.mxu0 0.0
    %2443 = vmatpush1.msra.mxu0 %v2437
    %2444 = vmatprep.subr.mxu0 0.0
    %2445 = vmatpush1.msra.mxu0 %v2438
    %2446 = vmatprep.subr.mxu0 0.0
    %2447 = vmatpush1.msra.mxu0 %v2439
    %2448 = vmatprep.subr.mxu0 0.0
    %2449 = vmatpush1.msra.mxu0 0.0
    %2450 = vmatprep.subr.mxu0 0.0
    %2451 = vmatpush1.msra.mxu0 0.0
    %2452 = vmatprep.subr.mxu0 0.0
    %2453 = vmatpush1.msra.mxu0 0.0
    %2454 = vmatprep.subr.mxu0 0.0
    %2455 = vmatpush1.msra.mxu0 0.0
    %2456 = vmatprep.subr.mxu0 0.0
    %2457 = vmatpush1.msra.mxu0 0.0
    %2458 = vmatprep.subr.mxu0 0.0
    %2459 = vmatpush1.msra.mxu0 0.0
    %2460 = vmatprep.subr.mxu0 0.0
    %2461 = vmatpush1.msra.mxu0 0.0
    %2462 = vmatprep.subr.mxu0 0.0
    %2463 = vmatpush1.msra.mxu0 0.0
    %2464 = vmatprep.subr.mxu0 0.0
    %2465 = vmatpush1.msra.mxu0 0.0
    %2466 = vmatprep.subr.mxu0 0.0
    %2467 = vmatpush1.msra.mxu0 0.0
    %2468 = vmatprep.subr.mxu0 0.0
    %2469 = vmatpush1.msra.mxu0 0.0
    %2470 = vmatprep.subr.mxu0 0.0
    %2471 = vmatpush1.msra.mxu0 0.0
    %2472 = vmatprep.subr.mxu0 0.0
    %2473 = vmatpush1.msra.mxu0 0.0
    %2474 = vmatprep.subr.mxu0 0.0
    %2475 = vmatpush1.msra.mxu0 0.0
    %2476 = vmatprep.subr.mxu0 0.0
    %2477 = vmatpush1.msra.mxu0 0.0
    %2478 = vmatprep.subr.mxu0 0.0
    %2479 = vmatpush1.msra.mxu0 0.0
    %2480 = vmatprep.subr.mxu0 0.0
    %2481 = vmatpush1.msra.mxu0 0.0
    %2482 = vmatprep.subr.mxu0 0.0
    %2483 = vmatpush1.msra.mxu0 0.0
    %2484 = vmatprep.subr.mxu0 0.0
    %2485 = vmatpush1.msra.mxu0 0.0
    %2486 = vmatprep.subr.mxu0 0.0
    %2487 = vmatpush1.msra.mxu0 0.0
    %2488 = vmatprep.subr.mxu0 0.0
    %2489 = vmatpush1.msra.mxu0 0.0
    %2490 = vmatprep.subr.mxu0 0.0
    %2491 = vmatpush1.msra.mxu0 0.0
    %2492 = vmatprep.subr.mxu0 0.0
    %2493 = vmatpush1.msra.mxu0 0.0
    %2494 = vmatprep.subr.mxu0 0.0
    %2495 = vmatpush1.msra.mxu0 0.0
    %2496 = vmatprep.subr.mxu0 0.0
    %2497 = vmatpush1.msra.mxu0 0.0
    %2498 = vmatprep.subr.mxu0 0.0
    %2499 = vmatpush1.msra.mxu0 0.0
    %2500 = vmatprep.subr.mxu0 0.0
    %2501 = vmatpush1.msra.mxu0 0.0
    %2502 = vmatprep.subr.mxu0 0.0
    %2503 = vmatpush1.msra.mxu0 0.0
    %2504 = vmatprep.mubr.f32.mxu0 0.0
    %2505 = vmatmul.mubr.f32.gmra.mrb[0].mxu0 %v2207
    %v2506 = vpop.f32.mrb[0].mxu0
    %v2507 = vadd.f32 0.0, %v2506
    %v2508 = vpop.f32.mrb[0].mxu0
    %2509 = vdwg.mxu0
    %v2510 = vadd.f32 %v2435, %v2507
    %s2511 = scalar_lea.vmem [#allocation3], 4
    %v2512 = vld [vmem:[%s2511] sm:$0x3]
    %v2513 = vld [vmem:[%s10] sm:$0xff]
    %v2514 = vld [vmem:[%s10 + $0x8] sm:$0xff]
    %v2515 = vld [vmem:[%s10 + $0x10] sm:$0xff]
    %v2516 = vld [vmem:[%s10 + $0x18] sm:$0xff]
    %v2518 = vrot.slane %v2193, 2
    %v2519 = vsel %vm1225, %v2518, 0
    %2521 = vmatprep.subr.mxu0 0.0
    %2522 = vmatpush1.msra.mxu0 %v2513
    %2523 = vmatprep.subr.mxu0 0.0
    %2524 = vmatpush1.msra.mxu0 %v2514
    %2525 = vmatprep.subr.mxu0 0.0
    %2526 = vmatpush1.msra.mxu0 %v2515
    %2527 = vmatprep.subr.mxu0 0.0
    %2528 = vmatpush1.msra.mxu0 %v2516
    %2529 = vmatprep.subr.mxu0 0.0
    %2530 = vmatpush1.msra.mxu0 0.0
    %2531 = vmatprep.subr.mxu0 0.0
    %2532 = vmatpush1.msra.mxu0 0.0
    %2533 = vmatprep.subr.mxu0 0.0
    %2534 = vmatpush1.msra.mxu0 0.0
    %2535 = vmatprep.subr.mxu0 0.0
    %2536 = vmatpush1.msra.mxu0 0.0
    %2537 = vmatprep.subr.mxu0 0.0
    %2538 = vmatpush1.msra.mxu0 0.0
    %2539 = vmatprep.subr.mxu0 0.0
    %2540 = vmatpush1.msra.mxu0 0.0
    %2541 = vmatprep.subr.mxu0 0.0
    %2542 = vmatpush1.msra.mxu0 0.0
    %2543 = vmatprep.subr.mxu0 0.0
    %2544 = vmatpush1.msra.mxu0 0.0
    %2545 = vmatprep.subr.mxu0 0.0
    %2546 = vmatpush1.msra.mxu0 0.0
    %2547 = vmatprep.subr.mxu0 0.0
    %2548 = vmatpush1.msra.mxu0 0.0
    %2549 = vmatprep.subr.mxu0 0.0
    %2550 = vmatpush1.msra.mxu0 0.0
    %2551 = vmatprep.subr.mxu0 0.0
    %2552 = vmatpush1.msra.mxu0 0.0
    %2553 = vmatprep.subr.mxu0 0.0
    %2554 = vmatpush1.msra.mxu0 0.0
    %2555 = vmatprep.subr.mxu0 0.0
    %2556 = vmatpush1.msra.mxu0 0.0
    %2557 = vmatprep.subr.mxu0 0.0
    %2558 = vmatpush1.msra.mxu0 0.0
    %2559 = vmatprep.subr.mxu0 0.0
    %2560 = vmatpush1.msra.mxu0 0.0
    %2561 = vmatprep.subr.mxu0 0.0
    %2562 = vmatpush1.msra.mxu0 0.0
    %2563 = vmatprep.subr.mxu0 0.0
    %2564 = vmatpush1.msra.mxu0 0.0
    %2565 = vmatprep.subr.mxu0 0.0
    %2566 = vmatpush1.msra.mxu0 0.0
    %2567 = vmatprep.subr.mxu0 0.0
    %2568 = vmatpush1.msra.mxu0 0.0
    %2569 = vmatprep.subr.mxu0 0.0
    %2570 = vmatpush1.msra.mxu0 0.0
    %2571 = vmatprep.subr.mxu0 0.0
    %2572 = vmatpush1.msra.mxu0 0.0
    %2573 = vmatprep.subr.mxu0 0.0
    %2574 = vmatpush1.msra.mxu0 0.0
    %2575 = vmatprep.subr.mxu0 0.0
    %2576 = vmatpush1.msra.mxu0 0.0
    %2577 = vmatprep.subr.mxu0 0.0
    %2578 = vmatpush1.msra.mxu0 0.0
    %2579 = vmatprep.subr.mxu0 0.0
    %2580 = vmatpush1.msra.mxu0 0.0
    %2581 = vmatprep.subr.mxu0 0.0
    %2582 = vmatpush1.msra.mxu0 0.0
    %2583 = vmatprep.subr.mxu0 0.0
    %2584 = vmatpush1.msra.mxu0 0.0
    %2585 = vmatprep.mubr.f32.mxu0 0.0
    %2586 = vmatmul.mubr.f32.gmra.mrb[0].mxu0 %v2519
    %v2587 = vpop.f32.mrb[0].mxu0
    %v2588 = vadd.f32 0.0, %v2587
    %v2589 = vpop.f32.mrb[0].mxu0
    %2590 = vdwg.mxu0
    %v2591 = vadd.f32 %v2512, %v2588
    %s2592 = scalar_lea.vmem [#allocation3], 12
    %v2593 = vld [vmem:[%s2592] sm:$0x3]
    %v2594 = vld [vmem:[%s1900] sm:$0xff]
    %v2595 = vld [vmem:[%s1900 + $0x8] sm:$0xff]
    %v2596 = vld [vmem:[%s1900 + $0x10] sm:$0xff]
    %v2597 = vld [vmem:[%s1900 + $0x18] sm:$0xff]
    %2598 = vmatprep.subr.mxu0 0.0
    %2599 = vmatpush1.msra.mxu0 %v2594
    %2600 = vmatprep.subr.mxu0 0.0
    %2601 = vmatpush1.msra.mxu0 %v2595
    %2602 = vmatprep.subr.mxu0 0.0
    %2603 = vmatpush1.msra.mxu0 %v2596
    %2604 = vmatprep.subr.mxu0 0.0
    %2605 = vmatpush1.msra.mxu0 %v2597
    %2606 = vmatprep.subr.mxu0 0.0
    %2607 = vmatpush1.msra.mxu0 0.0
    %2608 = vmatprep.subr.mxu0 0.0
    %2609 = vmatpush1.msra.mxu0 0.0
    %2610 = vmatprep.subr.mxu0 0.0
    %2611 = vmatpush1.msra.mxu0 0.0
    %2612 = vmatprep.subr.mxu0 0.0
    %2613 = vmatpush1.msra.mxu0 0.0
    %2614 = vmatprep.subr.mxu0 0.0
    %2615 = vmatpush1.msra.mxu0 0.0
    %2616 = vmatprep.subr.mxu0 0.0
    %2617 = vmatpush1.msra.mxu0 0.0
    %2618 = vmatprep.subr.mxu0 0.0
    %2619 = vmatpush1.msra.mxu0 0.0
    %2620 = vmatprep.subr.mxu0 0.0
    %2621 = vmatpush1.msra.mxu0 0.0
    %2622 = vmatprep.subr.mxu0 0.0
    %2623 = vmatpush1.msra.mxu0 0.0
    %2624 = vmatprep.subr.mxu0 0.0
    %2625 = vmatpush1.msra.mxu0 0.0
    %2626 = vmatprep.subr.mxu0 0.0
    %2627 = vmatpush1.msra.mxu0 0.0
    %2628 = vmatprep.subr.mxu0 0.0
    %2629 = vmatpush1.msra.mxu0 0.0
    %2630 = vmatprep.subr.mxu0 0.0
    %2631 = vmatpush1.msra.mxu0 0.0
    %2632 = vmatprep.subr.mxu0 0.0
    %2633 = vmatpush1.msra.mxu0 0.0
    %2634 = vmatprep.subr.mxu0 0.0
    %2635 = vmatpush1.msra.mxu0 0.0
    %2636 = vmatprep.subr.mxu0 0.0
    %2637 = vmatpush1.msra.mxu0 0.0
    %2638 = vmatprep.subr.mxu0 0.0
    %2639 = vmatpush1.msra.mxu0 0.0
    %2640 = vmatprep.subr.mxu0 0.0
    %2641 = vmatpush1.msra.mxu0 0.0
    %2642 = vmatprep.subr.mxu0 0.0
    %2643 = vmatpush1.msra.mxu0 0.0
    %2644 = vmatprep.subr.mxu0 0.0
    %2645 = vmatpush1.msra.mxu0 0.0
    %2646 = vmatprep.subr.mxu0 0.0
    %2647 = vmatpush1.msra.mxu0 0.0
    %2648 = vmatprep.subr.mxu0 0.0
    %2649 = vmatpush1.msra.mxu0 0.0
    %2650 = vmatprep.subr.mxu0 0.0
    %2651 = vmatpush1.msra.mxu0 0.0
    %2652 = vmatprep.subr.mxu0 0.0
    %2653 = vmatpush1.msra.mxu0 0.0
    %2654 = vmatprep.subr.mxu0 0.0
    %2655 = vmatpush1.msra.mxu0 0.0
    %2656 = vmatprep.subr.mxu0 0.0
    %2657 = vmatpush1.msra.mxu0 0.0
    %2658 = vmatprep.subr.mxu0 0.0
    %2659 = vmatpush1.msra.mxu0 0.0
    %2660 = vmatprep.subr.mxu0 0.0
    %2661 = vmatpush1.msra.mxu0 0.0
    %2662 = vmatprep.mubr.f32.mxu0 0.0
    %2663 = vmatmul.mubr.f32.gmra.mrb[0].mxu0 %v2519
    %v2664 = vpop.f32.mrb[0].mxu0
    %v2665 = vadd.f32 0.0, %v2664
    %v2666 = vpop.f32.mrb[0].mxu0
    %2667 = vdwg.mxu0
    %v2668 = vadd.f32 %v2593, %v2665
    %s2669 = scalar_lea.vmem [#allocation3], 20
    %v2670 = vld [vmem:[%s2669] sm:$0x3]
    %v2671 = vld [vmem:[%s1978] sm:$0xff]
    %v2672 = vld [vmem:[%s1978 + $0x8] sm:$0xff]
    %v2673 = vld [vmem:[%s1978 + $0x10] sm:$0xff]
    %v2674 = vld [vmem:[%s1978 + $0x18] sm:$0xff]
    %2675 = vmatprep.subr.mxu0 0.0
    %2676 = vmatpush1.msra.mxu0 %v2671
    %2677 = vmatprep.subr.mxu0 0.0
    %2678 = vmatpush1.msra.mxu0 %v2672
    %2679 = vmatprep.subr.mxu0 0.0
    %2680 = vmatpush1.msra.mxu0 %v2673
    %2681 = vmatprep.subr.mxu0 0.0
    %2682 = vmatpush1.msra.mxu0 %v2674
    %2683 = vmatprep.subr.mxu0 0.0
    %2684 = vmatpush1.msra.mxu0 0.0
    %2685 = vmatprep.subr.mxu0 0.0
    %2686 = vmatpush1.msra.mxu0 0.0
    %2687 = vmatprep.subr.mxu0 0.0
    %2688 = vmatpush1.msra.mxu0 0.0
    %2689 = vmatprep.subr.mxu0 0.0
    %2690 = vmatpush1.msra.mxu0 0.0
    %2691 = vmatprep.subr.mxu0 0.0
    %2692 = vmatpush1.msra.mxu0 0.0
    %2693 = vmatprep.subr.mxu0 0.0
    %2694 = vmatpush1.msra.mxu0 0.0
    %2695 = vmatprep.subr.mxu0 0.0
    %2696 = vmatpush1.msra.mxu0 0.0
    %2697 = vmatprep.subr.mxu0 0.0
    %2698 = vmatpush1.msra.mxu0 0.0
    %2699 = vmatprep.subr.mxu0 0.0
    %2700 = vmatpush1.msra.mxu0 0.0
    %2701 = vmatprep.subr.mxu0 0.0
    %2702 = vmatpush1.msra.mxu0 0.0
    %2703 = vmatprep.subr.mxu0 0.0
    %2704 = vmatpush1.msra.mxu0 0.0
    %2705 = vmatprep.subr.mxu0 0.0
    %2706 = vmatpush1.msra.mxu0 0.0
    %2707 = vmatprep.subr.mxu0 0.0
    %2708 = vmatpush1.msra.mxu0 0.0
    %2709 = vmatprep.subr.mxu0 0.0
    %2710 = vmatpush1.msra.mxu0 0.0
    %2711 = vmatprep.subr.mxu0 0.0
    %2712 = vmatpush1.msra.mxu0 0.0
    %2713 = vmatprep.subr.mxu0 0.0
    %2714 = vmatpush1.msra.mxu0 0.0
    %2715 = vmatprep.subr.mxu0 0.0
    %2716 = vmatpush1.msra.mxu0 0.0
    %2717 = vmatprep.subr.mxu0 0.0
    %2718 = vmatpush1.msra.mxu0 0.0
    %2719 = vmatprep.subr.mxu0 0.0
    %2720 = vmatpush1.msra.mxu0 0.0
    %2721 = vmatprep.subr.mxu0 0.0
    %2722 = vmatpush1.msra.mxu0 0.0
    %2723 = vmatprep.subr.mxu0 0.0
    %2724 = vmatpush1.msra.mxu0 0.0
    %2725 = vmatprep.subr.mxu0 0.0
    %2726 = vmatpush1.msra.mxu0 0.0
    %2727 = vmatprep.subr.mxu0 0.0
    %2728 = vmatpush1.msra.mxu0 0.0
    %2729 = vmatprep.subr.mxu0 0.0
    %2730 = vmatpush1.msra.mxu0 0.0
    %2731 = vmatprep.subr.mxu0 0.0
    %2732 = vmatpush1.msra.mxu0 0.0
    %2733 = vmatprep.subr.mxu0 0.0
    %2734 = vmatpush1.msra.mxu0 0.0
    %2735 = vmatprep.subr.mxu0 0.0
    %2736 = vmatpush1.msra.mxu0 0.0
    %2737 = vmatprep.subr.mxu0 0.0
    %2738 = vmatpush1.msra.mxu0 0.0
    %2739 = vmatprep.mubr.f32.mxu0 0.0
    %2740 = vmatmul.mubr.f32.gmra.mrb[0].mxu0 %v2519
    %v2741 = vpop.f32.mrb[0].mxu0
    %v2742 = vadd.f32 0.0, %v2741
    %v2743 = vpop.f32.mrb[0].mxu0
    %2744 = vdwg.mxu0
    %v2745 = vadd.f32 %v2670, %v2742
    %s2746 = scalar_lea.vmem [#allocation3], 28
    %v2747 = vld [vmem:[%s2746] sm:$0x3]
    %v2748 = vld [vmem:[%s2056] sm:$0xff]
    %v2749 = vld [vmem:[%s2056 + $0x8] sm:$0xff]
    %v2750 = vld [vmem:[%s2056 + $0x10] sm:$0xff]
    %v2751 = vld [vmem:[%s2056 + $0x18] sm:$0xff]
    %2752 = vmatprep.subr.mxu0 0.0
    %2753 = vmatpush1.msra.mxu0 %v2748
    %2754 = vmatprep.subr.mxu0 0.0
    %2755 = vmatpush1.msra.mxu0 %v2749
    %2756 = vmatprep.subr.mxu0 0.0
    %2757 = vmatpush1.msra.mxu0 %v2750
    %2758 = vmatprep.subr.mxu0 0.0
    %2759 = vmatpush1.msra.mxu0 %v2751
    %2760 = vmatprep.subr.mxu0 0.0
    %2761 = vmatpush1.msra.mxu0 0.0
    %2762 = vmatprep.subr.mxu0 0.0
    %2763 = vmatpush1.msra.mxu0 0.0
    %2764 = vmatprep.subr.mxu0 0.0
    %2765 = vmatpush1.msra.mxu0 0.0
    %2766 = vmatprep.subr.mxu0 0.0
    %2767 = vmatpush1.msra.mxu0 0.0
    %2768 = vmatprep.subr.mxu0 0.0
    %2769 = vmatpush1.msra.mxu0 0.0
    %2770 = vmatprep.subr.mxu0 0.0
    %2771 = vmatpush1.msra.mxu0 0.0
    %2772 = vmatprep.subr.mxu0 0.0
    %2773 = vmatpush1.msra.mxu0 0.0
    %2774 = vmatprep.subr.mxu0 0.0
    %2775 = vmatpush1.msra.mxu0 0.0
    %2776 = vmatprep.subr.mxu0 0.0
    %2777 = vmatpush1.msra.mxu0 0.0
    %2778 = vmatprep.subr.mxu0 0.0
    %2779 = vmatpush1.msra.mxu0 0.0
    %2780 = vmatprep.subr.mxu0 0.0
    %2781 = vmatpush1.msra.mxu0 0.0
    %2782 = vmatprep.subr.mxu0 0.0
    %2783 = vmatpush1.msra.mxu0 0.0
    %2784 = vmatprep.subr.mxu0 0.0
    %2785 = vmatpush1.msra.mxu0 0.0
    %2786 = vmatprep.subr.mxu0 0.0
    %2787 = vmatpush1.msra.mxu0 0.0
    %2788 = vmatprep.subr.mxu0 0.0
    %2789 = vmatpush1.msra.mxu0 0.0
    %2790 = vmatprep.subr.mxu0 0.0
    %2791 = vmatpush1.msra.mxu0 0.0
    %2792 = vmatprep.subr.mxu0 0.0
    %2793 = vmatpush1.msra.mxu0 0.0
    %2794 = vmatprep.subr.mxu0 0.0
    %2795 = vmatpush1.msra.mxu0 0.0
    %2796 = vmatprep.subr.mxu0 0.0
    %2797 = vmatpush1.msra.mxu0 0.0
    %2798 = vmatprep.subr.mxu0 0.0
    %2799 = vmatpush1.msra.mxu0 0.0
    %2800 = vmatprep.subr.mxu0 0.0
    %2801 = vmatpush1.msra.mxu0 0.0
    %2802 = vmatprep.subr.mxu0 0.0
    %2803 = vmatpush1.msra.mxu0 0.0
    %2804 = vmatprep.subr.mxu0 0.0
    %2805 = vmatpush1.msra.mxu0 0.0
    %2806 = vmatprep.subr.mxu0 0.0
    %2807 = vmatpush1.msra.mxu0 0.0
    %2808 = vmatprep.subr.mxu0 0.0
    %2809 = vmatpush1.msra.mxu0 0.0
    %2810 = vmatprep.subr.mxu0 0.0
    %2811 = vmatpush1.msra.mxu0 0.0
    %2812 = vmatprep.subr.mxu0 0.0
    %2813 = vmatpush1.msra.mxu0 0.0
    %2814 = vmatprep.subr.mxu0 0.0
    %2815 = vmatpush1.msra.mxu0 0.0
    %2816 = vmatprep.mubr.f32.mxu0 0.0
    %2817 = vmatmul.mubr.f32.gmra.mrb[0].mxu0 %v2519
    %v2818 = vpop.f32.mrb[0].mxu0
    %v2819 = vadd.f32 0.0, %v2818
    %v2820 = vpop.f32.mrb[0].mxu0
    %2821 = vdwg.mxu0
    %v2822 = vadd.f32 %v2747, %v2819
    %v2824 = vrot.slane %v2356, 6
    %v2827 = vrot.slane %v2510, 4
    %v2830 = vrot.slane %v2591, 2
    %v2833 = vrot.slane %v2822, 6
    %v2835 = vsel %vm527, %v2279, %v2824
    %v2836 = vsel %vm1203, %v2835, %v2827
    %v2837 = vsel %vm2146, %v2836, %v2830
    %v2838 = vsel %vm527, %v2668, %v2833
    %v2839 = vxor.u32 %v2837, 2147483648
    %v2840 = vxor.u32 %v2838, 2147483648
    %v2841 = vmul.f32 %v2839, 1.442695
    %v2842 = vpow.pop %v2841
    %v2843 = vmul.f32 %v2840, 1.442695
    %v2844 = vpow.pop %v2843
    %v2845 = vadd.f32 %v2842, 1.0
    %v2846 = vadd.f32 %v2844, 1.0
    %v2847 = vrcp.pop %v2845
    %v2848 = vmul.f32 1.0, %v2847
    %v2849 = vrcp.pop %v2846
    %v2850 = vmul.f32 1.0, %v2849
    %v2852 = vrot.slane %v2745, 6
    %v2854 = vsel %vm527, %v2433, %v2852
    %v2855 = vtanh.pop %v2854
    %v2856 = vmul.f32 %v2848, %v2171
    %v2857 = vmul.f32 %v2848, %v2855
    %v2859 = vrot.slane %v2857, 6
    %v2861 = vadd.f32 %v2856, %v2859
    %v2862 = vmul.f32 %v2850, %v2180
    %v2864 = vrot.slane %v2855, 4
    %v2866 = vmul.f32 %v2848, %v2864
    %v2868 = vrot.slane %v2866, 6
    %v2870 = vadd.f32 %v2862, %v2868
    %v2872 = vrot.slane %v2861, 2
    %v2875 = vrot.slane %v2870, 6
    %v2877 = vsel %vm527, %v2872, %v2875
    %v2878 = vtanh.pop %v2877
    %v2880 = vrot.slane %v2878, 4
    %v2882 = vmul.f32 %v2848, %v2880
    %v2883 = vmul.f32 %v2850, %v2878
    %s2884 = scalar_lea.vmem [#allocation4], 2
    %2885 = vst.msk [vmem:[%s2884 - $0x4] sm:$0x30] %vm2194, %v2882
    %s2886 = scalar_lea.vmem [#allocation5], 4
    %2887 = vst.msk [vmem:[%s2886 - $0x2] sm:$0xc] %vm2197, %v2883
    %s2888 = scalar_lea.vmem [#allocation2], 4
    %v2889 = vld [vmem:[%s2888] sm:$0x3]
    %v2890 = vld [vmem:[%s9] sm:$0xff]
    %v2891 = vld [vmem:[%s9 + $0x8] sm:$0xff]
    %v2892 = vld [vmem:[%s9 + $0x10] sm:$0xff]
    %v2893 = vld [vmem:[%s9 + $0x18] sm:$0xff]
    %v2895 = vrot.slane %v2882, 4
    %v2896 = vsel %vm1225, %v2895, 0
    %2898 = vmatprep.subr.mxu0 0.0
    %2899 = vmatpush1.msra.mxu0 %v2890
    %2900 = vmatprep.subr.mxu0 0.0
    %2901 = vmatpush1.msra.mxu0 %v2891
    %2902 = vmatprep.subr.mxu0 0.0
    %2903 = vmatpush1.msra.mxu0 %v2892
    %2904 = vmatprep.subr.mxu0 0.0
    %2905 = vmatpush1.msra.mxu0 %v2893
    %2906 = vmatprep.subr.mxu0 0.0
    %2907 = vmatpush1.msra.mxu0 0.0
    %2908 = vmatprep.subr.mxu0 0.0
    %2909 = vmatpush1.msra.mxu0 0.0
    %2910 = vmatprep.subr.mxu0 0.0
    %2911 = vmatpush1.msra.mxu0 0.0
    %2912 = vmatprep.subr.mxu0 0.0
    %2913 = vmatpush1.msra.mxu0 0.0
    %2914 = vmatprep.subr.mxu0 0.0
    %2915 = vmatpush1.msra.mxu0 0.0
    %2916 = vmatprep.subr.mxu0 0.0
    %2917 = vmatpush1.msra.mxu0 0.0
    %2918 = vmatprep.subr.mxu0 0.0
    %2919 = vmatpush1.msra.mxu0 0.0
    %2920 = vmatprep.subr.mxu0 0.0
    %2921 = vmatpush1.msra.mxu0 0.0
    %2922 = vmatprep.subr.mxu0 0.0
    %2923 = vmatpush1.msra.mxu0 0.0
    %2924 = vmatprep.subr.mxu0 0.0
    %2925 = vmatpush1.msra.mxu0 0.0
    %2926 = vmatprep.subr.mxu0 0.0
    %2927 = vmatpush1.msra.mxu0 0.0
    %2928 = vmatprep.subr.mxu0 0.0
    %2929 = vmatpush1.msra.mxu0 0.0
    %2930 = vmatprep.subr.mxu0 0.0
    %2931 = vmatpush1.msra.mxu0 0.0
    %2932 = vmatprep.subr.mxu0 0.0
    %2933 = vmatpush1.msra.mxu0 0.0
    %2934 = vmatprep.subr.mxu0 0.0
    %2935 = vmatpush1.msra.mxu0 0.0
    %2936 = vmatprep.subr.mxu0 0.0
    %2937 = vmatpush1.msra.mxu0 0.0
    %2938 = vmatprep.subr.mxu0 0.0
    %2939 = vmatpush1.msra.mxu0 0.0
    %2940 = vmatprep.subr.mxu0 0.0
    %2941 = vmatpush1.msra.mxu0 0.0
    %2942 = vmatprep.subr.mxu0 0.0
    %2943 = vmatpush1.msra.mxu0 0.0
    %2944 = vmatprep.subr.mxu0 0.0
    %2945 = vmatpush1.msra.mxu0 0.0
    %2946 = vmatprep.subr.mxu0 0.0
    %2947 = vmatpush1.msra.mxu0 0.0
    %2948 = vmatprep.subr.mxu0 0.0
    %2949 = vmatpush1.msra.mxu0 0.0
    %2950 = vmatprep.subr.mxu0 0.0
    %2951 = vmatpush1.msra.mxu0 0.0
    %2952 = vmatprep.subr.mxu0 0.0
    %2953 = vmatpush1.msra.mxu0 0.0
    %2954 = vmatprep.subr.mxu0 0.0
    %2955 = vmatpush1.msra.mxu0 0.0
    %2956 = vmatprep.subr.mxu0 0.0
    %2957 = vmatpush1.msra.mxu0 0.0
    %2958 = vmatprep.subr.mxu0 0.0
    %2959 = vmatpush1.msra.mxu0 0.0
    %2960 = vmatprep.subr.mxu0 0.0
    %2961 = vmatpush1.msra.mxu0 0.0
    %2962 = vmatprep.mubr.f32.mxu0 0.0
    %2963 = vmatmul.mubr.f32.gmra.mrb[0].mxu0 %v2896
    %v2964 = vpop.f32.mrb[0].mxu0
    %v2965 = vadd.f32 0.0, %v2964
    %v2966 = vpop.f32.mrb[0].mxu0
    %2967 = vdwg.mxu0
    %v2968 = vadd.f32 %v2889, %v2965
    %s2969 = scalar_lea.vmem [#allocation2], 12
    %v2970 = vld [vmem:[%s2969] sm:$0x3]
    %v2971 = vld [vmem:[%s1591] sm:$0xff]
    %v2972 = vld [vmem:[%s1591 + $0x8] sm:$0xff]
    %v2973 = vld [vmem:[%s1591 + $0x10] sm:$0xff]
    %v2974 = vld [vmem:[%s1591 + $0x18] sm:$0xff]
    %2975 = vmatprep.subr.mxu0 0.0
    %2976 = vmatpush1.msra.mxu0 %v2971
    %2977 = vmatprep.subr.mxu0 0.0
    %2978 = vmatpush1.msra.mxu0 %v2972
    %2979 = vmatprep.subr.mxu0 0.0
    %2980 = vmatpush1.msra.mxu0 %v2973
    %2981 = vmatprep.subr.mxu0 0.0
    %2982 = vmatpush1.msra.mxu0 %v2974
    %2983 = vmatprep.subr.mxu0 0.0
    %2984 = vmatpush1.msra.mxu0 0.0
    %2985 = vmatprep.subr.mxu0 0.0
    %2986 = vmatpush1.msra.mxu0 0.0
    %2987 = vmatprep.subr.mxu0 0.0
    %2988 = vmatpush1.msra.mxu0 0.0
    %2989 = vmatprep.subr.mxu0 0.0
    %2990 = vmatpush1.msra.mxu0 0.0
    %2991 = vmatprep.subr.mxu0 0.0
    %2992 = vmatpush1.msra.mxu0 0.0
    %2993 = vmatprep.subr.mxu0 0.0
    %2994 = vmatpush1.msra.mxu0 0.0
    %2995 = vmatprep.subr.mxu0 0.0
    %2996 = vmatpush1.msra.mxu0 0.0
    %2997 = vmatprep.subr.mxu0 0.0
    %2998 = vmatpush1.msra.mxu0 0.0
    %2999 = vmatprep.subr.mxu0 0.0
    %3000 = vmatpush1.msra.mxu0 0.0
    %3001 = vmatprep.subr.mxu0 0.0
    %3002 = vmatpush1.msra.mxu0 0.0
    %3003 = vmatprep.subr.mxu0 0.0
    %3004 = vmatpush1.msra.mxu0 0.0
    %3005 = vmatprep.subr.mxu0 0.0
    %3006 = vmatpush1.msra.mxu0 0.0
    %3007 = vmatprep.subr.mxu0 0.0
    %3008 = vmatpush1.msra.mxu0 0.0
    %3009 = vmatprep.subr.mxu0 0.0
    %3010 = vmatpush1.msra.mxu0 0.0
    %3011 = vmatprep.subr.mxu0 0.0
    %3012 = vmatpush1.msra.mxu0 0.0
    %3013 = vmatprep.subr.mxu0 0.0
    %3014 = vmatpush1.msra.mxu0 0.0
    %3015 = vmatprep.subr.mxu0 0.0
    %3016 = vmatpush1.msra.mxu0 0.0
    %3017 = vmatprep.subr.mxu0 0.0
    %3018 = vmatpush1.msra.mxu0 0.0
    %3019 = vmatprep.subr.mxu0 0.0
    %3020 = vmatpush1.msra.mxu0 0.0
    %3021 = vmatprep.subr.mxu0 0.0
    %3022 = vmatpush1.msra.mxu0 0.0
    %3023 = vmatprep.subr.mxu0 0.0
    %3024 = vmatpush1.msra.mxu0 0.0
    %3025 = vmatprep.subr.mxu0 0.0
    %3026 = vmatpush1.msra.mxu0 0.0
    %3027 = vmatprep.subr.mxu0 0.0
    %3028 = vmatpush1.msra.mxu0 0.0
    %3029 = vmatprep.subr.mxu0 0.0
    %3030 = vmatpush1.msra.mxu0 0.0
    %3031 = vmatprep.subr.mxu0 0.0
    %3032 = vmatpush1.msra.mxu0 0.0
    %3033 = vmatprep.subr.mxu0 0.0
    %3034 = vmatpush1.msra.mxu0 0.0
    %3035 = vmatprep.subr.mxu0 0.0
    %3036 = vmatpush1.msra.mxu0 0.0
    %3037 = vmatprep.subr.mxu0 0.0
    %3038 = vmatpush1.msra.mxu0 0.0
    %3039 = vmatprep.mubr.f32.mxu0 0.0
    %3040 = vmatmul.mubr.f32.gmra.mrb[0].mxu0 %v2896
    %v3041 = vpop.f32.mrb[0].mxu0
    %v3042 = vadd.f32 0.0, %v3041
    %v3043 = vpop.f32.mrb[0].mxu0
    %3044 = vdwg.mxu0
    %v3045 = vadd.f32 %v2970, %v3042
    %s3046 = scalar_lea.vmem [#allocation2], 20
    %v3047 = vld [vmem:[%s3046] sm:$0x3]
    %v3048 = vld [vmem:[%s1668] sm:$0xff]
    %v3049 = vld [vmem:[%s1668 + $0x8] sm:$0xff]
    %v3050 = vld [vmem:[%s1668 + $0x10] sm:$0xff]
    %v3051 = vld [vmem:[%s1668 + $0x18] sm:$0xff]
    %3052 = vmatprep.subr.mxu0 0.0
    %3053 = vmatpush1.msra.mxu0 %v3048
    %3054 = vmatprep.subr.mxu0 0.0
    %3055 = vmatpush1.msra.mxu0 %v3049
    %3056 = vmatprep.subr.mxu0 0.0
    %3057 = vmatpush1.msra.mxu0 %v3050
    %3058 = vmatprep.subr.mxu0 0.0
    %3059 = vmatpush1.msra.mxu0 %v3051
    %3060 = vmatprep.subr.mxu0 0.0
    %3061 = vmatpush1.msra.mxu0 0.0
    %3062 = vmatprep.subr.mxu0 0.0
    %3063 = vmatpush1.msra.mxu0 0.0
    %3064 = vmatprep.subr.mxu0 0.0
    %3065 = vmatpush1.msra.mxu0 0.0
    %3066 = vmatprep.subr.mxu0 0.0
    %3067 = vmatpush1.msra.mxu0 0.0
    %3068 = vmatprep.subr.mxu0 0.0
    %3069 = vmatpush1.msra.mxu0 0.0
    %3070 = vmatprep.subr.mxu0 0.0
    %3071 = vmatpush1.msra.mxu0 0.0
    %3072 = vmatprep.subr.mxu0 0.0
    %3073 = vmatpush1.msra.mxu0 0.0
    %3074 = vmatprep.subr.mxu0 0.0
    %3075 = vmatpush1.msra.mxu0 0.0
    %3076 = vmatprep.subr.mxu0 0.0
    %3077 = vmatpush1.msra.mxu0 0.0
    %3078 = vmatprep.subr.mxu0 0.0
    %3079 = vmatpush1.msra.mxu0 0.0
    %3080 = vmatprep.subr.mxu0 0.0
    %3081 = vmatpush1.msra.mxu0 0.0
    %3082 = vmatprep.subr.mxu0 0.0
    %3083 = vmatpush1.msra.mxu0 0.0
    %3084 = vmatprep.subr.mxu0 0.0
    %3085 = vmatpush1.msra.mxu0 0.0
    %3086 = vmatprep.subr.mxu0 0.0
    %3087 = vmatpush1.msra.mxu0 0.0
    %3088 = vmatprep.subr.mxu0 0.0
    %3089 = vmatpush1.msra.mxu0 0.0
    %3090 = vmatprep.subr.mxu0 0.0
    %3091 = vmatpush1.msra.mxu0 0.0
    %3092 = vmatprep.subr.mxu0 0.0
    %3093 = vmatpush1.msra.mxu0 0.0
    %3094 = vmatprep.subr.mxu0 0.0
    %3095 = vmatpush1.msra.mxu0 0.0
    %3096 = vmatprep.subr.mxu0 0.0
    %3097 = vmatpush1.msra.mxu0 0.0
    %3098 = vmatprep.subr.mxu0 0.0
    %3099 = vmatpush1.msra.mxu0 0.0
    %3100 = vmatprep.subr.mxu0 0.0
    %3101 = vmatpush1.msra.mxu0 0.0
    %3102 = vmatprep.subr.mxu0 0.0
    %3103 = vmatpush1.msra.mxu0 0.0
    %3104 = vmatprep.subr.mxu0 0.0
    %3105 = vmatpush1.msra.mxu0 0.0
    %3106 = vmatprep.subr.mxu0 0.0
    %3107 = vmatpush1.msra.mxu0 0.0
    %3108 = vmatprep.subr.mxu0 0.0
    %3109 = vmatpush1.msra.mxu0 0.0
    %3110 = vmatprep.subr.mxu0 0.0
    %3111 = vmatpush1.msra.mxu0 0.0
    %3112 = vmatprep.subr.mxu0 0.0
    %3113 = vmatpush1.msra.mxu0 0.0
    %3114 = vmatprep.subr.mxu0 0.0
    %3115 = vmatpush1.msra.mxu0 0.0
    %3116 = vmatprep.mubr.f32.mxu0 0.0
    %3117 = vmatmul.mubr.f32.gmra.mrb[0].mxu0 %v2896
    %v3118 = vpop.f32.mrb[0].mxu0
    %v3119 = vadd.f32 0.0, %v3118
    %v3120 = vpop.f32.mrb[0].mxu0
    %3121 = vdwg.mxu0
    %v3122 = vadd.f32 %v3047, %v3119
    %s3123 = scalar_lea.vmem [#allocation2], 28
    %v3124 = vld [vmem:[%s3123] sm:$0x3]
    %v3125 = vld [vmem:[%s1745] sm:$0xff]
    %v3126 = vld [vmem:[%s1745 + $0x8] sm:$0xff]
    %v3127 = vld [vmem:[%s1745 + $0x10] sm:$0xff]
    %v3128 = vld [vmem:[%s1745 + $0x18] sm:$0xff]
    %3129 = vmatprep.subr.mxu0 0.0
    %3130 = vmatpush1.msra.mxu0 %v3125
    %3131 = vmatprep.subr.mxu0 0.0
    %3132 = vmatpush1.msra.mxu0 %v3126
    %3133 = vmatprep.subr.mxu0 0.0
    %3134 = vmatpush1.msra.mxu0 %v3127
    %3135 = vmatprep.subr.mxu0 0.0
    %3136 = vmatpush1.msra.mxu0 %v3128
    %3137 = vmatprep.subr.mxu0 0.0
    %3138 = vmatpush1.msra.mxu0 0.0
    %3139 = vmatprep.subr.mxu0 0.0
    %3140 = vmatpush1.msra.mxu0 0.0
    %3141 = vmatprep.subr.mxu0 0.0
    %3142 = vmatpush1.msra.mxu0 0.0
    %3143 = vmatprep.subr.mxu0 0.0
    %3144 = vmatpush1.msra.mxu0 0.0
    %3145 = vmatprep.subr.mxu0 0.0
    %3146 = vmatpush1.msra.mxu0 0.0
    %3147 = vmatprep.subr.mxu0 0.0
    %3148 = vmatpush1.msra.mxu0 0.0
    %3149 = vmatprep.subr.mxu0 0.0
    %3150 = vmatpush1.msra.mxu0 0.0
    %3151 = vmatprep.subr.mxu0 0.0
    %3152 = vmatpush1.msra.mxu0 0.0
    %3153 = vmatprep.subr.mxu0 0.0
    %3154 = vmatpush1.msra.mxu0 0.0
    %3155 = vmatprep.subr.mxu0 0.0
    %3156 = vmatpush1.msra.mxu0 0.0
    %3157 = vmatprep.subr.mxu0 0.0
    %3158 = vmatpush1.msra.mxu0 0.0
    %3159 = vmatprep.subr.mxu0 0.0
    %3160 = vmatpush1.msra.mxu0 0.0
    %3161 = vmatprep.subr.mxu0 0.0
    %3162 = vmatpush1.msra.mxu0 0.0
    %3163 = vmatprep.subr.mxu0 0.0
    %3164 = vmatpush1.msra.mxu0 0.0
    %3165 = vmatprep.subr.mxu0 0.0
    %3166 = vmatpush1.msra.mxu0 0.0
    %3167 = vmatprep.subr.mxu0 0.0
    %3168 = vmatpush1.msra.mxu0 0.0
    %3169 = vmatprep.subr.mxu0 0.0
    %3170 = vmatpush1.msra.mxu0 0.0
    %3171 = vmatprep.subr.mxu0 0.0
    %3172 = vmatpush1.msra.mxu0 0.0
    %3173 = vmatprep.subr.mxu0 0.0
    %3174 = vmatpush1.msra.mxu0 0.0
    %3175 = vmatprep.subr.mxu0 0.0
    %3176 = vmatpush1.msra.mxu0 0.0
    %3177 = vmatprep.subr.mxu0 0.0
    %3178 = vmatpush1.msra.mxu0 0.0
    %3179 = vmatprep.subr.mxu0 0.0
    %3180 = vmatpush1.msra.mxu0 0.0
    %3181 = vmatprep.subr.mxu0 0.0
    %3182 = vmatpush1.msra.mxu0 0.0
    %3183 = vmatprep.subr.mxu0 0.0
    %3184 = vmatpush1.msra.mxu0 0.0
    %3185 = vmatprep.subr.mxu0 0.0
    %3186 = vmatpush1.msra.mxu0 0.0
    %3187 = vmatprep.subr.mxu0 0.0
    %3188 = vmatpush1.msra.mxu0 0.0
    %3189 = vmatprep.subr.mxu0 0.0
    %3190 = vmatpush1.msra.mxu0 0.0
    %3191 = vmatprep.subr.mxu0 0.0
    %3192 = vmatpush1.msra.mxu0 0.0
    %3193 = vmatprep.mubr.f32.mxu0 0.0
    %3194 = vmatmul.mubr.f32.gmra.mrb[0].mxu0 %v2896
    %v3195 = vpop.f32.mrb[0].mxu0
    %v3196 = vadd.f32 0.0, %v3195
    %v3197 = vpop.f32.mrb[0].mxu0
    %3198 = vdwg.mxu0
    %v3199 = vadd.f32 %v3124, %v3196
    %s3200 = scalar_lea.vmem [#allocation3], 2
    %v3201 = vld [vmem:[%s3200] sm:$0x3]
    %v3202 = vld [vmem:[%s10] sm:$0xff]
    %v3203 = vld [vmem:[%s10 + $0x8] sm:$0xff]
    %v3204 = vld [vmem:[%s10 + $0x10] sm:$0xff]
    %v3205 = vld [vmem:[%s10 + $0x18] sm:$0xff]
    %v3207 = vrot.slane %v2883, 2
    %v3208 = vsel %vm1225, %v3207, 0
    %3210 = vmatprep.subr.mxu0 0.0
    %3211 = vmatpush1.msra.mxu0 %v3202
    %3212 = vmatprep.subr.mxu0 0.0
    %3213 = vmatpush1.msra.mxu0 %v3203
    %3214 = vmatprep.subr.mxu0 0.0
    %3215 = vmatpush1.msra.mxu0 %v3204
    %3216 = vmatprep.subr.mxu0 0.0
    %3217 = vmatpush1.msra.mxu0 %v3205
    %3218 = vmatprep.subr.mxu0 0.0
    %3219 = vmatpush1.msra.mxu0 0.0
    %3220 = vmatprep.subr.mxu0 0.0
    %3221 = vmatpush1.msra.mxu0 0.0
    %3222 = vmatprep.subr.mxu0 0.0
    %3223 = vmatpush1.msra.mxu0 0.0
    %3224 = vmatprep.subr.mxu0 0.0
    %3225 = vmatpush1.msra.mxu0 0.0
    %3226 = vmatprep.subr.mxu0 0.0
    %3227 = vmatpush1.msra.mxu0 0.0
    %3228 = vmatprep.subr.mxu0 0.0
    %3229 = vmatpush1.msra.mxu0 0.0
    %3230 = vmatprep.subr.mxu0 0.0
    %3231 = vmatpush1.msra.mxu0 0.0
    %3232 = vmatprep.subr.mxu0 0.0
    %3233 = vmatpush1.msra.mxu0 0.0
    %3234 = vmatprep.subr.mxu0 0.0
    %3235 = vmatpush1.msra.mxu0 0.0
    %3236 = vmatprep.subr.mxu0 0.0
    %3237 = vmatpush1.msra.mxu0 0.0
    %3238 = vmatprep.subr.mxu0 0.0
    %3239 = vmatpush1.msra.mxu0 0.0
    %3240 = vmatprep.subr.mxu0 0.0
    %3241 = vmatpush1.msra.mxu0 0.0
    %3242 = vmatprep.subr.mxu0 0.0
    %3243 = vmatpush1.msra.mxu0 0.0
    %3244 = vmatprep.subr.mxu0 0.0
    %3245 = vmatpush1.msra.mxu0 0.0
    %3246 = vmatprep.subr.mxu0 0.0
    %3247 = vmatpush1.msra.mxu0 0.0
    %3248 = vmatprep.subr.mxu0 0.0
    %3249 = vmatpush1.msra.mxu0 0.0
    %3250 = vmatprep.subr.mxu0 0.0
    %3251 = vmatpush1.msra.mxu0 0.0
    %3252 = vmatprep.subr.mxu0 0.0
    %3253 = vmatpush1.msra.mxu0 0.0
    %3254 = vmatprep.subr.mxu0 0.0
    %3255 = vmatpush1.msra.mxu0 0.0
    %3256 = vmatprep.subr.mxu0 0.0
    %3257 = vmatpush1.msra.mxu0 0.0
    %3258 = vmatprep.subr.mxu0 0.0
    %3259 = vmatpush1.msra.mxu0 0.0
    %3260 = vmatprep.subr.mxu0 0.0
    %3261 = vmatpush1.msra.mxu0 0.0
    %3262 = vmatprep.subr.mxu0 0.0
    %3263 = vmatpush1.msra.mxu0 0.0
    %3264 = vmatprep.subr.mxu0 0.0
    %3265 = vmatpush1.msra.mxu0 0.0
    %3266 = vmatprep.subr.mxu0 0.0
    %3267 = vmatpush1.msra.mxu0 0.0
    %3268 = vmatprep.subr.mxu0 0.0
    %3269 = vmatpush1.msra.mxu0 0.0
    %3270 = vmatprep.subr.mxu0 0.0
    %3271 = vmatpush1.msra.mxu0 0.0
    %3272 = vmatprep.subr.mxu0 0.0
    %3273 = vmatpush1.msra.mxu0 0.0
    %3274 = vmatprep.mubr.f32.mxu0 0.0
    %3275 = vmatmul.mubr.f32.gmra.mrb[0].mxu0 %v3208
    %v3276 = vpop.f32.mrb[0].mxu0
    %v3277 = vadd.f32 0.0, %v3276
    %v3278 = vpop.f32.mrb[0].mxu0
    %3279 = vdwg.mxu0
    %v3280 = vadd.f32 %v3201, %v3277
    %s3281 = scalar_lea.vmem [#allocation3], 10
    %v3282 = vld [vmem:[%s3281] sm:$0x3]
    %v3283 = vld [vmem:[%s1900] sm:$0xff]
    %v3284 = vld [vmem:[%s1900 + $0x8] sm:$0xff]
    %v3285 = vld [vmem:[%s1900 + $0x10] sm:$0xff]
    %v3286 = vld [vmem:[%s1900 + $0x18] sm:$0xff]
    %3287 = vmatprep.subr.mxu0 0.0
    %3288 = vmatpush1.msra.mxu0 %v3283
    %3289 = vmatprep.subr.mxu0 0.0
    %3290 = vmatpush1.msra.mxu0 %v3284
    %3291 = vmatprep.subr.mxu0 0.0
    %3292 = vmatpush1.msra.mxu0 %v3285
    %3293 = vmatprep.subr.mxu0 0.0
    %3294 = vmatpush1.msra.mxu0 %v3286
    %3295 = vmatprep.subr.mxu0 0.0
    %3296 = vmatpush1.msra.mxu0 0.0
    %3297 = vmatprep.subr.mxu0 0.0
    %3298 = vmatpush1.msra.mxu0 0.0
    %3299 = vmatprep.subr.mxu0 0.0
    %3300 = vmatpush1.msra.mxu0 0.0
    %3301 = vmatprep.subr.mxu0 0.0
    %3302 = vmatpush1.msra.mxu0 0.0
    %3303 = vmatprep.subr.mxu0 0.0
    %3304 = vmatpush1.msra.mxu0 0.0
    %3305 = vmatprep.subr.mxu0 0.0
    %3306 = vmatpush1.msra.mxu0 0.0
    %3307 = vmatprep.subr.mxu0 0.0
    %3308 = vmatpush1.msra.mxu0 0.0
    %3309 = vmatprep.subr.mxu0 0.0
    %3310 = vmatpush1.msra.mxu0 0.0
    %3311 = vmatprep.subr.mxu0 0.0
    %3312 = vmatpush1.msra.mxu0 0.0
    %3313 = vmatprep.subr.mxu0 0.0
    %3314 = vmatpush1.msra.mxu0 0.0
    %3315 = vmatprep.subr.mxu0 0.0
    %3316 = vmatpush1.msra.mxu0 0.0
    %3317 = vmatprep.subr.mxu0 0.0
    %3318 = vmatpush1.msra.mxu0 0.0
    %3319 = vmatprep.subr.mxu0 0.0
    %3320 = vmatpush1.msra.mxu0 0.0
    %3321 = vmatprep.subr.mxu0 0.0
    %3322 = vmatpush1.msra.mxu0 0.0
    %3323 = vmatprep.subr.mxu0 0.0
    %3324 = vmatpush1.msra.mxu0 0.0
    %3325 = vmatprep.subr.mxu0 0.0
    %3326 = vmatpush1.msra.mxu0 0.0
    %3327 = vmatprep.subr.mxu0 0.0
    %3328 = vmatpush1.msra.mxu0 0.0
    %3329 = vmatprep.subr.mxu0 0.0
    %3330 = vmatpush1.msra.mxu0 0.0
    %3331 = vmatprep.subr.mxu0 0.0
    %3332 = vmatpush1.msra.mxu0 0.0
    %3333 = vmatprep.subr.mxu0 0.0
    %3334 = vmatpush1.msra.mxu0 0.0
    %3335 = vmatprep.subr.mxu0 0.0
    %3336 = vmatpush1.msra.mxu0 0.0
    %3337 = vmatprep.subr.mxu0 0.0
    %3338 = vmatpush1.msra.mxu0 0.0
    %3339 = vmatprep.subr.mxu0 0.0
    %3340 = vmatpush1.msra.mxu0 0.0
    %3341 = vmatprep.subr.mxu0 0.0
    %3342 = vmatpush1.msra.mxu0 0.0
    %3343 = vmatprep.subr.mxu0 0.0
    %3344 = vmatpush1.msra.mxu0 0.0
    %3345 = vmatprep.subr.mxu0 0.0
    %3346 = vmatpush1.msra.mxu0 0.0
    %3347 = vmatprep.subr.mxu0 0.0
    %3348 = vmatpush1.msra.mxu0 0.0
    %3349 = vmatprep.subr.mxu0 0.0
    %3350 = vmatpush1.msra.mxu0 0.0
    %3351 = vmatprep.mubr.f32.mxu0 0.0
    %3352 = vmatmul.mubr.f32.gmra.mrb[0].mxu0 %v3208
    %v3353 = vpop.f32.mrb[0].mxu0
    %v3354 = vadd.f32 0.0, %v3353
    %v3355 = vpop.f32.mrb[0].mxu0
    %3356 = vdwg.mxu0
    %v3357 = vadd.f32 %v3282, %v3354
    %s3358 = scalar_lea.vmem [#allocation3], 18
    %v3359 = vld [vmem:[%s3358] sm:$0x3]
    %v3360 = vld [vmem:[%s1978] sm:$0xff]
    %v3361 = vld [vmem:[%s1978 + $0x8] sm:$0xff]
    %v3362 = vld [vmem:[%s1978 + $0x10] sm:$0xff]
    %v3363 = vld [vmem:[%s1978 + $0x18] sm:$0xff]
    %3364 = vmatprep.subr.mxu0 0.0
    %3365 = vmatpush1.msra.mxu0 %v3360
    %3366 = vmatprep.subr.mxu0 0.0
    %3367 = vmatpush1.msra.mxu0 %v3361
    %3368 = vmatprep.subr.mxu0 0.0
    %3369 = vmatpush1.msra.mxu0 %v3362
    %3370 = vmatprep.subr.mxu0 0.0
    %3371 = vmatpush1.msra.mxu0 %v3363
    %3372 = vmatprep.subr.mxu0 0.0
    %3373 = vmatpush1.msra.mxu0 0.0
    %3374 = vmatprep.subr.mxu0 0.0
    %3375 = vmatpush1.msra.mxu0 0.0
    %3376 = vmatprep.subr.mxu0 0.0
    %3377 = vmatpush1.msra.mxu0 0.0
    %3378 = vmatprep.subr.mxu0 0.0
    %3379 = vmatpush1.msra.mxu0 0.0
    %3380 = vmatprep.subr.mxu0 0.0
    %3381 = vmatpush1.msra.mxu0 0.0
    %3382 = vmatprep.subr.mxu0 0.0
    %3383 = vmatpush1.msra.mxu0 0.0
    %3384 = vmatprep.subr.mxu0 0.0
    %3385 = vmatpush1.msra.mxu0 0.0
    %3386 = vmatprep.subr.mxu0 0.0
    %3387 = vmatpush1.msra.mxu0 0.0
    %3388 = vmatprep.subr.mxu0 0.0
    %3389 = vmatpush1.msra.mxu0 0.0
    %3390 = vmatprep.subr.mxu0 0.0
    %3391 = vmatpush1.msra.mxu0 0.0
    %3392 = vmatprep.subr.mxu0 0.0
    %3393 = vmatpush1.msra.mxu0 0.0
    %3394 = vmatprep.subr.mxu0 0.0
    %3395 = vmatpush1.msra.mxu0 0.0
    %3396 = vmatprep.subr.mxu0 0.0
    %3397 = vmatpush1.msra.mxu0 0.0
    %3398 = vmatprep.subr.mxu0 0.0
    %3399 = vmatpush1.msra.mxu0 0.0
    %3400 = vmatprep.subr.mxu0 0.0
    %3401 = vmatpush1.msra.mxu0 0.0
    %3402 = vmatprep.subr.mxu0 0.0
    %3403 = vmatpush1.msra.mxu0 0.0
    %3404 = vmatprep.subr.mxu0 0.0
    %3405 = vmatpush1.msra.mxu0 0.0
    %3406 = vmatprep.subr.mxu0 0.0
    %3407 = vmatpush1.msra.mxu0 0.0
    %3408 = vmatprep.subr.mxu0 0.0
    %3409 = vmatpush1.msra.mxu0 0.0
    %3410 = vmatprep.subr.mxu0 0.0
    %3411 = vmatpush1.msra.mxu0 0.0
    %3412 = vmatprep.subr.mxu0 0.0
    %3413 = vmatpush1.msra.mxu0 0.0
    %3414 = vmatprep.subr.mxu0 0.0
    %3415 = vmatpush1.msra.mxu0 0.0
    %3416 = vmatprep.subr.mxu0 0.0
    %3417 = vmatpush1.msra.mxu0 0.0
    %3418 = vmatprep.subr.mxu0 0.0
    %3419 = vmatpush1.msra.mxu0 0.0
    %3420 = vmatprep.subr.mxu0 0.0
    %3421 = vmatpush1.msra.mxu0 0.0
    %3422 = vmatprep.subr.mxu0 0.0
    %3423 = vmatpush1.msra.mxu0 0.0
    %3424 = vmatprep.subr.mxu0 0.0
    %3425 = vmatpush1.msra.mxu0 0.0
    %3426 = vmatprep.subr.mxu0 0.0
    %3427 = vmatpush1.msra.mxu0 0.0
    %3428 = vmatprep.mubr.f32.mxu0 0.0
    %3429 = vmatmul.mubr.f32.gmra.mrb[0].mxu0 %v3208
    %v3430 = vpop.f32.mrb[0].mxu0
    %v3431 = vadd.f32 0.0, %v3430
    %v3432 = vpop.f32.mrb[0].mxu0
    %3433 = vdwg.mxu0
    %v3434 = vadd.f32 %v3359, %v3431
    %s3435 = scalar_lea.vmem [#allocation3], 26
    %v3436 = vld [vmem:[%s3435] sm:$0x3]
    %v3437 = vld [vmem:[%s2056] sm:$0xff]
    %v3438 = vld [vmem:[%s2056 + $0x8] sm:$0xff]
    %v3439 = vld [vmem:[%s2056 + $0x10] sm:$0xff]
    %v3440 = vld [vmem:[%s2056 + $0x18] sm:$0xff]
    %3441 = vmatprep.subr.mxu0 0.0
    %3442 = vmatpush1.msra.mxu0 %v3437
    %3443 = vmatprep.subr.mxu0 0.0
    %3444 = vmatpush1.msra.mxu0 %v3438
    %3445 = vmatprep.subr.mxu0 0.0
    %3446 = vmatpush1.msra.mxu0 %v3439
    %3447 = vmatprep.subr.mxu0 0.0
    %3448 = vmatpush1.msra.mxu0 %v3440
    %3449 = vmatprep.subr.mxu0 0.0
    %3450 = vmatpush1.msra.mxu0 0.0
    %3451 = vmatprep.subr.mxu0 0.0
    %3452 = vmatpush1.msra.mxu0 0.0
    %3453 = vmatprep.subr.mxu0 0.0
    %3454 = vmatpush1.msra.mxu0 0.0
    %3455 = vmatprep.subr.mxu0 0.0
    %3456 = vmatpush1.msra.mxu0 0.0
    %3457 = vmatprep.subr.mxu0 0.0
    %3458 = vmatpush1.msra.mxu0 0.0
    %3459 = vmatprep.subr.mxu0 0.0
    %3460 = vmatpush1.msra.mxu0 0.0
    %3461 = vmatprep.subr.mxu0 0.0
    %3462 = vmatpush1.msra.mxu0 0.0
    %3463 = vmatprep.subr.mxu0 0.0
    %3464 = vmatpush1.msra.mxu0 0.0
    %3465 = vmatprep.subr.mxu0 0.0
    %3466 = vmatpush1.msra.mxu0 0.0
    %3467 = vmatprep.subr.mxu0 0.0
    %3468 = vmatpush1.msra.mxu0 0.0
    %3469 = vmatprep.subr.mxu0 0.0
    %3470 = vmatpush1.msra.mxu0 0.0
    %3471 = vmatprep.subr.mxu0 0.0
    %3472 = vmatpush1.msra.mxu0 0.0
    %3473 = vmatprep.subr.mxu0 0.0
    %3474 = vmatpush1.msra.mxu0 0.0
    %3475 = vmatprep.subr.mxu0 0.0
    %3476 = vmatpush1.msra.mxu0 0.0
    %3477 = vmatprep.subr.mxu0 0.0
    %3478 = vmatpush1.msra.mxu0 0.0
    %3479 = vmatprep.subr.mxu0 0.0
    %3480 = vmatpush1.msra.mxu0 0.0
    %3481 = vmatprep.subr.mxu0 0.0
    %3482 = vmatpush1.msra.mxu0 0.0
    %3483 = vmatprep.subr.mxu0 0.0
    %3484 = vmatpush1.msra.mxu0 0.0
    %3485 = vmatprep.subr.mxu0 0.0
    %3486 = vmatpush1.msra.mxu0 0.0
    %3487 = vmatprep.subr.mxu0 0.0
    %3488 = vmatpush1.msra.mxu0 0.0
    %3489 = vmatprep.subr.mxu0 0.0
    %3490 = vmatpush1.msra.mxu0 0.0
    %3491 = vmatprep.subr.mxu0 0.0
    %3492 = vmatpush1.msra.mxu0 0.0
    %3493 = vmatprep.subr.mxu0 0.0
    %3494 = vmatpush1.msra.mxu0 0.0
    %3495 = vmatprep.subr.mxu0 0.0
    %3496 = vmatpush1.msra.mxu0 0.0
    %3497 = vmatprep.subr.mxu0 0.0
    %3498 = vmatpush1.msra.mxu0 0.0
    %3499 = vmatprep.subr.mxu0 0.0
    %3500 = vmatpush1.msra.mxu0 0.0
    %3501 = vmatprep.subr.mxu0 0.0
    %3502 = vmatpush1.msra.mxu0 0.0
    %3503 = vmatprep.subr.mxu0 0.0
    %3504 = vmatpush1.msra.mxu0 0.0
    %3505 = vmatprep.mubr.f32.mxu0 0.0
    %3506 = vmatmul.mubr.f32.gmra.mrb[0].mxu0 %v3208
    %v3507 = vpop.f32.mrb[0].mxu0
    %v3508 = vadd.f32 0.0, %v3507
    %v3509 = vpop.f32.mrb[0].mxu0
    %3510 = vdwg.mxu0
    %v3511 = vadd.f32 %v3436, %v3508
    %v3513 = vrot.slane %v3045, 6
    %v3516 = vrot.slane %v3199, 4
    %v3519 = vrot.slane %v3280, 2
    %v3522 = vrot.slane %v3511, 6
    %v3524 = vsel %vm527, %v2968, %v3513
    %v3525 = vsel %vm1203, %v3524, %v3516
    %v3526 = vsel %vm2146, %v3525, %v3519
    %v3527 = vsel %vm527, %v3357, %v3522
    %v3528 = vxor.u32 %v3526, 2147483648
    %v3529 = vxor.u32 %v3527, 2147483648
    %v3530 = vmul.f32 %v3528, 1.442695
    %v3531 = vpow.pop %v3530
    %v3532 = vmul.f32 %v3529, 1.442695
    %v3533 = vpow.pop %v3532
    %v3534 = vadd.f32 %v3531, 1.0
    %v3535 = vadd.f32 %v3533, 1.0
    %v3536 = vrcp.pop %v3534
    %v3537 = vmul.f32 1.0, %v3536
    %v3538 = vrcp.pop %v3535
    %v3539 = vmul.f32 1.0, %v3538
    %v3541 = vrot.slane %v3434, 6
    %v3543 = vsel %vm527, %v3122, %v3541
    %v3544 = vtanh.pop %v3543
    %v3545 = vmul.f32 %v3537, %v2861
    %v3546 = vmul.f32 %v3537, %v3544
    %v3548 = vrot.slane %v3546, 6
    %v3550 = vadd.f32 %v3545, %v3548
    %v3551 = vmul.f32 %v3539, %v2870
    %v3553 = vrot.slane %v3544, 4
    %v3555 = vmul.f32 %v3537, %v3553
    %v3557 = vrot.slane %v3555, 6
    %v3559 = vadd.f32 %v3551, %v3557
    %v3561 = vrot.slane %v3550, 2
    %v3564 = vrot.slane %v3559, 6
    %v3566 = vsel %vm527, %v3561, %v3564
    %v3567 = vtanh.pop %v3566
    %v3569 = vrot.slane %v3567, 4
    %v3571 = vmul.f32 %v3537, %v3569
    %v3572 = vmul.f32 %v3539, %v3567
    %s3573 = scalar_lea.vmem [#allocation4], 4
    %3574 = vst.msk [vmem:[%s3573 - $0x4] sm:$0x30] %vm2194, %v3571
    %s3575 = scalar_lea.vmem [#allocation5], 2
    %3576 = vst.msk [vmem:[%s3575 - $0x2] sm:$0xc] %vm2197, %v3572
    %s3577 = scalar_lea.vmem [#allocation2], 6
    %v3578 = vld [vmem:[%s3577] sm:$0x3]
    %v3579 = vld [vmem:[%s9] sm:$0xff]
    %v3580 = vld [vmem:[%s9 + $0x8] sm:$0xff]
    %v3581 = vld [vmem:[%s9 + $0x10] sm:$0xff]
    %v3582 = vld [vmem:[%s9 + $0x18] sm:$0xff]
    %v3584 = vrot.slane %v3571, 4
    %v3585 = vsel %vm1225, %v3584, 0
    %3587 = vmatprep.subr.mxu0 0.0
    %3588 = vmatpush1.msra.mxu0 %v3579
    %3589 = vmatprep.subr.mxu0 0.0
    %3590 = vmatpush1.msra.mxu0 %v3580
    %3591 = vmatprep.subr.mxu0 0.0
    %3592 = vmatpush1.msra.mxu0 %v3581
    %3593 = vmatprep.subr.mxu0 0.0
    %3594 = vmatpush1.msra.mxu0 %v3582
    %3595 = vmatprep.subr.mxu0 0.0
    %3596 = vmatpush1.msra.mxu0 0.0
    %3597 = vmatprep.subr.mxu0 0.0
    %3598 = vmatpush1.msra.mxu0 0.0
    %3599 = vmatprep.subr.mxu0 0.0
    %3600 = vmatpush1.msra.mxu0 0.0
    %3601 = vmatprep.subr.mxu0 0.0
    %3602 = vmatpush1.msra.mxu0 0.0
    %3603 = vmatprep.subr.mxu0 0.0
    %3604 = vmatpush1.msra.mxu0 0.0
    %3605 = vmatprep.subr.mxu0 0.0
    %3606 = vmatpush1.msra.mxu0 0.0
    %3607 = vmatprep.subr.mxu0 0.0
    %3608 = vmatpush1.msra.mxu0 0.0
    %3609 = vmatprep.subr.mxu0 0.0
    %3610 = vmatpush1.msra.mxu0 0.0
    %3611 = vmatprep.subr.mxu0 0.0
    %3612 = vmatpush1.msra.mxu0 0.0
    %3613 = vmatprep.subr.mxu0 0.0
    %3614 = vmatpush1.msra.mxu0 0.0
    %3615 = vmatprep.subr.mxu0 0.0
    %3616 = vmatpush1.msra.mxu0 0.0
    %3617 = vmatprep.subr.mxu0 0.0
    %3618 = vmatpush1.msra.mxu0 0.0
    %3619 = vmatprep.subr.mxu0 0.0
    %3620 = vmatpush1.msra.mxu0 0.0
    %3621 = vmatprep.subr.mxu0 0.0
    %3622 = vmatpush1.msra.mxu0 0.0
    %3623 = vmatprep.subr.mxu0 0.0
    %3624 = vmatpush1.msra.mxu0 0.0
    %3625 = vmatprep.subr.mxu0 0.0
    %3626 = vmatpush1.msra.mxu0 0.0
    %3627 = vmatprep.subr.mxu0 0.0
    %3628 = vmatpush1.msra.mxu0 0.0
    %3629 = vmatprep.subr.mxu0 0.0
    %3630 = vmatpush1.msra.mxu0 0.0
    %3631 = vmatprep.subr.mxu0 0.0
    %3632 = vmatpush1.msra.mxu0 0.0
    %3633 = vmatprep.subr.mxu0 0.0
    %3634 = vmatpush1.msra.mxu0 0.0
    %3635 = vmatprep.subr.mxu0 0.0
    %3636 = vmatpush1.msra.mxu0 0.0
    %3637 = vmatprep.subr.mxu0 0.0
    %3638 = vmatpush1.msra.mxu0 0.0
    %3639 = vmatprep.subr.mxu0 0.0
    %3640 = vmatpush1.msra.mxu0 0.0
    %3641 = vmatprep.subr.mxu0 0.0
    %3642 = vmatpush1.msra.mxu0 0.0
    %3643 = vmatprep.subr.mxu0 0.0
    %3644 = vmatpush1.msra.mxu0 0.0
    %3645 = vmatprep.subr.mxu0 0.0
    %3646 = vmatpush1.msra.mxu0 0.0
    %3647 = vmatprep.subr.mxu0 0.0
    %3648 = vmatpush1.msra.mxu0 0.0
    %3649 = vmatprep.subr.mxu0 0.0
    %3650 = vmatpush1.msra.mxu0 0.0
    %3651 = vmatprep.mubr.f32.mxu0 0.0
    %3652 = vmatmul.mubr.f32.gmra.mrb[0].mxu0 %v3585
    %v3653 = vpop.f32.mrb[0].mxu0
    %v3654 = vadd.f32 0.0, %v3653
    %v3655 = vpop.f32.mrb[0].mxu0
    %3656 = vdwg.mxu0
    %v3657 = vadd.f32 %v3578, %v3654
    %s3658 = scalar_lea.vmem [#allocation2], 14
    %v3659 = vld [vmem:[%s3658] sm:$0x3]
    %v3660 = vld [vmem:[%s1591] sm:$0xff]
    %v3661 = vld [vmem:[%s1591 + $0x8] sm:$0xff]
    %v3662 = vld [vmem:[%s1591 + $0x10] sm:$0xff]
    %v3663 = vld [vmem:[%s1591 + $0x18] sm:$0xff]
    %3664 = vmatprep.subr.mxu0 0.0
    %3665 = vmatpush1.msra.mxu0 %v3660
    %3666 = vmatprep.subr.mxu0 0.0
    %3667 = vmatpush1.msra.mxu0 %v3661
    %3668 = vmatprep.subr.mxu0 0.0
    %3669 = vmatpush1.msra.mxu0 %v3662
    %3670 = vmatprep.subr.mxu0 0.0
    %3671 = vmatpush1.msra.mxu0 %v3663
    %3672 = vmatprep.subr.mxu0 0.0
    %3673 = vmatpush1.msra.mxu0 0.0
    %3674 = vmatprep.subr.mxu0 0.0
    %3675 = vmatpush1.msra.mxu0 0.0
    %3676 = vmatprep.subr.mxu0 0.0
    %3677 = vmatpush1.msra.mxu0 0.0
    %3678 = vmatprep.subr.mxu0 0.0
    %3679 = vmatpush1.msra.mxu0 0.0
    %3680 = vmatprep.subr.mxu0 0.0
    %3681 = vmatpush1.msra.mxu0 0.0
    %3682 = vmatprep.subr.mxu0 0.0
    %3683 = vmatpush1.msra.mxu0 0.0
    %3684 = vmatprep.subr.mxu0 0.0
    %3685 = vmatpush1.msra.mxu0 0.0
    %3686 = vmatprep.subr.mxu0 0.0
    %3687 = vmatpush1.msra.mxu0 0.0
    %3688 = vmatprep.subr.mxu0 0.0
    %3689 = vmatpush1.msra.mxu0 0.0
    %3690 = vmatprep.subr.mxu0 0.0
    %3691 = vmatpush1.msra.mxu0 0.0
    %3692 = vmatprep.subr.mxu0 0.0
    %3693 = vmatpush1.msra.mxu0 0.0
    %3694 = vmatprep.subr.mxu0 0.0
    %3695 = vmatpush1.msra.mxu0 0.0
    %3696 = vmatprep.subr.mxu0 0.0
    %3697 = vmatpush1.msra.mxu0 0.0
    %3698 = vmatprep.subr.mxu0 0.0
    %3699 = vmatpush1.msra.mxu0 0.0
    %3700 = vmatprep.subr.mxu0 0.0
    %3701 = vmatpush1.msra.mxu0 0.0
    %3702 = vmatprep.subr.mxu0 0.0
    %3703 = vmatpush1.msra.mxu0 0.0
    %3704 = vmatprep.subr.mxu0 0.0
    %3705 = vmatpush1.msra.mxu0 0.0
    %3706 = vmatprep.subr.mxu0 0.0
    %3707 = vmatpush1.msra.mxu0 0.0
    %3708 = vmatprep.subr.mxu0 0.0
    %3709 = vmatpush1.msra.mxu0 0.0
    %3710 = vmatprep.subr.mxu0 0.0
    %3711 = vmatpush1.msra.mxu0 0.0
    %3712 = vmatprep.subr.mxu0 0.0
    %3713 = vmatpush1.msra.mxu0 0.0
    %3714 = vmatprep.subr.mxu0 0.0
    %3715 = vmatpush1.msra.mxu0 0.0
    %3716 = vmatprep.subr.mxu0 0.0
    %3717 = vmatpush1.msra.mxu0 0.0
    %3718 = vmatprep.subr.mxu0 0.0
    %3719 = vmatpush1.msra.mxu0 0.0
    %3720 = vmatprep.subr.mxu0 0.0
    %3721 = vmatpush1.msra.mxu0 0.0
    %3722 = vmatprep.subr.mxu0 0.0
    %3723 = vmatpush1.msra.mxu0 0.0
    %3724 = vmatprep.subr.mxu0 0.0
    %3725 = vmatpush1.msra.mxu0 0.0
    %3726 = vmatprep.subr.mxu0 0.0
    %3727 = vmatpush1.msra.mxu0 0.0
    %3728 = vmatprep.mubr.f32.mxu0 0.0
    %3729 = vmatmul.mubr.f32.gmra.mrb[0].mxu0 %v3585
    %v3730 = vpop.f32.mrb[0].mxu0
    %v3731 = vadd.f32 0.0, %v3730
    %v3732 = vpop.f32.mrb[0].mxu0
    %3733 = vdwg.mxu0
    %v3734 = vadd.f32 %v3659, %v3731
    %s3735 = scalar_lea.vmem [#allocation2], 22
    %v3736 = vld [vmem:[%s3735] sm:$0x3]
    %v3737 = vld [vmem:[%s1668] sm:$0xff]
    %v3738 = vld [vmem:[%s1668 + $0x8] sm:$0xff]
    %v3739 = vld [vmem:[%s1668 + $0x10] sm:$0xff]
    %v3740 = vld [vmem:[%s1668 + $0x18] sm:$0xff]
    %3741 = vmatprep.subr.mxu0 0.0
    %3742 = vmatpush1.msra.mxu0 %v3737
    %3743 = vmatprep.subr.mxu0 0.0
    %3744 = vmatpush1.msra.mxu0 %v3738
    %3745 = vmatprep.subr.mxu0 0.0
    %3746 = vmatpush1.msra.mxu0 %v3739
    %3747 = vmatprep.subr.mxu0 0.0
    %3748 = vmatpush1.msra.mxu0 %v3740
    %3749 = vmatprep.subr.mxu0 0.0
    %3750 = vmatpush1.msra.mxu0 0.0
    %3751 = vmatprep.subr.mxu0 0.0
    %3752 = vmatpush1.msra.mxu0 0.0
    %3753 = vmatprep.subr.mxu0 0.0
    %3754 = vmatpush1.msra.mxu0 0.0
    %3755 = vmatprep.subr.mxu0 0.0
    %3756 = vmatpush1.msra.mxu0 0.0
    %3757 = vmatprep.subr.mxu0 0.0
    %3758 = vmatpush1.msra.mxu0 0.0
    %3759 = vmatprep.subr.mxu0 0.0
    %3760 = vmatpush1.msra.mxu0 0.0
    %3761 = vmatprep.subr.mxu0 0.0
    %3762 = vmatpush1.msra.mxu0 0.0
    %3763 = vmatprep.subr.mxu0 0.0
    %3764 = vmatpush1.msra.mxu0 0.0
    %3765 = vmatprep.subr.mxu0 0.0
    %3766 = vmatpush1.msra.mxu0 0.0
    %3767 = vmatprep.subr.mxu0 0.0
    %3768 = vmatpush1.msra.mxu0 0.0
    %3769 = vmatprep.subr.mxu0 0.0
    %3770 = vmatpush1.msra.mxu0 0.0
    %3771 = vmatprep.subr.mxu0 0.0
    %3772 = vmatpush1.msra.mxu0 0.0
    %3773 = vmatprep.subr.mxu0 0.0
    %3774 = vmatpush1.msra.mxu0 0.0
    %3775 = vmatprep.subr.mxu0 0.0
    %3776 = vmatpush1.msra.mxu0 0.0
    %3777 = vmatprep.subr.mxu0 0.0
    %3778 = vmatpush1.msra.mxu0 0.0
    %3779 = vmatprep.subr.mxu0 0.0
    %3780 = vmatpush1.msra.mxu0 0.0
    %3781 = vmatprep.subr.mxu0 0.0
    %3782 = vmatpush1.msra.mxu0 0.0
    %3783 = vmatprep.subr.mxu0 0.0
    %3784 = vmatpush1.msra.mxu0 0.0
    %3785 = vmatprep.subr.mxu0 0.0
    %3786 = vmatpush1.msra.mxu0 0.0
    %3787 = vmatprep.subr.mxu0 0.0
    %3788 = vmatpush1.msra.mxu0 0.0
    %3789 = vmatprep.subr.mxu0 0.0
    %3790 = vmatpush1.msra.mxu0 0.0
    %3791 = vmatprep.subr.mxu0 0.0
    %3792 = vmatpush1.msra.mxu0 0.0
    %3793 = vmatprep.subr.mxu0 0.0
    %3794 = vmatpush1.msra.mxu0 0.0
    %3795 = vmatprep.subr.mxu0 0.0
    %3796 = vmatpush1.msra.mxu0 0.0
    %3797 = vmatprep.subr.mxu0 0.0
    %3798 = vmatpush1.msra.mxu0 0.0
    %3799 = vmatprep.subr.mxu0 0.0
    %3800 = vmatpush1.msra.mxu0 0.0
    %3801 = vmatprep.subr.mxu0 0.0
    %3802 = vmatpush1.msra.mxu0 0.0
    %3803 = vmatprep.subr.mxu0 0.0
    %3804 = vmatpush1.msra.mxu0 0.0
    %3805 = vmatprep.mubr.f32.mxu0 0.0
    %3806 = vmatmul.mubr.f32.gmra.mrb[0].mxu0 %v3585
    %v3807 = vpop.f32.mrb[0].mxu0
    %v3808 = vadd.f32 0.0, %v3807
    %v3809 = vpop.f32.mrb[0].mxu0
    %3810 = vdwg.mxu0
    %v3811 = vadd.f32 %v3736, %v3808
    %s3812 = scalar_lea.vmem [#allocation2], 30
    %v3813 = vld [vmem:[%s3812] sm:$0x3]
    %v3814 = vld [vmem:[%s1745] sm:$0xff]
    %v3815 = vld [vmem:[%s1745 + $0x8] sm:$0xff]
    %v3816 = vld [vmem:[%s1745 + $0x10] sm:$0xff]
    %v3817 = vld [vmem:[%s1745 + $0x18] sm:$0xff]
    %3818 = vmatprep.subr.mxu0 0.0
    %3819 = vmatpush1.msra.mxu0 %v3814
    %3820 = vmatprep.subr.mxu0 0.0
    %3821 = vmatpush1.msra.mxu0 %v3815
    %3822 = vmatprep.subr.mxu0 0.0
    %3823 = vmatpush1.msra.mxu0 %v3816
    %3824 = vmatprep.subr.mxu0 0.0
    %3825 = vmatpush1.msra.mxu0 %v3817
    %3826 = vmatprep.subr.mxu0 0.0
    %3827 = vmatpush1.msra.mxu0 0.0
    %3828 = vmatprep.subr.mxu0 0.0
    %3829 = vmatpush1.msra.mxu0 0.0
    %3830 = vmatprep.subr.mxu0 0.0
    %3831 = vmatpush1.msra.mxu0 0.0
    %3832 = vmatprep.subr.mxu0 0.0
    %3833 = vmatpush1.msra.mxu0 0.0
    %3834 = vmatprep.subr.mxu0 0.0
    %3835 = vmatpush1.msra.mxu0 0.0
    %3836 = vmatprep.subr.mxu0 0.0
    %3837 = vmatpush1.msra.mxu0 0.0
    %3838 = vmatprep.subr.mxu0 0.0
    %3839 = vmatpush1.msra.mxu0 0.0
    %3840 = vmatprep.subr.mxu0 0.0
    %3841 = vmatpush1.msra.mxu0 0.0
    %3842 = vmatprep.subr.mxu0 0.0
    %3843 = vmatpush1.msra.mxu0 0.0
    %3844 = vmatprep.subr.mxu0 0.0
    %3845 = vmatpush1.msra.mxu0 0.0
    %3846 = vmatprep.subr.mxu0 0.0
    %3847 = vmatpush1.msra.mxu0 0.0
    %3848 = vmatprep.subr.mxu0 0.0
    %3849 = vmatpush1.msra.mxu0 0.0
    %3850 = vmatprep.subr.mxu0 0.0
    %3851 = vmatpush1.msra.mxu0 0.0
    %3852 = vmatprep.subr.mxu0 0.0
    %3853 = vmatpush1.msra.mxu0 0.0
    %3854 = vmatprep.subr.mxu0 0.0
    %3855 = vmatpush1.msra.mxu0 0.0
    %3856 = vmatprep.subr.mxu0 0.0
    %3857 = vmatpush1.msra.mxu0 0.0
    %3858 = vmatprep.subr.mxu0 0.0
    %3859 = vmatpush1.msra.mxu0 0.0
    %3860 = vmatprep.subr.mxu0 0.0
    %3861 = vmatpush1.msra.mxu0 0.0
    %3862 = vmatprep.subr.mxu0 0.0
    %3863 = vmatpush1.msra.mxu0 0.0
    %3864 = vmatprep.subr.mxu0 0.0
    %3865 = vmatpush1.msra.mxu0 0.0
    %3866 = vmatprep.subr.mxu0 0.0
    %3867 = vmatpush1.msra.mxu0 0.0
    %3868 = vmatprep.subr.mxu0 0.0
    %3869 = vmatpush1.msra.mxu0 0.0
    %3870 = vmatprep.subr.mxu0 0.0
    %3871 = vmatpush1.msra.mxu0 0.0
    %3872 = vmatprep.subr.mxu0 0.0
    %3873 = vmatpush1.msra.mxu0 0.0
    %3874 = vmatprep.subr.mxu0 0.0
    %3875 = vmatpush1.msra.mxu0 0.0
    %3876 = vmatprep.subr.mxu0 0.0
    %3877 = vmatpush1.msra.mxu0 0.0
    %3878 = vmatprep.subr.mxu0 0.0
    %3879 = vmatpush1.msra.mxu0 0.0
    %3880 = vmatprep.subr.mxu0 0.0
    %3881 = vmatpush1.msra.mxu0 0.0
    %3882 = vmatprep.mubr.f32.mxu0 0.0
    %3883 = vmatmul.mubr.f32.gmra.mrb[0].mxu0 %v3585
    %v3884 = vpop.f32.mrb[0].mxu0
    %v3885 = vadd.f32 0.0, %v3884
    %v3886 = vpop.f32.mrb[0].mxu0
    %3887 = vdwg.mxu0
    %v3888 = vadd.f32 %v3813, %v3885
    %v3889 = vld [vmem:[#allocation3] sm:$0x3]
    %v3890 = vld [vmem:[%s10] sm:$0xff]
    %v3891 = vld [vmem:[%s10 + $0x8] sm:$0xff]
    %v3892 = vld [vmem:[%s10 + $0x10] sm:$0xff]
    %v3893 = vld [vmem:[%s10 + $0x18] sm:$0xff]
    %v3895 = vrot.slane %v3572, 2
    %v3896 = vsel %vm1225, %v3895, 0
    %3898 = vmatprep.subr.mxu0 0.0
    %3899 = vmatpush1.msra.mxu0 %v3890
    %3900 = vmatprep.subr.mxu0 0.0
    %3901 = vmatpush1.msra.mxu0 %v3891
    %3902 = vmatprep.subr.mxu0 0.0
    %3903 = vmatpush1.msra.mxu0 %v3892
    %3904 = vmatprep.subr.mxu0 0.0
    %3905 = vmatpush1.msra.mxu0 %v3893
    %3906 = vmatprep.subr.mxu0 0.0
    %3907 = vmatpush1.msra.mxu0 0.0
    %3908 = vmatprep.subr.mxu0 0.0
    %3909 = vmatpush1.msra.mxu0 0.0
    %3910 = vmatprep.subr.mxu0 0.0
    %3911 = vmatpush1.msra.mxu0 0.0
    %3912 = vmatprep.subr.mxu0 0.0
    %3913 = vmatpush1.msra.mxu0 0.0
    %3914 = vmatprep.subr.mxu0 0.0
    %3915 = vmatpush1.msra.mxu0 0.0
    %3916 = vmatprep.subr.mxu0 0.0
    %3917 = vmatpush1.msra.mxu0 0.0
    %3918 = vmatprep.subr.mxu0 0.0
    %3919 = vmatpush1.msra.mxu0 0.0
    %3920 = vmatprep.subr.mxu0 0.0
    %3921 = vmatpush1.msra.mxu0 0.0
    %3922 = vmatprep.subr.mxu0 0.0
    %3923 = vmatpush1.msra.mxu0 0.0
    %3924 = vmatprep.subr.mxu0 0.0
    %3925 = vmatpush1.msra.mxu0 0.0
    %3926 = vmatprep.subr.mxu0 0.0
    %3927 = vmatpush1.msra.mxu0 0.0
    %3928 = vmatprep.subr.mxu0 0.0
    %3929 = vmatpush1.msra.mxu0 0.0
    %3930 = vmatprep.subr.mxu0 0.0
    %3931 = vmatpush1.msra.mxu0 0.0
    %3932 = vmatprep.subr.mxu0 0.0
    %3933 = vmatpush1.msra.mxu0 0.0
    %3934 = vmatprep.subr.mxu0 0.0
    %3935 = vmatpush1.msra.mxu0 0.0
    %3936 = vmatprep.subr.mxu0 0.0
    %3937 = vmatpush1.msra.mxu0 0.0
    %3938 = vmatprep.subr.mxu0 0.0
    %3939 = vmatpush1.msra.mxu0 0.0
    %3940 = vmatprep.subr.mxu0 0.0
    %3941 = vmatpush1.msra.mxu0 0.0
    %3942 = vmatprep.subr.mxu0 0.0
    %3943 = vmatpush1.msra.mxu0 0.0
    %3944 = vmatprep.subr.mxu0 0.0
    %3945 = vmatpush1.msra.mxu0 0.0
    %3946 = vmatprep.subr.mxu0 0.0
    %3947 = vmatpush1.msra.mxu0 0.0
    %3948 = vmatprep.subr.mxu0 0.0
    %3949 = vmatpush1.msra.mxu0 0.0
    %3950 = vmatprep.subr.mxu0 0.0
    %3951 = vmatpush1.msra.mxu0 0.0
    %3952 = vmatprep.subr.mxu0 0.0
    %3953 = vmatpush1.msra.mxu0 0.0
    %3954 = vmatprep.subr.mxu0 0.0
    %3955 = vmatpush1.msra.mxu0 0.0
    %3956 = vmatprep.subr.mxu0 0.0
    %3957 = vmatpush1.msra.mxu0 0.0
    %3958 = vmatprep.subr.mxu0 0.0
    %3959 = vmatpush1.msra.mxu0 0.0
    %3960 = vmatprep.subr.mxu0 0.0
    %3961 = vmatpush1.msra.mxu0 0.0
    %3962 = vmatprep.mubr.f32.mxu0 0.0
    %3963 = vmatmul.mubr.f32.gmra.mrb[0].mxu0 %v3896
    %v3964 = vpop.f32.mrb[0].mxu0
    %v3965 = vadd.f32 0.0, %v3964
    %v3966 = vpop.f32.mrb[0].mxu0
    %3967 = vdwg.mxu0
    %v3968 = vadd.f32 %v3889, %v3965
    %v3969 = vld [vmem:[%s1438] sm:$0x3]
    %v3970 = vld [vmem:[%s1900] sm:$0xff]
    %v3971 = vld [vmem:[%s1900 + $0x8] sm:$0xff]
    %v3972 = vld [vmem:[%s1900 + $0x10] sm:$0xff]
    %v3973 = vld [vmem:[%s1900 + $0x18] sm:$0xff]
    %3974 = vmatprep.subr.mxu0 0.0
    %3975 = vmatpush1.msra.mxu0 %v3970
    %3976 = vmatprep.subr.mxu0 0.0
    %3977 = vmatpush1.msra.mxu0 %v3971
    %3978 = vmatprep.subr.mxu0 0.0
    %3979 = vmatpush1.msra.mxu0 %v3972
    %3980 = vmatprep.subr.mxu0 0.0
    %3981 = vmatpush1.msra.mxu0 %v3973
    %3982 = vmatprep.subr.mxu0 0.0
    %3983 = vmatpush1.msra.mxu0 0.0
    %3984 = vmatprep.subr.mxu0 0.0
    %3985 = vmatpush1.msra.mxu0 0.0
    %3986 = vmatprep.subr.mxu0 0.0
    %3987 = vmatpush1.msra.mxu0 0.0
    %3988 = vmatprep.subr.mxu0 0.0
    %3989 = vmatpush1.msra.mxu0 0.0
    %3990 = vmatprep.subr.mxu0 0.0
    %3991 = vmatpush1.msra.mxu0 0.0
    %3992 = vmatprep.subr.mxu0 0.0
    %3993 = vmatpush1.msra.mxu0 0.0
    %3994 = vmatprep.subr.mxu0 0.0
    %3995 = vmatpush1.msra.mxu0 0.0
    %3996 = vmatprep.subr.mxu0 0.0
    %3997 = vmatpush1.msra.mxu0 0.0
    %3998 = vmatprep.subr.mxu0 0.0
    %3999 = vmatpush1.msra.mxu0 0.0
    %4000 = vmatprep.subr.mxu0 0.0
    %4001 = vmatpush1.msra.mxu0 0.0
    %4002 = vmatprep.subr.mxu0 0.0
    %4003 = vmatpush1.msra.mxu0 0.0
    %4004 = vmatprep.subr.mxu0 0.0
    %4005 = vmatpush1.msra.mxu0 0.0
    %4006 = vmatprep.subr.mxu0 0.0
    %4007 = vmatpush1.msra.mxu0 0.0
    %4008 = vmatprep.subr.mxu0 0.0
    %4009 = vmatpush1.msra.mxu0 0.0
    %4010 = vmatprep.subr.mxu0 0.0
    %4011 = vmatpush1.msra.mxu0 0.0
    %4012 = vmatprep.subr.mxu0 0.0
    %4013 = vmatpush1.msra.mxu0 0.0
    %4014 = vmatprep.subr.mxu0 0.0
    %4015 = vmatpush1.msra.mxu0 0.0
    %4016 = vmatprep.subr.mxu0 0.0
    %4017 = vmatpush1.msra.mxu0 0.0
    %4018 = vmatprep.subr.mxu0 0.0
    %4019 = vmatpush1.msra.mxu0 0.0
    %4020 = vmatprep.subr.mxu0 0.0
    %4021 = vmatpush1.msra.mxu0 0.0
    %4022 = vmatprep.subr.mxu0 0.0
    %4023 = vmatpush1.msra.mxu0 0.0
    %4024 = vmatprep.subr.mxu0 0.0
    %4025 = vmatpush1.msra.mxu0 0.0
    %4026 = vmatprep.subr.mxu0 0.0
    %4027 = vmatpush1.msra.mxu0 0.0
    %4028 = vmatprep.subr.mxu0 0.0
    %4029 = vmatpush1.msra.mxu0 0.0
    %4030 = vmatprep.subr.mxu0 0.0
    %4031 = vmatpush1.msra.mxu0 0.0
    %4032 = vmatprep.subr.mxu0 0.0
    %4033 = vmatpush1.msra.mxu0 0.0
    %4034 = vmatprep.subr.mxu0 0.0
    %4035 = vmatpush1.msra.mxu0 0.0
    %4036 = vmatprep.subr.mxu0 0.0
    %4037 = vmatpush1.msra.mxu0 0.0
    %4038 = vmatprep.mubr.f32.mxu0 0.0
    %4039 = vmatmul.mubr.f32.gmra.mrb[0].mxu0 %v3896
    %v4040 = vpop.f32.mrb[0].mxu0
    %v4041 = vadd.f32 0.0, %v4040
    %v4042 = vpop.f32.mrb[0].mxu0
    %4043 = vdwg.mxu0
    %v4044 = vadd.f32 %v3969, %v4041
    %v4045 = vld [vmem:[%s1472] sm:$0x3]
    %v4046 = vld [vmem:[%s1978] sm:$0xff]
    %v4047 = vld [vmem:[%s1978 + $0x8] sm:$0xff]
    %v4048 = vld [vmem:[%s1978 + $0x10] sm:$0xff]
    %v4049 = vld [vmem:[%s1978 + $0x18] sm:$0xff]
    %4050 = vmatprep.subr.mxu0 0.0
    %4051 = vmatpush1.msra.mxu0 %v4046
    %4052 = vmatprep.subr.mxu0 0.0
    %4053 = vmatpush1.msra.mxu0 %v4047
    %4054 = vmatprep.subr.mxu0 0.0
    %4055 = vmatpush1.msra.mxu0 %v4048
    %4056 = vmatprep.subr.mxu0 0.0
    %4057 = vmatpush1.msra.mxu0 %v4049
    %4058 = vmatprep.subr.mxu0 0.0
    %4059 = vmatpush1.msra.mxu0 0.0
    %4060 = vmatprep.subr.mxu0 0.0
    %4061 = vmatpush1.msra.mxu0 0.0
    %4062 = vmatprep.subr.mxu0 0.0
    %4063 = vmatpush1.msra.mxu0 0.0
    %4064 = vmatprep.subr.mxu0 0.0
    %4065 = vmatpush1.msra.mxu0 0.0
    %4066 = vmatprep.subr.mxu0 0.0
    %4067 = vmatpush1.msra.mxu0 0.0
    %4068 = vmatprep.subr.mxu0 0.0
    %4069 = vmatpush1.msra.mxu0 0.0
    %4070 = vmatprep.subr.mxu0 0.0
    %4071 = vmatpush1.msra.mxu0 0.0
    %4072 = vmatprep.subr.mxu0 0.0
    %4073 = vmatpush1.msra.mxu0 0.0
    %4074 = vmatprep.subr.mxu0 0.0
    %4075 = vmatpush1.msra.mxu0 0.0
    %4076 = vmatprep.subr.mxu0 0.0
    %4077 = vmatpush1.msra.mxu0 0.0
    %4078 = vmatprep.subr.mxu0 0.0
    %4079 = vmatpush1.msra.mxu0 0.0
    %4080 = vmatprep.subr.mxu0 0.0
    %4081 = vmatpush1.msra.mxu0 0.0
    %4082 = vmatprep.subr.mxu0 0.0
    %4083 = vmatpush1.msra.mxu0 0.0
    %4084 = vmatprep.subr.mxu0 0.0
    %4085 = vmatpush1.msra.mxu0 0.0
    %4086 = vmatprep.subr.mxu0 0.0
    %4087 = vmatpush1.msra.mxu0 0.0
    %4088 = vmatprep.subr.mxu0 0.0
    %4089 = vmatpush1.msra.mxu0 0.0
    %4090 = vmatprep.subr.mxu0 0.0
    %4091 = vmatpush1.msra.mxu0 0.0
    %4092 = vmatprep.subr.mxu0 0.0
    %4093 = vmatpush1.msra.mxu0 0.0
    %4094 = vmatprep.subr.mxu0 0.0
    %4095 = vmatpush1.msra.mxu0 0.0
    %4096 = vmatprep.subr.mxu0 0.0
    %4097 = vmatpush1.msra.mxu0 0.0
    %4098 = vmatprep.subr.mxu0 0.0
    %4099 = vmatpush1.msra.mxu0 0.0
    %4100 = vmatprep.subr.mxu0 0.0
    %4101 = vmatpush1.msra.mxu0 0.0
    %4102 = vmatprep.subr.mxu0 0.0
    %4103 = vmatpush1.msra.mxu0 0.0
    %4104 = vmatprep.subr.mxu0 0.0
    %4105 = vmatpush1.msra.mxu0 0.0
    %4106 = vmatprep.subr.mxu0 0.0
    %4107 = vmatpush1.msra.mxu0 0.0
    %4108 = vmatprep.subr.mxu0 0.0
    %4109 = vmatpush1.msra.mxu0 0.0
    %4110 = vmatprep.subr.mxu0 0.0
    %4111 = vmatpush1.msra.mxu0 0.0
    %4112 = vmatprep.subr.mxu0 0.0
    %4113 = vmatpush1.msra.mxu0 0.0
    %4114 = vmatprep.mubr.f32.mxu0 0.0
    %4115 = vmatmul.mubr.f32.gmra.mrb[0].mxu0 %v3896
    %v4116 = vpop.f32.mrb[0].mxu0
    %v4117 = vadd.f32 0.0, %v4116
    %v4118 = vpop.f32.mrb[0].mxu0
    %4119 = vdwg.mxu0
    %v4120 = vadd.f32 %v4045, %v4117
    %v4121 = vld [vmem:[%s1506] sm:$0x3]
    %v4122 = vld [vmem:[%s2056] sm:$0xff]
    %v4123 = vld [vmem:[%s2056 + $0x8] sm:$0xff]
    %v4124 = vld [vmem:[%s2056 + $0x10] sm:$0xff]
    %v4125 = vld [vmem:[%s2056 + $0x18] sm:$0xff]
    %4126 = vmatprep.subr.mxu0 0.0
    %4127 = vmatpush1.msra.mxu0 %v4122
    %4128 = vmatprep.subr.mxu0 0.0
    %4129 = vmatpush1.msra.mxu0 %v4123
    %4130 = vmatprep.subr.mxu0 0.0
    %4131 = vmatpush1.msra.mxu0 %v4124
    %4132 = vmatprep.subr.mxu0 0.0
    %4133 = vmatpush1.msra.mxu0 %v4125
    %4134 = vmatprep.subr.mxu0 0.0
    %4135 = vmatpush1.msra.mxu0 0.0
    %4136 = vmatprep.subr.mxu0 0.0
    %4137 = vmatpush1.msra.mxu0 0.0
    %4138 = vmatprep.subr.mxu0 0.0
    %4139 = vmatpush1.msra.mxu0 0.0
    %4140 = vmatprep.subr.mxu0 0.0
    %4141 = vmatpush1.msra.mxu0 0.0
    %4142 = vmatprep.subr.mxu0 0.0
    %4143 = vmatpush1.msra.mxu0 0.0
    %4144 = vmatprep.subr.mxu0 0.0
    %4145 = vmatpush1.msra.mxu0 0.0
    %4146 = vmatprep.subr.mxu0 0.0
    %4147 = vmatpush1.msra.mxu0 0.0
    %4148 = vmatprep.subr.mxu0 0.0
    %4149 = vmatpush1.msra.mxu0 0.0
    %4150 = vmatprep.subr.mxu0 0.0
    %4151 = vmatpush1.msra.mxu0 0.0
    %4152 = vmatprep.subr.mxu0 0.0
    %4153 = vmatpush1.msra.mxu0 0.0
    %4154 = vmatprep.subr.mxu0 0.0
    %4155 = vmatpush1.msra.mxu0 0.0
    %4156 = vmatprep.subr.mxu0 0.0
    %4157 = vmatpush1.msra.mxu0 0.0
    %4158 = vmatprep.subr.mxu0 0.0
    %4159 = vmatpush1.msra.mxu0 0.0
    %4160 = vmatprep.subr.mxu0 0.0
    %4161 = vmatpush1.msra.mxu0 0.0
    %4162 = vmatprep.subr.mxu0 0.0
    %4163 = vmatpush1.msra.mxu0 0.0
    %4164 = vmatprep.subr.mxu0 0.0
    %4165 = vmatpush1.msra.mxu0 0.0
    %4166 = vmatprep.subr.mxu0 0.0
    %4167 = vmatpush1.msra.mxu0 0.0
    %4168 = vmatprep.subr.mxu0 0.0
    %4169 = vmatpush1.msra.mxu0 0.0
    %4170 = vmatprep.subr.mxu0 0.0
    %4171 = vmatpush1.msra.mxu0 0.0
    %4172 = vmatprep.subr.mxu0 0.0
    %4173 = vmatpush1.msra.mxu0 0.0
    %4174 = vmatprep.subr.mxu0 0.0
    %4175 = vmatpush1.msra.mxu0 0.0
    %4176 = vmatprep.subr.mxu0 0.0
    %4177 = vmatpush1.msra.mxu0 0.0
    %4178 = vmatprep.subr.mxu0 0.0
    %4179 = vmatpush1.msra.mxu0 0.0
    %4180 = vmatprep.subr.mxu0 0.0
    %4181 = vmatpush1.msra.mxu0 0.0
    %4182 = vmatprep.subr.mxu0 0.0
    %4183 = vmatpush1.msra.mxu0 0.0
    %4184 = vmatprep.subr.mxu0 0.0
    %4185 = vmatpush1.msra.mxu0 0.0
    %4186 = vmatprep.subr.mxu0 0.0
    %4187 = vmatpush1.msra.mxu0 0.0
    %4188 = vmatprep.subr.mxu0 0.0
    %4189 = vmatpush1.msra.mxu0 0.0
    %4190 = vmatprep.mubr.f32.mxu0 0.0
    %4191 = vmatmul.mubr.f32.gmra.mrb[0].mxu0 %v3896
    %v4192 = vpop.f32.mrb[0].mxu0
    %v4193 = vadd.f32 0.0, %v4192
    %v4194 = vpop.f32.mrb[0].mxu0
    %4195 = vdwg.mxu0
    %v4196 = vadd.f32 %v4121, %v4193
    %v4198 = vrot.slane %v3734, 6
    %v4201 = vrot.slane %v3888, 4
    %v4204 = vrot.slane %v3968, 2
    %v4207 = vrot.slane %v4196, 6
    %v4209 = vsel %vm527, %v3657, %v4198
    %v4210 = vsel %vm1203, %v4209, %v4201
    %v4211 = vsel %vm2146, %v4210, %v4204
    %v4212 = vsel %vm527, %v4044, %v4207
    %v4213 = vxor.u32 %v4211, 2147483648
    %v4214 = vxor.u32 %v4212, 2147483648
    %v4215 = vmul.f32 %v4213, 1.442695
    %v4216 = vpow.pop %v4215
    %v4217 = vmul.f32 %v4214, 1.442695
    %v4218 = vpow.pop %v4217
    %v4219 = vadd.f32 %v4216, 1.0
    %v4220 = vadd.f32 %v4218, 1.0
    %v4221 = vrcp.pop %v4219
    %v4222 = vmul.f32 1.0, %v4221
    %v4223 = vrcp.pop %v4220
    %v4224 = vmul.f32 1.0, %v4223
    %v4226 = vrot.slane %v4120, 6
    %v4228 = vsel %vm527, %v3811, %v4226
    %v4229 = vtanh.pop %v4228
    %v4230 = vmul.f32 %v4222, %v3550
    %v4231 = vmul.f32 %v4222, %v4229
    %v4233 = vrot.slane %v4231, 6
    %v4235 = vadd.f32 %v4230, %v4233
    %v4236 = vmul.f32 %v4224, %v3559
    %v4238 = vrot.slane %v4229, 4
    %v4240 = vmul.f32 %v4222, %v4238
    %v4242 = vrot.slane %v4240, 6
    %v4244 = vadd.f32 %v4236, %v4242
    %v4246 = vrot.slane %v4235, 2
    %v4249 = vrot.slane %v4244, 6
    %v4251 = vsel %vm527, %v4246, %v4249
    %v4252 = vtanh.pop %v4251
    %v4254 = vrot.slane %v4252, 4
    %v4256 = vmul.f32 %v4222, %v4254
    %v4257 = vmul.f32 %v4224, %v4252
    %s4258 = scalar_lea.vmem [#allocation4], 6
    %4259 = vst.msk [vmem:[%s4258 - $0x4] sm:$0x30] %vm2194, %v4256
    %4260 = vst.msk [vmem:[#allocation5 - $0x2] sm:$0xc] %vm2197, %v4257
    %v4261 = vld [vmem:[#allocation4] sm:$0x3]
    %v4262 = vld [vmem:[#allocation4 + $0x2] sm:$0x3]
    %v4263 = vld [vmem:[#allocation4 + $0x4] sm:$0x3]
    %v4264 = vld [vmem:[#allocation4 + $0x6] sm:$0x3]
    %v4265 = vld [vmem:[#allocation5] sm:$0x3]
    %v4266 = vld [vmem:[#allocation5 + $0x2] sm:$0x3]
    %v4267 = vld [vmem:[#allocation5 + $0x4] sm:$0x3]
    %v4268 = vld [vmem:[#allocation5 + $0x6] sm:$0x3]
    %v4271 = vlaneseq
    %v4272 = vshrl.u32 %v4271, 7
    %v4273 = vsub.s32 0, %v4272
    %v4274 = vrot.slane %v4261, %v4273
    %v4275 = vlaneseq
    %v4276 = vshrl.u32 %v4275, 7
    %v4277 = vsub.s32 0, %v4276
    %v4278 = vrot.slane %v4263, %v4277
    %v4279 = vsel %vm1083, %v4278, %v4274
    %v4283 = vlaneseq
    %v4284 = vshrl.u32 %v4283, 7
    %v4285 = vsub.s32 0, %v4284
    %v4286 = vrot.slane %v4265, %v4285
    %v4287 = vlaneseq
    %v4288 = vshrl.u32 %v4287, 7
    %v4289 = vsub.s32 0, %v4288
    %v4290 = vrot.slane %v4267, %v4289
    %v4291 = vsel %vm1083, %v4290, %v4286
    %4292 = vrot.lane.b32.xlu0 %v4291, 32
    %v4293 = vpop.permute.xlu0 %4292
    %v4295 = vlaneseq
    %v4296 = vshrl.u32 %v4295, 7
    %v4297 = vsub.s32 1, %v4296
    %v4298 = vrot.slane %v4261, %v4297
    %v4299 = vlaneseq
    %v4300 = vshrl.u32 %v4299, 7
    %v4301 = vsub.s32 1, %v4300
    %v4302 = vrot.slane %v4263, %v4301
    %v4303 = vsel %vm1083, %v4302, %v4298
    %4304 = vrot.lane.b32.xlu0 %v4303, 64
    %v4305 = vpop.permute.xlu0 %4304
    %v4307 = vlaneseq
    %v4308 = vshrl.u32 %v4307, 7
    %v4309 = vsub.s32 1, %v4308
    %v4310 = vrot.slane %v4265, %v4309
    %v4311 = vlaneseq
    %v4312 = vshrl.u32 %v4311, 7
    %v4313 = vsub.s32 1, %v4312
    %v4314 = vrot.slane %v4267, %v4313
    %v4315 = vsel %vm1083, %v4314, %v4310
    %4316 = vrot.lane.b32.xlu0 %v4315, 96
    %v4317 = vpop.permute.xlu0 %4316
    %v4321 = vlaneseq
    %v4322 = vshrl.u32 %v4321, 7
    %v4323 = vsub.s32 0, %v4322
    %v4324 = vrot.slane %v4262, %v4323
    %v4325 = vlaneseq
    %v4326 = vshrl.u32 %v4325, 7
    %v4327 = vsub.s32 0, %v4326
    %v4328 = vrot.slane %v4264, %v4327
    %v4329 = vsel %vm1083, %v4328, %v4324
    %v4333 = vlaneseq
    %v4334 = vshrl.u32 %v4333, 7
    %v4335 = vsub.s32 0, %v4334
    %v4336 = vrot.slane %v4266, %v4335
    %v4337 = vlaneseq
    %v4338 = vshrl.u32 %v4337, 7
    %v4339 = vsub.s32 0, %v4338
    %v4340 = vrot.slane %v4268, %v4339
    %v4341 = vsel %vm1083, %v4340, %v4336
    %4342 = vrot.lane.b32.xlu0 %v4341, 32
    %v4343 = vpop.permute.xlu0 %4342
    %v4345 = vlaneseq
    %v4346 = vshrl.u32 %v4345, 7
    %v4347 = vsub.s32 1, %v4346
    %v4348 = vrot.slane %v4262, %v4347
    %v4349 = vlaneseq
    %v4350 = vshrl.u32 %v4349, 7
    %v4351 = vsub.s32 1, %v4350
    %v4352 = vrot.slane %v4264, %v4351
    %v4353 = vsel %vm1083, %v4352, %v4348
    %4354 = vrot.lane.b32.xlu0 %v4353, 64
    %v4355 = vpop.permute.xlu0 %4354
    %v4357 = vlaneseq
    %v4358 = vshrl.u32 %v4357, 7
    %v4359 = vsub.s32 1, %v4358
    %v4360 = vrot.slane %v4266, %v4359
    %v4361 = vlaneseq
    %v4362 = vshrl.u32 %v4361, 7
    %v4363 = vsub.s32 1, %v4362
    %v4364 = vrot.slane %v4268, %v4363
    %v4365 = vsel %vm1083, %v4364, %v4360
    %4366 = vrot.lane.b32.xlu0 %v4365, 96
    %v4367 = vpop.permute.xlu0 %4366
    %v4369 = vsel %vm1225, %v4279, %v4293
    %vm4370 = vcmask 523264
    %v4371 = vsel %vm4370, %v4369, %v4305
    %vm4372 = vcmask 785408
    %v4373 = vsel %vm4372, %v4371, %v4317
    %v4374 = vsel %vm1225, %v4329, %v4343
    %v4375 = vsel %vm4370, %v4374, %v4355
    %v4376 = vsel %vm4372, %v4375, %v4367
    %v4377 = vld [vmem:[%s11] sm:$0xff]
    %v4378 = vld [vmem:[%s11 + $0x8] sm:$0xff]
    %v4379 = vld [vmem:[%s11 + $0x10] sm:$0xff]
    %v4380 = vld [vmem:[%s11 + $0x18] sm:$0xff]
    %v4381 = vld [vmem:[%s11 + $0x20] sm:$0xff]
    %v4382 = vld [vmem:[%s11 + $0x28] sm:$0xff]
    %v4383 = vld [vmem:[%s11 + $0x30] sm:$0xff]
    %v4384 = vld [vmem:[%s11 + $0x38] sm:$0xff]
    %v4385 = vld [vmem:[%s11 + $0x40] sm:$0xff]
    %v4386 = vld [vmem:[%s11 + $0x48] sm:$0xff]
    %v4387 = vld [vmem:[%s11 + $0x50] sm:$0xff]
    %v4388 = vld [vmem:[%s11 + $0x58] sm:$0xff]
    %v4389 = vld [vmem:[%s11 + $0x60] sm:$0xff]
    %v4390 = vld [vmem:[%s11 + $0x68] sm:$0xff]
    %v4391 = vld [vmem:[%s11 + $0x70] sm:$0xff]
    %v4392 = vld [vmem:[%s11 + $0x78] sm:$0xff]
    %v4393 = vld [vmem:[%s11 + $0x80] sm:$0xff]
    %v4394 = vld [vmem:[%s11 + $0x88] sm:$0xff]
    %v4395 = vld [vmem:[%s11 + $0x90] sm:$0xff]
    %v4396 = vld [vmem:[%s11 + $0x98] sm:$0xff]
    %v4397 = vld [vmem:[%s11 + $0xa0] sm:$0xff]
    %v4398 = vld [vmem:[%s11 + $0xa8] sm:$0xff]
    %v4399 = vld [vmem:[%s11 + $0xb0] sm:$0xff]
    %v4400 = vld [vmem:[%s11 + $0xb8] sm:$0xff]
    %v4401 = vld [vmem:[%s11 + $0xc0] sm:$0xff]
    %v4402 = vld [vmem:[%s11 + $0xc8] sm:$0xff]
    %v4403 = vld [vmem:[%s11 + $0xd0] sm:$0xff]
    %v4404 = vld [vmem:[%s11 + $0xd8] sm:$0xff]
    %v4405 = vld [vmem:[%s11 + $0xe0] sm:$0xff]
    %v4406 = vld [vmem:[%s11 + $0xe8] sm:$0xff]
    %v4407 = vld [vmem:[%s11 + $0xf0] sm:$0xff]
    %v4408 = vld [vmem:[%s11 + $0xf8] sm:$0xff]
    %v4409 = vld [vmem:[%s12] sm:$0x1]
    %v4411 = vlaneseq
    %v4412 = vshrl.u32 %v4411, 7
    %v4413 = vsub.s32 0, %v4412
    %v4414 = vrot.slane %v4409, %v4413
    %4416 = vmatprep.subr.mxu0 0.0
    %4417 = vmatpush1.msra.mxu0 %v4377
    %4418 = vmatprep.subr.mxu0 0.0
    %4419 = vmatpush1.msra.mxu0 %v4378
    %4420 = vmatprep.subr.mxu0 0.0
    %4421 = vmatpush1.msra.mxu0 %v4379
    %4422 = vmatprep.subr.mxu0 0.0
    %4423 = vmatpush1.msra.mxu0 %v4380
    %4424 = vmatprep.subr.mxu0 0.0
    %4425 = vmatpush1.msra.mxu0 %v4381
    %4426 = vmatprep.subr.mxu0 0.0
    %4427 = vmatpush1.msra.mxu0 %v4382
    %4428 = vmatprep.subr.mxu0 0.0
    %4429 = vmatpush1.msra.mxu0 %v4383
    %4430 = vmatprep.subr.mxu0 0.0
    %4431 = vmatpush1.msra.mxu0 %v4384
    %4432 = vmatprep.subr.mxu0 0.0
    %4433 = vmatpush1.msra.mxu0 %v4385
    %4434 = vmatprep.subr.mxu0 0.0
    %4435 = vmatpush1.msra.mxu0 %v4386
    %4436 = vmatprep.subr.mxu0 0.0
    %4437 = vmatpush1.msra.mxu0 %v4387
    %4438 = vmatprep.subr.mxu0 0.0
    %4439 = vmatpush1.msra.mxu0 %v4388
    %4440 = vmatprep.subr.mxu0 0.0
    %4441 = vmatpush1.msra.mxu0 %v4389
    %4442 = vmatprep.subr.mxu0 0.0
    %4443 = vmatpush1.msra.mxu0 %v4390
    %4444 = vmatprep.subr.mxu0 0.0
    %4445 = vmatpush1.msra.mxu0 %v4391
    %4446 = vmatprep.subr.mxu0 0.0
    %4447 = vmatpush1.msra.mxu0 %v4392
    %4448 = vmatprep.subr.mxu0 0.0
    %4449 = vmatpush1.msra.mxu0 %v4393
    %4450 = vmatprep.subr.mxu0 0.0
    %4451 = vmatpush1.msra.mxu0 %v4394
    %4452 = vmatprep.subr.mxu0 0.0
    %4453 = vmatpush1.msra.mxu0 %v4395
    %4454 = vmatprep.subr.mxu0 0.0
    %4455 = vmatpush1.msra.mxu0 %v4396
    %4456 = vmatprep.subr.mxu0 0.0
    %4457 = vmatpush1.msra.mxu0 %v4397
    %4458 = vmatprep.subr.mxu0 0.0
    %4459 = vmatpush1.msra.mxu0 %v4398
    %4460 = vmatprep.subr.mxu0 0.0
    %4461 = vmatpush1.msra.mxu0 %v4399
    %4462 = vmatprep.subr.mxu0 0.0
    %4463 = vmatpush1.msra.mxu0 %v4400
    %4464 = vmatprep.subr.mxu0 0.0
    %4465 = vmatpush1.msra.mxu0 %v4401
    %4466 = vmatprep.subr.mxu0 0.0
    %4467 = vmatpush1.msra.mxu0 %v4402
    %4468 = vmatprep.subr.mxu0 0.0
    %4469 = vmatpush1.msra.mxu0 %v4403
    %4470 = vmatprep.subr.mxu0 0.0
    %4471 = vmatpush1.msra.mxu0 %v4404
    %4472 = vmatprep.subr.mxu0 0.0
    %4473 = vmatpush1.msra.mxu0 %v4405
    %4474 = vmatprep.subr.mxu0 0.0
    %4475 = vmatpush1.msra.mxu0 %v4406
    %4476 = vmatprep.subr.mxu0 0.0
    %4477 = vmatpush1.msra.mxu0 %v4407
    %4478 = vmatprep.subr.mxu0 0.0
    %4479 = vmatpush1.msra.mxu0 %v4408
    %4480 = vmatprep.mubr.f32.mxu0 %v4376
    %4481 = vmatmul.mubr.f32.gmra.mrb[0].mxu0 %v4373
    %v4482 = vpop.f32.mrb[0].mxu0
    %v4483 = vadd.f32 %v4414, %v4482
    %v4484 = vpop.f32.mrb[0].mxu0
    %4485 = vdwg.mxu0
    %vm4486 = vcmp.ge.f32.partialorder %v4483, 0.0
    %v4487 = vmul.f32 %v4483, 0.25
    %v4488 = vsel %vm4486, %v4483, %v4487
    %v4489 = vld [vmem:[%s13] sm:$0xff]
    %v4490 = vld [vmem:[%s13 + $0x8] sm:$0xff]
    %v4491 = vld [vmem:[%s13 + $0x10] sm:$0xff]
    %v4492 = vld [vmem:[%s13 + $0x18] sm:$0x1]
    %v4493 = vld [vmem:[%s14] sm:$0x1]
    %v4495 = vlaneseq
    %v4496 = vshrl.u32 %v4495, 7
    %v4497 = vsub.s32 0, %v4496
    %v4498 = vrot.slane %v4493, %v4497
    %vm4500 = vcmask 203776
    %v4502 = vsel %vm4500, %v4488, 0
    %v4505 = vsel %vm700, %v4492, 0
    %4507 = vmatprep.subr.mxu0 0.0
    %4508 = vmatpush1.msra.mxu0 %v4489
    %4509 = vmatprep.subr.mxu0 0.0
    %4510 = vmatpush1.msra.mxu0 %v4490
    %4511 = vmatprep.subr.mxu0 0.0
    %4512 = vmatpush1.msra.mxu0 %v4491
    %4513 = vmatprep.subr.mxu0 0.0
    %4514 = vmatpush1.msra.mxu0 %v4505
    %4515 = vmatprep.subr.mxu0 0.0
    %4516 = vmatpush1.msra.mxu0 0.0
    %4517 = vmatprep.subr.mxu0 0.0
    %4518 = vmatpush1.msra.mxu0 0.0
    %4519 = vmatprep.subr.mxu0 0.0
    %4520 = vmatpush1.msra.mxu0 0.0
    %4521 = vmatprep.subr.mxu0 0.0
    %4522 = vmatpush1.msra.mxu0 0.0
    %4523 = vmatprep.subr.mxu0 0.0
    %4524 = vmatpush1.msra.mxu0 0.0
    %4525 = vmatprep.subr.mxu0 0.0
    %4526 = vmatpush1.msra.mxu0 0.0
    %4527 = vmatprep.subr.mxu0 0.0
    %4528 = vmatpush1.msra.mxu0 0.0
    %4529 = vmatprep.subr.mxu0 0.0
    %4530 = vmatpush1.msra.mxu0 0.0
    %4531 = vmatprep.subr.mxu0 0.0
    %4532 = vmatpush1.msra.mxu0 0.0
    %4533 = vmatprep.subr.mxu0 0.0
    %4534 = vmatpush1.msra.mxu0 0.0
    %4535 = vmatprep.subr.mxu0 0.0
    %4536 = vmatpush1.msra.mxu0 0.0
    %4537 = vmatprep.subr.mxu0 0.0
    %4538 = vmatpush1.msra.mxu0 0.0
    %4539 = vmatprep.subr.mxu0 0.0
    %4540 = vmatpush1.msra.mxu0 0.0
    %4541 = vmatprep.subr.mxu0 0.0
    %4542 = vmatpush1.msra.mxu0 0.0
    %4543 = vmatprep.subr.mxu0 0.0
    %4544 = vmatpush1.msra.mxu0 0.0
    %4545 = vmatprep.subr.mxu0 0.0
    %4546 = vmatpush1.msra.mxu0 0.0
    %4547 = vmatprep.subr.mxu0 0.0
    %4548 = vmatpush1.msra.mxu0 0.0
    %4549 = vmatprep.subr.mxu0 0.0
    %4550 = vmatpush1.msra.mxu0 0.0
    %4551 = vmatprep.subr.mxu0 0.0
    %4552 = vmatpush1.msra.mxu0 0.0
    %4553 = vmatprep.subr.mxu0 0.0
    %4554 = vmatpush1.msra.mxu0 0.0
    %4555 = vmatprep.subr.mxu0 0.0
    %4556 = vmatpush1.msra.mxu0 0.0
    %4557 = vmatprep.subr.mxu0 0.0
    %4558 = vmatpush1.msra.mxu0 0.0
    %4559 = vmatprep.subr.mxu0 0.0
    %4560 = vmatpush1.msra.mxu0 0.0
    %4561 = vmatprep.subr.mxu0 0.0
    %4562 = vmatpush1.msra.mxu0 0.0
    %4563 = vmatprep.subr.mxu0 0.0
    %4564 = vmatpush1.msra.mxu0 0.0
    %4565 = vmatprep.subr.mxu0 0.0
    %4566 = vmatpush1.msra.mxu0 0.0
    %4567 = vmatprep.subr.mxu0 0.0
    %4568 = vmatpush1.msra.mxu0 0.0
    %4569 = vmatprep.subr.mxu0 0.0
    %4570 = vmatpush1.msra.mxu0 0.0
    %4571 = vmatprep.mubr.f32.mxu0 0.0
    %4572 = vmatmul.mubr.f32.gmra.mrb[0].mxu0 %v4502
    %v4573 = vpop.f32.mrb[0].mxu0
    %v4574 = vadd.f32 %v4498, %v4573
    %v4575 = vpop.f32.mrb[0].mxu0
    %4576 = vdwg.mxu0
    %vm4577 = vcmp.ge.f32.partialorder %v4574, 0.0
    %v4578 = vmul.f32 %v4574, 0.25
    %v4579 = vsel %vm4577, %v4574, %v4578
    %v4580 = vld [vmem:[%s15] sm:$0x1f]
    %v4581 = vld [vmem:[%s16] sm:$0x1]
    %v4583 = vlaneseq
    %v4584 = vshrl.u32 %v4583, 7
    %v4585 = vsub.s32 0, %v4584
    %v4586 = vrot.slane %v4581, %v4585
    %vm4588 = vcmask 39936
    %v4590 = vsel %vm4588, %v4579, 0
    %vm4592 = vcmask 1044480
    %v4594 = vsel %vm4592, %v4580, 0
    %4596 = vmatprep.subr.mxu0 0.0
    %4597 = vmatpush1.msra.mxu0 %v4594
    %4598 = vmatprep.subr.mxu0 0.0
    %4599 = vmatpush1.msra.mxu0 0.0
    %4600 = vmatprep.subr.mxu0 0.0
    %4601 = vmatpush1.msra.mxu0 0.0
    %4602 = vmatprep.subr.mxu0 0.0
    %4603 = vmatpush1.msra.mxu0 0.0
    %4604 = vmatprep.subr.mxu0 0.0
    %4605 = vmatpush1.msra.mxu0 0.0
    %4606 = vmatprep.subr.mxu0 0.0
    %4607 = vmatpush1.msra.mxu0 0.0
    %4608 = vmatprep.subr.mxu0 0.0
    %4609 = vmatpush1.msra.mxu0 0.0
    %4610 = vmatprep.subr.mxu0 0.0
    %4611 = vmatpush1.msra.mxu0 0.0
    %4612 = vmatprep.subr.mxu0 0.0
    %4613 = vmatpush1.msra.mxu0 0.0
    %4614 = vmatprep.subr.mxu0 0.0
    %4615 = vmatpush1.msra.mxu0 0.0
    %4616 = vmatprep.subr.mxu0 0.0
    %4617 = vmatpush1.msra.mxu0 0.0
    %4618 = vmatprep.subr.mxu0 0.0
    %4619 = vmatpush1.msra.mxu0 0.0
    %4620 = vmatprep.subr.mxu0 0.0
    %4621 = vmatpush1.msra.mxu0 0.0
    %4622 = vmatprep.subr.mxu0 0.0
    %4623 = vmatpush1.msra.mxu0 0.0
    %4624 = vmatprep.subr.mxu0 0.0
    %4625 = vmatpush1.msra.mxu0 0.0
    %4626 = vmatprep.subr.mxu0 0.0
    %4627 = vmatpush1.msra.mxu0 0.0
    %4628 = vmatprep.subr.mxu0 0.0
    %4629 = vmatpush1.msra.mxu0 0.0
    %4630 = vmatprep.subr.mxu0 0.0
    %4631 = vmatpush1.msra.mxu0 0.0
    %4632 = vmatprep.subr.mxu0 0.0
    %4633 = vmatpush1.msra.mxu0 0.0
    %4634 = vmatprep.subr.mxu0 0.0
    %4635 = vmatpush1.msra.mxu0 0.0
    %4636 = vmatprep.subr.mxu0 0.0
    %4637 = vmatpush1.msra.mxu0 0.0
    %4638 = vmatprep.subr.mxu0 0.0
    %4639 = vmatpush1.msra.mxu0 0.0
    %4640 = vmatprep.subr.mxu0 0.0
    %4641 = vmatpush1.msra.mxu0 0.0
    %4642 = vmatprep.subr.mxu0 0.0
    %4643 = vmatpush1.msra.mxu0 0.0
    %4644 = vmatprep.subr.mxu0 0.0
    %4645 = vmatpush1.msra.mxu0 0.0
    %4646 = vmatprep.subr.mxu0 0.0
    %4647 = vmatpush1.msra.mxu0 0.0
    %4648 = vmatprep.subr.mxu0 0.0
    %4649 = vmatpush1.msra.mxu0 0.0
    %4650 = vmatprep.subr.mxu0 0.0
    %4651 = vmatpush1.msra.mxu0 0.0
    %4652 = vmatprep.subr.mxu0 0.0
    %4653 = vmatpush1.msra.mxu0 0.0
    %4654 = vmatprep.subr.mxu0 0.0
    %4655 = vmatpush1.msra.mxu0 0.0
    %4656 = vmatprep.subr.mxu0 0.0
    %4657 = vmatpush1.msra.mxu0 0.0
    %4658 = vmatprep.subr.mxu0 0.0
    %4659 = vmatpush1.msra.mxu0 0.0
    %4660 = vmatprep.mubr.f32.mxu0 0.0
    %4661 = vmatmul.mubr.f32.gmra.mrb[0].mxu0 %v4590
    %v4662 = vpop.f32.mrb[0].mxu0
    %v4663 = vadd.f32 %v4586, %v4662
    %v4664 = vpop.f32.mrb[0].mxu0
    %4665 = vdwg.mxu0
    %vm4666 = vcmask 17408
    %4667 = vst.msk [vmem:[#allocation6] sm:$0x3] %vm4666, %v4663
    // Predicated region
    $region70: #{esnet_forward.1} parent=1 // pred_check
      _
    $region71: #{esnet_forward.1} parent=1 // pred_check_branch
      %4669 = sbr.rel (0) target = $region73
    $region72: #{esnet_forward.1} parent=1 // pred_region
      %s4671 = ssub.s32 32, 32
      %4672 = vsyncadd [#allocation7], %s4671
      %s4674 = sshll.u32 [#allocation6], 4
      %s4675 = int_to_ptr.vmem [resolvable:$true] %s4674
      %4677 = dma.vmem_to_hbm [thread:$0]  %s4675, 32, %s17, [#allocation7]
    $region73: #{esnet_forward.1} parent=1 // pred_fallthru
      _
    // Predicated region
    $region74: #{esnet_forward.1} parent=1 // pred_check
      _
    $region75: #{esnet_forward.1} parent=1 // pred_check_branch
      %4679 = sbr.rel (0) target = $region77
    $region76: #{esnet_forward.1} parent=1 // pred_region
      %4680 = dma.done [#allocation7], 32
    $region77: #{esnet_forward.1} parent=1 // pred_fallthru
      _
    %4681 = vsyncpa [#allocation7], 1

</llo_original>
